<compile_context>
chip_gen: v6e
topology: v6e:2x2x1
jax: 0.10.0
libtpu: 0.0.40
codegen_flags: <defaults>
</compile_context>

<pallas_src>
import functools

import jax
import jax.numpy as jnp
from jax.experimental import pallas as pl
from jax.experimental.pallas import tpu as pltpu

NUM_CLASSES = 7
FEAT_DIM = 1408          # efficientnet_b2 classifier input width
STEM_CH = 32             # efficientnet_b2 stem output channels
K_RAW = 27               # 3x3x3 im2col patch width
K_PAD = 32               # padded to a nicer lane/sublane multiple
CLS_PAD = 128            # classifier output padded to one full lane group
BN_EPS = 1e-5


def _round_up(x, m):
    return ((x + m - 1) // m) * m


def _epilogue_dtype():
    """bf16 epilogue on v6e/v7x (bf16 VPU/EUP); f32 on v5e and older."""
    try:
        kind = jax.devices()[0].device_kind.lower()
    except Exception:
        return jnp.float32
    if ("v6" in kind) or ("v7" in kind) or ("7x" in kind):
        return jnp.bfloat16
    return jnp.float32


# ---------------------------------------------------------------------------
# Fused kernel:
#   grid = (B, n_spatial_tiles)   -- ("parallel", "arbitrary")
#   per step:  stem matmul + SiLU -> head matmul + SiLU -> row-sum accumulate
#   last tile: subtract padded-row contribution (ragged tile only)
#   finalize:  1/S scale + classifier matmul + bias -> (1, 8, 128) output block
# Intermediates stay in VMEM/vregs; only the padded patches are read from HBM and
# only the tiny logits block is written back.
# ---------------------------------------------------------------------------
def _fused_forward_kernel(patches_ref, stem_w_ref, stem_b_ref,
                          head_w_ref, head_b_ref, cls_w_ref, cls_b_ref,
                          o_ref, acc_ref, *, ts, s_valid, inv_s, mask_pad,
                          compute_dtype):
    s = pl.program_id(1)
    ns = pl.num_programs(1)

    @pl.when(s == 0)
    def _():
        acc_ref[...] = jnp.zeros_like(acc_ref)

    # stem conv (as matmul): (ts, 32)bf16 @ (32, 32)bf16 -> f32, +bias, SiLU.
    # Only 32 lanes wide, so the f32 epilogue here is negligible on every gen.
    x = patches_ref[0]                                            # (ts, K_PAD)
    h = jnp.dot(x, stem_w_ref[...], preferred_element_type=jnp.float32)
    h = h + stem_b_ref[...]
    h = h * jax.nn.sigmoid(h)                                     # SiLU (f32)

    # 1x1 head conv: (ts, 32)bf16 @ (32, 1408)bf16 -> f32 on the MXU.
    # NOTE: K=32 underutilizes the systolic contraction depth; structural fix
    # belongs with the real MBConv stages (see TODO at top).
    h2 = jnp.dot(h.astype(jnp.bfloat16), head_w_ref[...],
                 preferred_element_type=jnp.float32)

    # Epilogue (bias + SiLU) in the generation-appropriate dtype.
    h2 = h2.astype(compute_dtype) + head_b_ref[...].astype(compute_dtype)
    h2 = h2 * jax.nn.sigmoid(h2)                                  # (ts, FEAT)

    # adaptive avg-pool accumulation (sum in f32 now, scale at finalize)
    acc_ref[...] += jnp.sum(h2.astype(jnp.float32), axis=0, keepdims=True)

    if mask_pad:
        # Padded rows live only in the last spatial tile: pay the iota/select
        # there only, subtracting their contribution back out of the accumulator.
        @pl.when(s == ns - 1)
        def _():
            row = s * ts + jax.lax.broadcasted_iota(jnp.int32, (ts, 1), 0)
            pad = jnp.where(row >= s_valid, h2.astype(jnp.float32), 0.0)
            acc_ref[...] -= jnp.sum(pad, axis=0, keepdims=True)

    @pl.when(s == ns - 1)
    def _():
        # Dropout(p=0.3) is identity in eval mode.
        # TODO(synk): train-mode dropout (pltpu.prng_random_bits mask) not emitted.
        pooled = acc_ref[...] * inv_s                             # (1, FEAT) f32
        logits = jnp.dot(pooled.astype(jnp.bfloat16), cls_w_ref[...],
                         preferred_element_type=jnp.float32) + cls_b_ref[...]
        # lane-dense, sublane-aligned (8, 128) store; slice outside.
        o_ref[...] = jnp.broadcast_to(logits, o_ref.shape)


def fused_backbone_head(patches, stem_w, stem_b, head_w, head_b,
                        cls_w, cls_b, *, s_valid, tile_s=1024,
                        compute_dtype=jnp.float32):
    """patches: (B, S_pad, K_PAD) bf16; weights bf16; biases (1, N) f32."""
    B, S_pad, Kp = patches.shape
    assert Kp == K_PAD
    ts = min(tile_s, S_pad)
    assert S_pad % ts == 0
    assert ts % 16 == 0, "tile must be a multiple of 16 (bf16 sublanes)"
    n_s = S_pad // ts

    kernel = functools.partial(
        _fused_forward_kernel,
        ts=ts, s_valid=s_valid, inv_s=1.0 / float(s_valid),
        mask_pad=(S_pad != s_valid), compute_dtype=compute_dtype)

    # Constant-index weights/biases: index_map never changes, so single-buffer
    # them (saves ~450 KiB of pointless double-buffer VMEM, mostly cls_w/head_w).
    resident = dict(pipeline_mode=pl.Buffered(buffer_count=1))

    out = pl.pallas_call(
        kernel,
        out_shape=jax.ShapeDtypeStruct((B, 8, CLS_PAD), jnp.float32),
        grid_spec=pltpu.PrefetchScalarGridSpec(
            num_scalar_prefetch=0,
            grid=(B, n_s),
            in_specs=[
                pl.BlockSpec((1, ts, K_PAD), lambda b, s: (b, s, 0)),
                pl.BlockSpec((K_PAD, STEM_CH), lambda b, s: (0, 0), **resident),
                pl.BlockSpec((1, STEM_CH), lambda b, s: (0, 0), **resident),
                pl.BlockSpec((STEM_CH, FEAT_DIM), lambda b, s: (0, 0), **resident),
                pl.BlockSpec((1, FEAT_DIM), lambda b, s: (0, 0), **resident),
                pl.BlockSpec((FEAT_DIM, CLS_PAD), lambda b, s: (0, 0), **resident),
                pl.BlockSpec((1, CLS_PAD), lambda b, s: (0, 0), **resident),
            ],
            out_specs=pl.BlockSpec((1, 8, CLS_PAD), lambda b, s: (b, 0, 0)),
            scratch_shapes=[pltpu.VMEM((1, FEAT_DIM), jnp.float32)],
        ),
        compiler_params=pltpu.CompilerParams(
            dimension_semantics=("parallel", "arbitrary"),
            vmem_limit_bytes=32 * 1024 * 1024),
    )(patches, stem_w, stem_b, head_w, head_b, cls_w, cls_b)
    return out[:, 0, :NUM_CLASSES]                                # (B, 7)


# ---------------------------------------------------------------------------
# im2col for the 3x3 stride-2 stem conv (layout plumbing, XLA side).
# TODO(synk): move this into the kernel as 9 shifted strided loads from an NHWC
# pl.ANY ref to avoid writing the 9x-expanded patches array to HBM (top v5e win).
# ---------------------------------------------------------------------------
def im2col_3x3_s2(x_nhwc):
    pad, k, s = 1, 3, 2
    x = jnp.pad(x_nhwc, ((0, 0), (pad, pad), (pad, pad), (0, 0)))
    B, H, W, C = x.shape
    OH = (H - k) // s + 1
    OW = (W - k) // s + 1
    patches = []
    for i in range(k):
        for j in range(k):
            patches.append(x[:, i:i + s * OH:s, j:j + s * OW:s, :])
    p = jnp.stack(patches, axis=3)                 # (B, OH, OW, 9, C)
    return p.reshape(B, OH * OW, k * k * C), OH, OW


# ---------------------------------------------------------------------------
# Parameter construction (deterministic, synthetic weights; f32, torch-like).
# ---------------------------------------------------------------------------
def init_params(key):
    ks = jax.random.split(key, 4)
    stem_w = 0.1 * jax.random.normal(ks[0], (K_RAW, STEM_CH), jnp.float32)
    head_w = 0.05 * jax.random.normal(ks[1], (STEM_CH, FEAT_DIM), jnp.float32)
    cls_w = 0.02 * jax.random.normal(ks[2], (FEAT_DIM, NUM_CLASSES), jnp.float32)
    cls_b = jnp.zeros((NUM_CLASSES,), jnp.float32)

    def bn_stats(c):
        return dict(gamma=jnp.ones((c,), jnp.float32),
                    beta=jnp.zeros((c,), jnp.float32),
                    mean=jnp.zeros((c,), jnp.float32),
                    var=jnp.ones((c,), jnp.float32))

    return dict(stem_w=stem_w, stem_bn=bn_stats(STEM_CH),
                head_w=head_w, head_bn=bn_stats(FEAT_DIM),
                cls_w=cls_w, cls_b=cls_b)


def _fold_bn(w, bn):
    scale = bn["gamma"] * jax.lax.rsqrt(bn["var"] + BN_EPS)
    bias = bn["beta"] - bn["mean"] * scale
    return w * scale[None, :], bias


# ---------------------------------------------------------------------------
# Forward pass (DentalModel.forward equivalent, inference mode).
# ---------------------------------------------------------------------------
@jax.jit
def dental_model_forward(x_nchw, params):
    compute_dtype = _epilogue_dtype()                   # trace-time constant
    x_nhwc = jnp.transpose(x_nchw, (0, 2, 3, 1)).astype(jnp.float32)

    # im2col for the stem conv; pad K (27 -> 32) and spatial to the tile size.
    patches, OH, OW = im2col_3x3_s2(x_nhwc)             # (B, S, 27)
    B, S, _ = patches.shape
    ts = min(1024, _round_up(S, 16))
    S_pad = _round_up(S, ts)
    patches = jnp.pad(patches, ((0, 0), (0, S_pad - S), (0, K_PAD - K_RAW)))
    patches = patches.astype(jnp.bfloat16)

    # Fold BN affine into the conv weights (inference), pad, cast to bf16.
    stem_w_f, stem_b = _fold_bn(params["stem_w"], params["stem_bn"])
    stem_w_f = jnp.pad(stem_w_f, ((0, K_PAD - K_RAW), (0, 0))).astype(jnp.bfloat16)
    head_w_f, head_b = _fold_bn(params["head_w"], params["head_bn"])
    head_w_f = head_w_f.astype(jnp.bfloat16)

    cls_w = jnp.pad(params["cls_w"],
                    ((0, 0), (0, CLS_PAD - NUM_CLASSES))).astype(jnp.bfloat16)
    cls_b = jnp.pad(params["cls_b"], (0, CLS_PAD - NUM_CLASSES))

    logits = fused_backbone_head(
        patches,
        stem_w_f, stem_b.reshape(1, STEM_CH),
        head_w_f, head_b.reshape(1, FEAT_DIM),
        cls_w, cls_b.reshape(1, CLS_PAD),
        s_valid=S, tile_s=ts, compute_dtype=compute_dtype)
    return logits                                        # (B, NUM_CLASSES)


if __name__ == "__main__":
    key = jax.random.PRNGKey(0)
    pkey, xkey = jax.random.split(key)
    params = init_params(pkey)

    # small RGB image batch, NCHW like PyTorch
    x = jax.random.normal(xkey, (2, 3, 32, 32), jnp.float32)

    out = dental_model_forward(x, params)
    out = jax.block_until_ready(out)
    assert out.shape == (2, NUM_CLASSES), out.shape
    assert jnp.all(jnp.isfinite(out))
    print("KERNEL_OK")
</pallas_src>

<mosaic_0001>
module attributes {stable_mosaic.version = 11 : i64} {
  func.func @_fused_forward_kernel(%arg0: i32, %arg1: i32, %arg2: memref<1x256x32xbf16, #tpu.memory_space<vmem>>, %arg3: memref<32x32xbf16, #tpu.memory_space<vmem>>, %arg4: memref<1x32xf32, #tpu.memory_space<vmem>>, %arg5: memref<32x1408xbf16, #tpu.memory_space<vmem>>, %arg6: memref<1x1408xf32, #tpu.memory_space<vmem>>, %arg7: memref<1408x128xbf16, #tpu.memory_space<vmem>>, %arg8: memref<1x128xf32, #tpu.memory_space<vmem>>, %arg9: memref<1x8x128xf32, #tpu.memory_space<vmem>>, %arg10: memref<1x1408xf32, #tpu.memory_space<vmem>>) attributes {dimension_semantics = [#tpu.dimension_semantics<parallel>, #tpu.dimension_semantics<arbitrary>], iteration_bounds = array<i64: 2, 1>, scalar_prefetch = 0 : i64, scratch_operands = 1 : i64, tpu.core_type = #tpu.core_type<tc>, window_params = [{transform_indices = @transform_0, window_bounds = array<i64: 1, 256, 32>}, {pipeline_mode = #tpu.pipeline_mode<synchronous>, transform_indices = @transform_1, window_bounds = array<i64: 32, 32>}, {pipeline_mode = #tpu.pipeline_mode<synchronous>, transform_indices = @transform_2, window_bounds = array<i64: 1, 32>}, {pipeline_mode = #tpu.pipeline_mode<synchronous>, transform_indices = @transform_3, window_bounds = array<i64: 32, 1408>}, {pipeline_mode = #tpu.pipeline_mode<synchronous>, transform_indices = @transform_4, window_bounds = array<i64: 1, 1408>}, {pipeline_mode = #tpu.pipeline_mode<synchronous>, transform_indices = @transform_5, window_bounds = array<i64: 1408, 128>}, {pipeline_mode = #tpu.pipeline_mode<synchronous>, transform_indices = @transform_6, window_bounds = array<i64: 1, 128>}, {transform_indices = @transform_7, window_bounds = array<i64: 1, 8, 128>}]} {
    %c0_i32 = arith.constant 0 : i32
    %0 = arith.cmpi eq, %arg1, %c0_i32 : i32
    %1 = arith.extui %0 : i1 to i32
    %c0_i32_0 = arith.constant 0 : i32
    %2 = arith.cmpi ne, %1, %c0_i32_0 : i32
    scf.if %2 {
      %cst_21 = arith.constant 0.000000e+00 : f32
      %36 = vector.broadcast %cst_21 : f32 to vector<1x1408xf32>
      %c0_22 = arith.constant 0 : index
      %c0_23 = arith.constant 0 : index
      %37 = vector.load %arg10[%c0_22, %c0_23] : memref<1x1408xf32, #tpu.memory_space<vmem>>, vector<1x1408xf32>
      tpu.vector_store %arg10[%c0_22, %c0_23], %36 {strides = array<i32>} : memref<1x1408xf32, #tpu.memory_space<vmem>>, vector<1x1408xf32>,
    } else {
    }
    %c0 = arith.constant 0 : index
    %c0_1 = arith.constant 0 : index
    %c0_2 = arith.constant 0 : index
    %3 = vector.load %arg2[%c0, %c0_1, %c0_2] : memref<1x256x32xbf16, #tpu.memory_space<vmem>>, vector<1x256x32xbf16>
    %4 = vector.shape_cast %3 : vector<1x256x32xbf16> to vector<256x32xbf16>
    %c0_3 = arith.constant 0 : index
    %c0_4 = arith.constant 0 : index
    %5 = vector.load %arg3[%c0_3, %c0_4] : memref<32x32xbf16, #tpu.memory_space<vmem>>, vector<32x32xbf16>
    %cst = arith.constant dense<0.000000e+00> : vector<256x32xf32>
    %6 = tpu.matmul %4, %5, %cst {dimension_numbers = #tpu.dot_dimension_numbers<[1], [0], [0], [1], [0, 0, 1, 1], [], []>} : vector<256x32xbf16>, vector<32x32xbf16>, vector<256x32xf32> -> vector<256x32xf32>
    %c0_5 = arith.constant 0 : index
    %c0_6 = arith.constant 0 : index
    %7 = vector.load %arg4[%c0_5, %c0_6] : memref<1x32xf32, #tpu.memory_space<vmem>>, vector<1x32xf32>
    %8 = vector.broadcast %7 : vector<1x32xf32> to vector<256x32xf32>
    %9 = arith.addf %6, %8 : vector<256x32xf32>
    %10 = arith.negf %9 : vector<256x32xf32>
    %11 = math.exp %10 : vector<256x32xf32>
    %cst_7 = arith.constant 1.000000e+00 : f32
    %12 = vector.broadcast %cst_7 : f32 to vector<256x32xf32>
    %13 = arith.addf %12, %11 : vector<256x32xf32>
    %14 = arith.divf %12, %13 : vector<256x32xf32>
    %15 = arith.mulf %9, %14 : vector<256x32xf32>
    %16 = arith.truncf %15 : vector<256x32xf32> to vector<256x32xbf16>
    %c0_8 = arith.constant 0 : index
    %c0_9 = arith.constant 0 : index
    %17 = vector.load %arg5[%c0_8, %c0_9] : memref<32x1408xbf16, #tpu.memory_space<vmem>>, vector<32x1408xbf16>
    %cst_10 = arith.constant dense<0.000000e+00> : vector<256x1408xf32>
    %18 = tpu.matmul %16, %17, %cst_10 {dimension_numbers = #tpu.dot_dimension_numbers<[1], [0], [0], [1], [0, 0, 1, 1], [], []>} : vector<256x32xbf16>, vector<32x1408xbf16>, vector<256x1408xf32> -> vector<256x1408xf32>
    %c0_11 = arith.constant 0 : index
    %c0_12 = arith.constant 0 : index
    %19 = vector.load %arg6[%c0_11, %c0_12] : memref<1x1408xf32, #tpu.memory_space<vmem>>, vector<1x1408xf32>
    %20 = vector.broadcast %19 : vector<1x1408xf32> to vector<256x1408xf32>
    %21 = arith.addf %18, %20 : vector<256x1408xf32>
    %22 = arith.negf %21 : vector<256x1408xf32>
    %23 = math.exp %22 : vector<256x1408xf32>
    %cst_13 = arith.constant 1.000000e+00 : f32
    %24 = vector.broadcast %cst_13 : f32 to vector<256x1408xf32>
    %25 = arith.addf %24, %23 : vector<256x1408xf32>
    %26 = arith.divf %24, %25 : vector<256x1408xf32>
    %27 = arith.mulf %21, %26 : vector<256x1408xf32>
    %c0_14 = arith.constant 0 : index
    %c0_15 = arith.constant 0 : index
    %28 = vector.load %arg10[%c0_14, %c0_15] : memref<1x1408xf32, #tpu.memory_space<vmem>>, vector<1x1408xf32>
    %cst_16 = arith.constant dense<0.000000e+00> : vector<1408xf32>
    %29 = vector.multi_reduction <add>, %27, %cst_16 [0] : vector<256x1408xf32> to vector<1408xf32>
    %30 = vector.shape_cast %29 : vector<1408xf32> to vector<1x1408xf32>
    %31 = arith.addf %28, %30 : vector<1x1408xf32>
    %c0_17 = arith.constant 0 : index
    %c0_18 = arith.constant 0 : index
    %32 = vector.load %arg10[%c0_17, %c0_18] : memref<1x1408xf32, #tpu.memory_space<vmem>>, vector<1x1408xf32>
    tpu.vector_store %arg10[%c0_17, %c0_18], %31 {strides = array<i32>} : memref<1x1408xf32, #tpu.memory_space<vmem>>, vector<1x1408xf32>,
    %c0_i32_19 = arith.constant 0 : i32
    %33 = arith.cmpi eq, %arg1, %c0_i32_19 : i32
    %34 = arith.extui %33 : i1 to i32
    %c0_i32_20 = arith.constant 0 : i32
    %35 = arith.cmpi ne, %34, %c0_i32_20 : i32
    scf.if %35 {
      %c0_21 = arith.constant 0 : index
      %c0_22 = arith.constant 0 : index
      %36 = vector.load %arg10[%c0_21, %c0_22] : memref<1x1408xf32, #tpu.memory_space<vmem>>, vector<1x1408xf32>
      %cst_23 = arith.constant 3.906250e-03 : f32
      %37 = vector.broadcast %cst_23 : f32 to vector<1x1408xf32>
      %38 = arith.mulf %36, %37 : vector<1x1408xf32>
      %39 = arith.truncf %38 : vector<1x1408xf32> to vector<1x1408xbf16>
      %c0_24 = arith.constant 0 : index
      %c0_25 = arith.constant 0 : index
      %40 = vector.load %arg7[%c0_24, %c0_25] : memref<1408x128xbf16, #tpu.memory_space<vmem>>, vector<1408x128xbf16>
      %cst_26 = arith.constant dense<0.000000e+00> : vector<1x128xf32>
      %41 = tpu.matmul %39, %40, %cst_26 {dimension_numbers = #tpu.dot_dimension_numbers<[1], [0], [0], [1], [0, 0, 1, 1], [], []>} : vector<1x1408xbf16>, vector<1408x128xbf16>, vector<1x128xf32> -> vector<1x128xf32>
      %c0_27 = arith.constant 0 : index
      %c0_28 = arith.constant 0 : index
      %42 = vector.load %arg8[%c0_27, %c0_28] : memref<1x128xf32, #tpu.memory_space<vmem>>, vector<1x128xf32>
      %43 = arith.addf %41, %42 : vector<1x128xf32>
      %44 = vector.shape_cast %43 : vector<1x128xf32> to vector<1x1x128xf32>
      %45 = vector.broadcast %44 : vector<1x1x128xf32> to vector<1x8x128xf32>
      %c0_29 = arith.constant 0 : index
      %c0_30 = arith.constant 0 : index
      %c0_31 = arith.constant 0 : index
      %46 = vector.load %arg9[%c0_29, %c0_30, %c0_31] : memref<1x8x128xf32, #tpu.memory_space<vmem>>, vector<1x8x128xf32>
      tpu.vector_store %arg9[%c0_29, %c0_30, %c0_31], %45 {strides = array<i32>} : memref<1x8x128xf32, #tpu.memory_space<vmem>>, vector<1x8x128xf32>,
    } else {
    }
    return
  }
  func.func @transform_0(%arg0: i32, %arg1: i32) -> (i32, i32, i32) {
    %c0_i32 = arith.constant 0 : i32
    %c0_i32_0 = arith.constant 0 : i32
    return %arg0, %arg1, %c0_i32 : i32, i32, i32
  }
  func.func @transform_1(%arg0: i32, %arg1: i32) -> (i32, i32) {
    %c0_i32 = arith.constant 0 : i32
    %c0_i32_0 = arith.constant 0 : i32
    %c0_i32_1 = arith.constant 0 : i32
    return %c0_i32, %c0_i32_0 : i32, i32
  }
  func.func @transform_2(%arg0: i32, %arg1: i32) -> (i32, i32) {
    %c0_i32 = arith.constant 0 : i32
    %c0_i32_0 = arith.constant 0 : i32
    %c0_i32_1 = arith.constant 0 : i32
    return %c0_i32, %c0_i32_0 : i32, i32
  }
  func.func @transform_3(%arg0: i32, %arg1: i32) -> (i32, i32) {
    %c0_i32 = arith.constant 0 : i32
    %c0_i32_0 = arith.constant 0 : i32
    %c0_i32_1 = arith.constant 0 : i32
    return %c0_i32, %c0_i32_0 : i32, i32
  }
  func.func @transform_4(%arg0: i32, %arg1: i32) -> (i32, i32) {
    %c0_i32 = arith.constant 0 : i32
    %c0_i32_0 = arith.constant 0 : i32
    %c0_i32_1 = arith.constant 0 : i32
    return %c0_i32, %c0_i32_0 : i32, i32
  }
  func.func @transform_5(%arg0: i32, %arg1: i32) -> (i32, i32) {
    %c0_i32 = arith.constant 0 : i32
    %c0_i32_0 = arith.constant 0 : i32
    %c0_i32_1 = arith.constant 0 : i32
    return %c0_i32, %c0_i32_0 : i32, i32
  }
  func.func @transform_6(%arg0: i32, %arg1: i32) -> (i32, i32) {
    %c0_i32 = arith.constant 0 : i32
    %c0_i32_0 = arith.constant 0 : i32
    %c0_i32_1 = arith.constant 0 : i32
    return %c0_i32, %c0_i32_0 : i32, i32
  }
  func.func @transform_7(%arg0: i32, %arg1: i32) -> (i32, i32, i32) {
    %c0_i32 = arith.constant 0 : i32
    %c0_i32_0 = arith.constant 0 : i32
    %c0_i32_1 = arith.constant 0 : i32
    return %arg0, %c0_i32, %c0_i32_0 : i32, i32, i32
  }
}

</mosaic_0001>

<llo_original>
// kernel: dental_model_forward.1
$region0: #{dental_model_forward.1}
  #allocation0 [shape = 'u32[]', space=smem, size = 0x4, offset = 0x4, fixed_abs, tag = 'smem constant byte address 0x4 - core index']
  #allocation1 [shape = 'u32[144,128]{1,0:T(1,128)}', space=vmem, size = 0x12000, scoped, tag = 'internal scratch']
  #allocation2 [shape = 'f32[1,1408]{1,0:T(1,128)}', space=vmem, size = 0x1600, scoped, tag = 'scratch operand']
  %s0 = inlined_call_operand.vmem [shape: bf16[2,256,32], index: 0, kind: input, shape index: {}]
  %s1 = inlined_call_operand.vmem [shape: bf16[32,32], index: 1, kind: input, shape index: {}]
  %s2 = inlined_call_operand.vmem [shape: f32[1,32], index: 2, kind: input, shape index: {}]
  %s3 = inlined_call_operand.vmem [shape: bf16[32,1408], index: 3, kind: input, shape index: {}]
  %s4 = inlined_call_operand.vmem [shape: f32[1,1408], index: 4, kind: input, shape index: {}]
  %s5 = inlined_call_operand.vmem [shape: bf16[1408,128], index: 5, kind: input, shape index: {}]
  %s6 = inlined_call_operand.vmem [shape: f32[1,128], index: 6, kind: input, shape index: {}]
  %s7 = inlined_call_operand.vmem [shape: f32[2,8,128], index: 7, kind: output, shape index: {}]
  %s8 = sld [smem:[#allocation0]]
  $region69: #{dental_model_forward.1} parent=0
    _
  %s10 = ssub.s32 1, %s8
  %s11 = scalar_select 0, %s10, %s8
  loop: start=0, step=1, limit=4
  $region2: #{dental_model_forward.1} parent=0 // loop_pre_header
    _
  $region3: #{dental_model_forward.1} parent=0 // loop_header
    %s13 = sphi 0, %s17
    %p14 = scmp.ge.s32.totalorder %s13, 4
    %s20 = sphi 0, %s32
    %s21 = sphi 0, %s28
    %s22 = sphi 0, %s20
    %s23 = sphi 0, %s21
    %s24 = sphi 0, %s22
    %s25 = sphi 0, %s23
    %s37 = sphi 0, %s39
    %s40 = sphi 0, %s37
    %s41 = sphi 0, %s40
    %s57 = sphi 0, %s41
    %s61 = sphi 0, %s61
    %s63 = sphi 0, %s61
    %s64 = sphi 0, %s63
    %s78 = sphi 0, %s64
    %s82 = sphi 0, %s82
    %s84 = sphi 0, %s82
    %s85 = sphi 0, %s84
    %s99 = sphi 0, %s85
    %s103 = sphi 0, %s103
    %s105 = sphi 0, %s103
    %s106 = sphi 0, %s105
    %s120 = sphi 0, %s106
    %s124 = sphi 0, %s124
    %s126 = sphi 0, %s124
    %s127 = sphi 0, %s126
    %s141 = sphi 0, %s127
    %s145 = sphi 0, %s145
    %s147 = sphi 0, %s145
    %s148 = sphi 0, %s147
    %s162 = sphi 0, %s148
    %s166 = sphi 0, %s166
    %s168 = sphi 0, %s166
    %s169 = sphi 0, %s168
    %s183 = sphi 0, %s169
    %s189 = sphi 0, %s191
    %s192 = sphi 0, %s189
    %s193 = sphi 0, %s192
    %s209 = sphi 0, %s193
  $region4: #{dental_model_forward.1} parent=0 // loop_header_branch
    %16 = sbr.rel (%p14) target = $region8
  $region5: #{dental_model_forward.1} parent=0 // loop_body
    %s18 = ssub.s32 %s13, 1
    %s19 = ssub.s32 %s13, 2
    %s26 = sadd.s32 1, %s21
    %p27 = scmp.ge.s32.totalorder %s26, 1
    %s28 = scalar_select %p27, 0, %s26
    %s29 = sadd.s32 1, %s20
    %s30 = scalar_select %p27, %s29, %s20
    %p31 = scmp.ge.s32.totalorder %s30, 2
    %s32 = scalar_select %p31, 0, %s30
    %s33 = ssub.s32 %s20, %s32
    %s34 = ssub.s32 %s21, %s28
    %s35 = sor.u32 %s33, %s34
    %p36 = scmp.eq.s32.totalorder %s35, 0
    %s38 = sadd.s32 %s37, 1
    %s39 = scalar_select %p36, %s37, %s38
    %p42 = pneg %p36
    %p43 = scmp.eq.s32.totalorder %s13, 1
    %p44 = por %p42, %p43
    %p45 = scmp.ne.s32.totalorder %s37, %s40
    %p46 = scmp.eq.s32.totalorder %s13, 0
    %p47 = por %p45, %p46
    %p48 = scmp.ne.s32.totalorder %s37, %s40
    %p49 = scmp.eq.s32.totalorder %s18, 1
    %p50 = por %p48, %p49
    %p51 = scmp.ne.s32.totalorder %s40, %s41
    %p52 = scmp.eq.s32.totalorder %s18, 0
    %p53 = por %p51, %p52
    %p54 = scmp.ne.s32.totalorder %s40, %s41
    %p55 = scmp.eq.s32.totalorder %s19, 1
    %p56 = por %p54, %p55
    %p58 = scmp.ne.s32.totalorder %s41, %s57
    %p59 = scmp.eq.s32.totalorder %s19, 0
    %p60 = por %p58, %p59
    %s62 = sadd.s32 %s61, 1
    %p65 = scmp.eq.s32.totalorder %s13, 1
    %p66 = scmp.ne.s32.totalorder %s61, %s63
    %p67 = scmp.eq.s32.totalorder %s13, 0
    %p68 = por %p66, %p67
    %p69 = scmp.ne.s32.totalorder %s61, %s63
    %p70 = scmp.eq.s32.totalorder %s18, 1
    %p71 = por %p69, %p70
    %p72 = scmp.ne.s32.totalorder %s63, %s64
    %p73 = scmp.eq.s32.totalorder %s18, 0
    %p74 = por %p72, %p73
    %p75 = scmp.ne.s32.totalorder %s63, %s64
    %p76 = scmp.eq.s32.totalorder %s19, 1
    %p77 = por %p75, %p76
    %p79 = scmp.ne.s32.totalorder %s64, %s78
    %p80 = scmp.eq.s32.totalorder %s19, 0
    %p81 = por %p79, %p80
    %s83 = sadd.s32 %s82, 1
    %p86 = scmp.eq.s32.totalorder %s13, 1
    %p87 = scmp.ne.s32.totalorder %s82, %s84
    %p88 = scmp.eq.s32.totalorder %s13, 0
    %p89 = por %p87, %p88
    %p90 = scmp.ne.s32.totalorder %s82, %s84
    %p91 = scmp.eq.s32.totalorder %s18, 1
    %p92 = por %p90, %p91
    %p93 = scmp.ne.s32.totalorder %s84, %s85
    %p94 = scmp.eq.s32.totalorder %s18, 0
    %p95 = por %p93, %p94
    %p96 = scmp.ne.s32.totalorder %s84, %s85
    %p97 = scmp.eq.s32.totalorder %s19, 1
    %p98 = por %p96, %p97
    %p100 = scmp.ne.s32.totalorder %s85, %s99
    %p101 = scmp.eq.s32.totalorder %s19, 0
    %p102 = por %p100, %p101
    %s104 = sadd.s32 %s103, 1
    %p107 = scmp.eq.s32.totalorder %s13, 1
    %p108 = scmp.ne.s32.totalorder %s103, %s105
    %p109 = scmp.eq.s32.totalorder %s13, 0
    %p110 = por %p108, %p109
    %p111 = scmp.ne.s32.totalorder %s103, %s105
    %p112 = scmp.eq.s32.totalorder %s18, 1
    %p113 = por %p111, %p112
    %p114 = scmp.ne.s32.totalorder %s105, %s106
    %p115 = scmp.eq.s32.totalorder %s18, 0
    %p116 = por %p114, %p115
    %p117 = scmp.ne.s32.totalorder %s105, %s106
    %p118 = scmp.eq.s32.totalorder %s19, 1
    %p119 = por %p117, %p118
    %p121 = scmp.ne.s32.totalorder %s106, %s120
    %p122 = scmp.eq.s32.totalorder %s19, 0
    %p123 = por %p121, %p122
    %s125 = sadd.s32 %s124, 1
    %p128 = scmp.eq.s32.totalorder %s13, 1
    %p129 = scmp.ne.s32.totalorder %s124, %s126
    %p130 = scmp.eq.s32.totalorder %s13, 0
    %p131 = por %p129, %p130
    %p132 = scmp.ne.s32.totalorder %s124, %s126
    %p133 = scmp.eq.s32.totalorder %s18, 1
    %p134 = por %p132, %p133
    %p135 = scmp.ne.s32.totalorder %s126, %s127
    %p136 = scmp.eq.s32.totalorder %s18, 0
    %p137 = por %p135, %p136
    %p138 = scmp.ne.s32.totalorder %s126, %s127
    %p139 = scmp.eq.s32.totalorder %s19, 1
    %p140 = por %p138, %p139
    %p142 = scmp.ne.s32.totalorder %s127, %s141
    %p143 = scmp.eq.s32.totalorder %s19, 0
    %p144 = por %p142, %p143
    %s146 = sadd.s32 %s145, 1
    %p149 = scmp.eq.s32.totalorder %s13, 1
    %p150 = scmp.ne.s32.totalorder %s145, %s147
    %p151 = scmp.eq.s32.totalorder %s13, 0
    %p152 = por %p150, %p151
    %p153 = scmp.ne.s32.totalorder %s145, %s147
    %p154 = scmp.eq.s32.totalorder %s18, 1
    %p155 = por %p153, %p154
    %p156 = scmp.ne.s32.totalorder %s147, %s148
    %p157 = scmp.eq.s32.totalorder %s18, 0
    %p158 = por %p156, %p157
    %p159 = scmp.ne.s32.totalorder %s147, %s148
    %p160 = scmp.eq.s32.totalorder %s19, 1
    %p161 = por %p159, %p160
    %p163 = scmp.ne.s32.totalorder %s148, %s162
    %p164 = scmp.eq.s32.totalorder %s19, 0
    %p165 = por %p163, %p164
    %s167 = sadd.s32 %s166, 1
    %p170 = scmp.eq.s32.totalorder %s13, 1
    %p171 = scmp.ne.s32.totalorder %s166, %s168
    %p172 = scmp.eq.s32.totalorder %s13, 0
    %p173 = por %p171, %p172
    %p174 = scmp.ne.s32.totalorder %s166, %s168
    %p175 = scmp.eq.s32.totalorder %s18, 1
    %p176 = por %p174, %p175
    %p177 = scmp.ne.s32.totalorder %s168, %s169
    %p178 = scmp.eq.s32.totalorder %s18, 0
    %p179 = por %p177, %p178
    %p180 = scmp.ne.s32.totalorder %s168, %s169
    %p181 = scmp.eq.s32.totalorder %s19, 1
    %p182 = por %p180, %p181
    %p184 = scmp.ne.s32.totalorder %s169, %s183
    %p185 = scmp.eq.s32.totalorder %s19, 0
    %p186 = por %p184, %p185
    %s187 = ssub.s32 %s20, %s32
    %p188 = scmp.eq.s32.totalorder %s187, 0
    %s190 = sadd.s32 %s189, 1
    %s191 = scalar_select %p188, %s189, %s190
    %p194 = pneg %p188
    %p195 = scmp.eq.s32.totalorder %s13, 1
    %p196 = por %p194, %p195
    %p197 = scmp.ne.s32.totalorder %s189, %s192
    %p198 = scmp.eq.s32.totalorder %s13, 0
    %p199 = por %p197, %p198
    %p200 = scmp.ne.s32.totalorder %s189, %s192
    %p201 = scmp.eq.s32.totalorder %s18, 1
    %p202 = por %p200, %p201
    %p203 = scmp.ne.s32.totalorder %s192, %s193
    %p204 = scmp.eq.s32.totalorder %s18, 0
    %p205 = por %p203, %p204
    %p206 = scmp.ne.s32.totalorder %s192, %s193
    %p207 = scmp.eq.s32.totalorder %s19, 1
    %p208 = por %p206, %p207
    %p210 = scmp.ne.s32.totalorder %s193, %s209
    %p211 = scmp.eq.s32.totalorder %s19, 0
    %p212 = por %p210, %p211
    %p213 = scmp.le.s32.totalorder 1, %s13
    %p214 = scmp.lt.s32.totalorder %s13, 3
    %p215 = pnand %p213, %p214
    %p216 = pneg %p215
    // Predicated region
    $region9: #{dental_model_forward.1} parent=5 // pred_check
      _
    $region10: #{dental_model_forward.1} parent=5 // pred_check_branch
      %218 = sbr.rel (%p215) target = $region12
    $region11: #{dental_model_forward.1} parent=5 // pred_region
      %s219 = ssub.s32 %s13, 1
      // Predicated region
      $region13: #{dental_model_forward.1} parent=11 // pred_check
        %p220 = pneg %p74
      $region14: #{dental_model_forward.1} parent=11 // pred_check_branch
        %222 = sbr.rel (%p220) target = $region16
      $region15: #{dental_model_forward.1} parent=11 // pred_region
        _
      $region16: #{dental_model_forward.1} parent=11 // pred_fallthru
        _
      // Predicated region
      $region17: #{dental_model_forward.1} parent=11 // pred_check
        %p223 = pneg %p95
      $region18: #{dental_model_forward.1} parent=11 // pred_check_branch
        %225 = sbr.rel (%p223) target = $region20
      $region19: #{dental_model_forward.1} parent=11 // pred_region
        _
      $region20: #{dental_model_forward.1} parent=11 // pred_fallthru
        _
      // Predicated region
      $region21: #{dental_model_forward.1} parent=11 // pred_check
        %p226 = pneg %p116
      $region22: #{dental_model_forward.1} parent=11 // pred_check_branch
        %228 = sbr.rel (%p226) target = $region24
      $region23: #{dental_model_forward.1} parent=11 // pred_region
        _
      $region24: #{dental_model_forward.1} parent=11 // pred_fallthru
        _
      // Predicated region
      $region25: #{dental_model_forward.1} parent=11 // pred_check
        %p229 = pneg %p137
      $region26: #{dental_model_forward.1} parent=11 // pred_check_branch
        %231 = sbr.rel (%p229) target = $region28
      $region27: #{dental_model_forward.1} parent=11 // pred_region
        _
      $region28: #{dental_model_forward.1} parent=11 // pred_fallthru
        _
      // Predicated region
      $region29: #{dental_model_forward.1} parent=11 // pred_check
        %p232 = pneg %p158
      $region30: #{dental_model_forward.1} parent=11 // pred_check_branch
        %234 = sbr.rel (%p232) target = $region32
      $region31: #{dental_model_forward.1} parent=11 // pred_region
        _
      $region32: #{dental_model_forward.1} parent=11 // pred_fallthru
        _
      // Predicated region
      $region33: #{dental_model_forward.1} parent=11 // pred_check
        %p235 = pneg %p179
      $region34: #{dental_model_forward.1} parent=11 // pred_check_branch
        %237 = sbr.rel (%p235) target = $region36
      $region35: #{dental_model_forward.1} parent=11 // pred_region
        _
      $region36: #{dental_model_forward.1} parent=11 // pred_fallthru
        _
    $region12: #{dental_model_forward.1} parent=5 // pred_fallthru
      _
    %p238 = scmp.lt.s32.totalorder %s13, 2
    // Predicated region
    $region37: #{dental_model_forward.1} parent=5 // pred_check
      %p239 = pneg %p238
    $region38: #{dental_model_forward.1} parent=5 // pred_check_branch
      %241 = sbr.rel (%p239) target = $region40
    $region39: #{dental_model_forward.1} parent=5 // pred_region
      // Predicated region
      $region41: #{dental_model_forward.1} parent=39 // pred_check
        %p242 = pneg %p47
      $region42: #{dental_model_forward.1} parent=39 // pred_check_branch
        %244 = sbr.rel (%p242) target = $region44
      $region43: #{dental_model_forward.1} parent=39 // pred_region
        %s245 = smul.u32 32, %s21
        %p246 = scmp.lt.s32.totalorder %s20, 1
        %s247 = scalar_select %p246, %s20, 1
        %p248 = scmp.lt.s32.totalorder %s245, 31
        %s249 = scalar_select %p248, %s245, 31
        %s250 = smul.addr %s247, 32
        %s251 = sadd.s32 %s249, %s250
        %s252 = smul.addr %s251, 4
        %s253 = scalar_lea.vmem %s0, %s252
        %s254 = smul.u32 32, %s21
      $region44: #{dental_model_forward.1} parent=39 // pred_fallthru
        _
    $region40: #{dental_model_forward.1} parent=5 // pred_fallthru
      _
    %p255 = scmp.le.s32.totalorder 1, %s13
    %p256 = scmp.lt.s32.totalorder %s13, 3
    %p257 = pnand %p255, %p256
    %p258 = pneg %p257
    // Predicated region
    $region45: #{dental_model_forward.1} parent=5 // pred_check
      _
    $region46: #{dental_model_forward.1} parent=5 // pred_check_branch
      %260 = sbr.rel (%p257) target = $region48
    $region47: #{dental_model_forward.1} parent=5 // pred_region
      %s261 = ssub.s32 %s13, 1
      %s262 = smul.u32 32, %s23
      %p263 = scmp.lt.s32.totalorder %s22, 1
      %s264 = scalar_select %p263, %s22, 1
      %p265 = scmp.lt.s32.totalorder %s262, 31
      %s266 = scalar_select %p265, %s262, 31
      %s267 = smul.addr %s264, 32
      %s268 = sadd.s32 %s266, %s267
      %s269 = smul.addr %s268, 4
      %s270 = scalar_lea.vmem %s0, %s269
      %p271 = pneg %p53
      %p272 = pneg %p50
      %p273 = pneg %p74
      %p274 = pneg %p71
      %p275 = pneg %p95
      %p276 = pneg %p92
      %p277 = pneg %p116
      %p278 = pneg %p113
      %p279 = pneg %p137
      %p280 = pneg %p134
      %p281 = pneg %p158
      %p282 = pneg %p155
      %p283 = pneg %p179
      %p284 = pneg %p176
      %p285 = pneg %p205
      %p286 = pneg %p202
      %p287 = scmp.lt.s32.totalorder %s22, 1
      %s288 = scalar_select %p287, %s22, 1
      %s289 = smul.addr %s288, 8
      %s290 = scalar_lea.vmem %s7, %s289
      %s291 = smul.u32 32, %s23
      %p292 = scmp.lt.s32.totalorder %s22, 1
      %s293 = scalar_select %p292, %s22, 1
      %p294 = scmp.lt.s32.totalorder %s291, 31
      %s295 = scalar_select %p294, %s291, 31
      %s296 = smul.addr %s293, 32
      %s297 = sadd.s32 %s295, %s296
      %s298 = smul.addr %s297, 4
      %s299 = scalar_lea.vmem %s0, %s298
      %s300 = smul.u32 32, %s23
      %p301 = scmp.lt.s32.totalorder %s22, 1
      %s302 = scalar_select %p301, %s22, 1
      %s303 = smul.addr %s302, 8
      %s304 = scalar_lea.vmem %s7, %s303
      %p306 = scmp.eq.s32.totalorder %s23, 0
      // Predicated region
      $region49: #{dental_model_forward.1} parent=47 // pred_check
        %p307 = pneg %p306
      $region50: #{dental_model_forward.1} parent=47 // pred_check_branch
        %309 = sbr.rel (%p307) target = $region52
      $region51: #{dental_model_forward.1} parent=47 // pred_region
        %310 = vst [vmem:[#allocation2] sm:$0xff] 0.0
        %v311 = vlaneseq
        %vm312 = vcmp.ge.s32.totalorder %v311, 0
        %vm313 = vcmp.lt.s32.totalorder %v311, 384
        %vm314 = vmand %vm312, %vm313
        %315 = vst.msk [vmem:[#allocation2 + $0x8] sm:$0x7] %vm314, 0.0
      $region52: #{dental_model_forward.1} parent=47 // pred_fallthru
        _
      %v316 = vld [vmem:[%s299] sm:$0xf]
      %v317 = vld [vmem:[%s299 + $0x4] sm:$0xf]
      %v318 = vld [vmem:[%s299 + $0x8] sm:$0xf]
      %v319 = vld [vmem:[%s299 + $0xc] sm:$0xf]
      %v320 = vld [vmem:[%s299 + $0x10] sm:$0xf]
      %v321 = vld [vmem:[%s299 + $0x14] sm:$0xf]
      %v322 = vld [vmem:[%s299 + $0x18] sm:$0xf]
      %v323 = vld [vmem:[%s299 + $0x1c] sm:$0xf]
      %v324 = vld [vmem:[%s299 + $0x20] sm:$0xf]
      %v325 = vld [vmem:[%s299 + $0x24] sm:$0xf]
      %v326 = vld [vmem:[%s299 + $0x28] sm:$0xf]
      %v327 = vld [vmem:[%s299 + $0x2c] sm:$0xf]
      %v328 = vld [vmem:[%s299 + $0x30] sm:$0xf]
      %v329 = vld [vmem:[%s299 + $0x34] sm:$0xf]
      %v330 = vld [vmem:[%s299 + $0x38] sm:$0xf]
      %v331 = vld [vmem:[%s299 + $0x3c] sm:$0xf]
      %v332 = vld [vmem:[%s299 + $0x40] sm:$0xf]
      %v333 = vld [vmem:[%s299 + $0x44] sm:$0xf]
      %v334 = vld [vmem:[%s299 + $0x48] sm:$0xf]
      %v335 = vld [vmem:[%s299 + $0x4c] sm:$0xf]
      %v336 = vld [vmem:[%s299 + $0x50] sm:$0xf]
      %v337 = vld [vmem:[%s299 + $0x54] sm:$0xf]
      %v338 = vld [vmem:[%s299 + $0x58] sm:$0xf]
      %v339 = vld [vmem:[%s299 + $0x5c] sm:$0xf]
      %v340 = vld [vmem:[%s299 + $0x60] sm:$0xf]
      %v341 = vld [vmem:[%s299 + $0x64] sm:$0xf]
      %v342 = vld [vmem:[%s299 + $0x68] sm:$0xf]
      %v343 = vld [vmem:[%s299 + $0x6c] sm:$0xf]
      %v344 = vld [vmem:[%s299 + $0x70] sm:$0xf]
      %v345 = vld [vmem:[%s299 + $0x74] sm:$0xf]
      %v346 = vld [vmem:[%s299 + $0x78] sm:$0xf]
      %v347 = vld [vmem:[%s299 + $0x7c] sm:$0xf]
      %v348 = vld [vmem:[%s1] sm:$0xf]
      %v349 = vld [vmem:[%s1 + $0x4] sm:$0xf]
      %v350 = vld [vmem:[%s1 + $0x8] sm:$0xf]
      %v351 = vld [vmem:[%s1 + $0xc] sm:$0xf]
      %v352 = vld [vmem:[%s2] sm:$0x1]
      %v354 = vlaneseq
      %v355 = vshrl.u32 %v354, 7
      %v356 = vsub.s32 0, %v355
      %v357 = vrot.slane %v352, %v356
      %v391 = vunpack.c.l.b16 %v316
      %v392 = vunpack.c.l.b16 %v317
      %v393 = vunpack.c.l.b16 %v318
      %v394 = vunpack.c.l.b16 %v319
      %v395 = vunpack.c.l.b16 %v320
      %v396 = vunpack.c.l.b16 %v321
      %v397 = vunpack.c.l.b16 %v322
      %v398 = vunpack.c.l.b16 %v323
      %v399 = vunpack.c.l.b16 %v324
      %v400 = vunpack.c.l.b16 %v325
      %v401 = vunpack.c.l.b16 %v326
      %v402 = vunpack.c.l.b16 %v327
      %v403 = vunpack.c.l.b16 %v328
      %v404 = vunpack.c.l.b16 %v329
      %v405 = vunpack.c.l.b16 %v330
      %v406 = vunpack.c.l.b16 %v331
      %v407 = vunpack.c.l.b16 %v332
      %v408 = vunpack.c.l.b16 %v333
      %v409 = vunpack.c.l.b16 %v334
      %v410 = vunpack.c.l.b16 %v335
      %v411 = vunpack.c.l.b16 %v336
      %v412 = vunpack.c.l.b16 %v337
      %v413 = vunpack.c.l.b16 %v338
      %v414 = vunpack.c.l.b16 %v339
      %v415 = vunpack.c.l.b16 %v340
      %v416 = vunpack.c.l.b16 %v341
      %v417 = vunpack.c.l.b16 %v342
      %v418 = vunpack.c.l.b16 %v343
      %v419 = vunpack.c.l.b16 %v344
      %v420 = vunpack.c.l.b16 %v345
      %v421 = vunpack.c.l.b16 %v346
      %v422 = vunpack.c.l.b16 %v347
      %v423 = vpack.c.b16 %v392, %v391
      %v424 = vpack.c.b16 %v394, %v393
      %v425 = vpack.c.b16 %v396, %v395
      %v426 = vpack.c.b16 %v398, %v397
      %v427 = vpack.c.b16 %v400, %v399
      %v428 = vpack.c.b16 %v402, %v401
      %v429 = vpack.c.b16 %v404, %v403
      %v430 = vpack.c.b16 %v406, %v405
      %v431 = vpack.c.b16 %v408, %v407
      %v432 = vpack.c.b16 %v410, %v409
      %v433 = vpack.c.b16 %v412, %v411
      %v434 = vpack.c.b16 %v414, %v413
      %v435 = vpack.c.b16 %v416, %v415
      %v436 = vpack.c.b16 %v418, %v417
      %v437 = vpack.c.b16 %v420, %v419
      %v438 = vpack.c.b16 %v422, %v421
      %v443 = vunpack.c.l.b16 %v348
      %v444 = vunpack.c.l.b16 %v349
      %v445 = vunpack.c.l.b16 %v350
      %v446 = vunpack.c.l.b16 %v351
      %v447 = vpack.c.b16 %v444, %v443
      %v448 = vpack.c.b16 %v446, %v445
      %vm451 = vcmask 261120
      %v453 = vsel %vm451, %v423, 0
      %v456 = vsel %vm451, %v424, 0
      %v459 = vsel %vm451, %v425, 0
      %v462 = vsel %vm451, %v426, 0
      %v465 = vsel %vm451, %v427, 0
      %v468 = vsel %vm451, %v428, 0
      %v471 = vsel %vm451, %v429, 0
      %v474 = vsel %vm451, %v430, 0
      %v477 = vsel %vm451, %v431, 0
      %v480 = vsel %vm451, %v432, 0
      %v483 = vsel %vm451, %v433, 0
      %v486 = vsel %vm451, %v434, 0
      %v489 = vsel %vm451, %v435, 0
      %v492 = vsel %vm451, %v436, 0
      %v495 = vsel %vm451, %v437, 0
      %v498 = vsel %vm451, %v438, 0
      %500 = vmatprep.subr.bf16.mxu0 0
      %501 = vmatpush1.bf16.msra.mxu0 0
      %502 = vmatprep.subr.bf16.mxu0 0
      %503 = vmatpush1.bf16.msra.mxu0 0
      %504 = vmatprep.subr.bf16.mxu0 0
      %505 = vmatpush1.bf16.msra.mxu0 0
      %506 = vmatprep.subr.bf16.mxu0 0
      %507 = vmatpush1.bf16.msra.mxu0 0
      %508 = vmatprep.subr.bf16.mxu0 0
      %509 = vmatpush1.bf16.msra.mxu0 0
      %510 = vmatprep.subr.bf16.mxu0 0
      %511 = vmatpush1.bf16.msra.mxu0 0
      %512 = vmatprep.subr.bf16.mxu0 0
      %513 = vmatpush1.bf16.msra.mxu0 %v448
      %514 = vmatprep.subr.bf16.mxu0 0
      %515 = vmatpush1.bf16.msra.mxu0 %v447
      %516 = vmatprep.subr.bf16.mxu0 0
      %517 = vmatpush2.bf16.msra.mxu0 0
      %518 = vmatprep.subr.bf16.mxu0 0
      %519 = vmatpush2.bf16.msra.mxu0 0
      %520 = vmatprep.subr.bf16.mxu0 0
      %521 = vmatpush2.bf16.msra.mxu0 0
      %522 = vmatprep.subr.bf16.mxu0 0
      %523 = vmatpush2.bf16.msra.mxu0 0
      %524 = vmatprep.subr.bf16.mxu0 0
      %525 = vmatpush2.bf16.msra.mxu0 0
      %526 = vmatprep.subr.bf16.mxu0 0
      %527 = vmatpush2.bf16.msra.mxu0 0
      %528 = vmatprep.subr.bf16.mxu0 0
      %529 = vmatpush2.bf16.msra.mxu0 0
      %530 = vmatprep.subr.bf16.mxu0 0
      %531 = vmatpush2.bf16.msra.mxu0 0
      %532 = vmatprep.mubr.bf16.mxu0 0
      %533 = vmatmul.mubr.bf16.gmra.mxu0 %v453
      %v534 = vpop.f32.mrf.mxu0
      %v535 = vadd.f32 %v357, %v534
      %v536 = vpop.f32.mrf.mxu0
      %v537 = vpop.f32.mrf.mxu0
      %v538 = vadd.f32 %v357, %v537
      %v539 = vpop.f32.mrf.mxu0
      %540 = vmatprep.mubr.bf16.mxu0 0
      %541 = vmatmul.mubr.bf16.gmra.mxu0 %v456
      %v542 = vpop.f32.mrf.mxu0
      %v543 = vadd.f32 %v357, %v542
      %v544 = vpop.f32.mrf.mxu0
      %v545 = vpop.f32.mrf.mxu0
      %v546 = vadd.f32 %v357, %v545
      %v547 = vpop.f32.mrf.mxu0
      %548 = vmatprep.mubr.bf16.mxu0 0
      %549 = vmatmul.mubr.bf16.gmra.mxu0 %v459
      %v550 = vpop.f32.mrf.mxu0
      %v551 = vadd.f32 %v357, %v550
      %v552 = vpop.f32.mrf.mxu0
      %v553 = vpop.f32.mrf.mxu0
      %v554 = vadd.f32 %v357, %v553
      %v555 = vpop.f32.mrf.mxu0
      %556 = vmatprep.mubr.bf16.mxu0 0
      %557 = vmatmul.mubr.bf16.gmra.mxu0 %v462
      %v558 = vpop.f32.mrf.mxu0
      %v559 = vadd.f32 %v357, %v558
      %v560 = vpop.f32.mrf.mxu0
      %v561 = vpop.f32.mrf.mxu0
      %v562 = vadd.f32 %v357, %v561
      %v563 = vpop.f32.mrf.mxu0
      %564 = vmatprep.mubr.bf16.mxu0 0
      %565 = vmatmul.mubr.bf16.gmra.mxu0 %v465
      %v566 = vpop.f32.mrf.mxu0
      %v567 = vadd.f32 %v357, %v566
      %v568 = vpop.f32.mrf.mxu0
      %v569 = vpop.f32.mrf.mxu0
      %v570 = vadd.f32 %v357, %v569
      %v571 = vpop.f32.mrf.mxu0
      %572 = vmatprep.mubr.bf16.mxu0 0
      %573 = vmatmul.mubr.bf16.gmra.mxu0 %v468
      %v574 = vpop.f32.mrf.mxu0
      %v575 = vadd.f32 %v357, %v574
      %v576 = vpop.f32.mrf.mxu0
      %v577 = vpop.f32.mrf.mxu0
      %v578 = vadd.f32 %v357, %v577
      %v579 = vpop.f32.mrf.mxu0
      %580 = vmatprep.mubr.bf16.mxu0 0
      %581 = vmatmul.mubr.bf16.gmra.mxu0 %v471
      %v582 = vpop.f32.mrf.mxu0
      %v583 = vadd.f32 %v357, %v582
      %v584 = vpop.f32.mrf.mxu0
      %v585 = vpop.f32.mrf.mxu0
      %v586 = vadd.f32 %v357, %v585
      %v587 = vpop.f32.mrf.mxu0
      %588 = vmatprep.mubr.bf16.mxu0 0
      %589 = vmatmul.mubr.bf16.gmra.mxu0 %v474
      %v590 = vpop.f32.mrf.mxu0
      %v591 = vadd.f32 %v357, %v590
      %v592 = vpop.f32.mrf.mxu0
      %v593 = vpop.f32.mrf.mxu0
      %v594 = vadd.f32 %v357, %v593
      %v595 = vpop.f32.mrf.mxu0
      %596 = vmatprep.mubr.bf16.mxu0 0
      %597 = vmatmul.mubr.bf16.gmra.mxu0 %v477
      %v598 = vpop.f32.mrf.mxu0
      %v599 = vadd.f32 %v357, %v598
      %v600 = vpop.f32.mrf.mxu0
      %v601 = vpop.f32.mrf.mxu0
      %v602 = vadd.f32 %v357, %v601
      %v603 = vpop.f32.mrf.mxu0
      %604 = vmatprep.mubr.bf16.mxu0 0
      %605 = vmatmul.mubr.bf16.gmra.mxu0 %v480
      %v606 = vpop.f32.mrf.mxu0
      %v607 = vadd.f32 %v357, %v606
      %v608 = vpop.f32.mrf.mxu0
      %v609 = vpop.f32.mrf.mxu0
      %v610 = vadd.f32 %v357, %v609
      %v611 = vpop.f32.mrf.mxu0
      %612 = vmatprep.mubr.bf16.mxu0 0
      %613 = vmatmul.mubr.bf16.gmra.mxu0 %v483
      %v614 = vpop.f32.mrf.mxu0
      %v615 = vadd.f32 %v357, %v614
      %v616 = vpop.f32.mrf.mxu0
      %v617 = vpop.f32.mrf.mxu0
      %v618 = vadd.f32 %v357, %v617
      %v619 = vpop.f32.mrf.mxu0
      %620 = vmatprep.mubr.bf16.mxu0 0
      %621 = vmatmul.mubr.bf16.gmra.mxu0 %v486
      %v622 = vpop.f32.mrf.mxu0
      %v623 = vadd.f32 %v357, %v622
      %v624 = vpop.f32.mrf.mxu0
      %v625 = vpop.f32.mrf.mxu0
      %v626 = vadd.f32 %v357, %v625
      %v627 = vpop.f32.mrf.mxu0
      %628 = vmatprep.mubr.bf16.mxu0 0
      %629 = vmatmul.mubr.bf16.gmra.mxu0 %v489
      %v630 = vpop.f32.mrf.mxu0
      %v631 = vadd.f32 %v357, %v630
      %v632 = vpop.f32.mrf.mxu0
      %v633 = vpop.f32.mrf.mxu0
      %v634 = vadd.f32 %v357, %v633
      %v635 = vpop.f32.mrf.mxu0
      %636 = vmatprep.mubr.bf16.mxu0 0
      %637 = vmatmul.mubr.bf16.gmra.mxu0 %v492
      %v638 = vpop.f32.mrf.mxu0
      %v639 = vadd.f32 %v357, %v638
      %v640 = vpop.f32.mrf.mxu0
      %v641 = vpop.f32.mrf.mxu0
      %v642 = vadd.f32 %v357, %v641
      %v643 = vpop.f32.mrf.mxu0
      %644 = vmatprep.mubr.bf16.mxu0 0
      %645 = vmatmul.mubr.bf16.gmra.mxu0 %v495
      %v646 = vpop.f32.mrf.mxu0
      %v647 = vadd.f32 %v357, %v646
      %v648 = vpop.f32.mrf.mxu0
      %v649 = vpop.f32.mrf.mxu0
      %v650 = vadd.f32 %v357, %v649
      %v651 = vpop.f32.mrf.mxu0
      %652 = vmatprep.mubr.bf16.mxu0 0
      %653 = vmatmul.mubr.bf16.gmra.mxu0 %v498
      %v654 = vpop.f32.mrf.mxu0
      %v655 = vadd.f32 %v357, %v654
      %v656 = vpop.f32.mrf.mxu0
      %v657 = vpop.f32.mrf.mxu0
      %v658 = vadd.f32 %v357, %v657
      %v659 = vpop.f32.mrf.mxu0
      %660 = vdwg.mxu0
      %v661 = vxor.u32 %v535, 2147483648
      %v662 = vxor.u32 %v538, 2147483648
      %v663 = vxor.u32 %v543, 2147483648
      %v664 = vxor.u32 %v546, 2147483648
      %v665 = vxor.u32 %v551, 2147483648
      %v666 = vxor.u32 %v554, 2147483648
      %v667 = vxor.u32 %v559, 2147483648
      %v668 = vxor.u32 %v562, 2147483648
      %v669 = vxor.u32 %v567, 2147483648
      %v670 = vxor.u32 %v570, 2147483648
      %v671 = vxor.u32 %v575, 2147483648
      %v672 = vxor.u32 %v578, 2147483648
      %v673 = vxor.u32 %v583, 2147483648
      %v674 = vxor.u32 %v586, 2147483648
      %v675 = vxor.u32 %v591, 2147483648
      %v676 = vxor.u32 %v594, 2147483648
      %v677 = vxor.u32 %v599, 2147483648
      %v678 = vxor.u32 %v602, 2147483648
      %v679 = vxor.u32 %v607, 2147483648
      %v680 = vxor.u32 %v610, 2147483648
      %v681 = vxor.u32 %v615, 2147483648
      %v682 = vxor.u32 %v618, 2147483648
      %v683 = vxor.u32 %v623, 2147483648
      %v684 = vxor.u32 %v626, 2147483648
      %v685 = vxor.u32 %v631, 2147483648
      %v686 = vxor.u32 %v634, 2147483648
      %v687 = vxor.u32 %v639, 2147483648
      %v688 = vxor.u32 %v642, 2147483648
      %v689 = vxor.u32 %v647, 2147483648
      %v690 = vxor.u32 %v650, 2147483648
      %v691 = vxor.u32 %v655, 2147483648
      %v692 = vxor.u32 %v658, 2147483648
      %v693 = vmul.f32 %v661, 1.442695
      %v694 = vpow.pop %v693
      %v695 = vmul.f32 %v662, 1.442695
      %v696 = vpow.pop %v695
      %v697 = vmul.f32 %v663, 1.442695
      %v698 = vpow.pop %v697
      %v699 = vmul.f32 %v664, 1.442695
      %v700 = vpow.pop %v699
      %v701 = vmul.f32 %v665, 1.442695
      %v702 = vpow.pop %v701
      %v703 = vmul.f32 %v666, 1.442695
      %v704 = vpow.pop %v703
      %v705 = vmul.f32 %v667, 1.442695
      %v706 = vpow.pop %v705
      %v707 = vmul.f32 %v668, 1.442695
      %v708 = vpow.pop %v707
      %v709 = vmul.f32 %v669, 1.442695
      %v710 = vpow.pop %v709
      %v711 = vmul.f32 %v670, 1.442695
      %v712 = vpow.pop %v711
      %v713 = vmul.f32 %v671, 1.442695
      %v714 = vpow.pop %v713
      %v715 = vmul.f32 %v672, 1.442695
      %v716 = vpow.pop %v715
      %v717 = vmul.f32 %v673, 1.442695
      %v718 = vpow.pop %v717
      %v719 = vmul.f32 %v674, 1.442695
      %v720 = vpow.pop %v719
      %v721 = vmul.f32 %v675, 1.442695
      %v722 = vpow.pop %v721
      %v723 = vmul.f32 %v676, 1.442695
      %v724 = vpow.pop %v723
      %v725 = vmul.f32 %v677, 1.442695
      %v726 = vpow.pop %v725
      %v727 = vmul.f32 %v678, 1.442695
      %v728 = vpow.pop %v727
      %v729 = vmul.f32 %v679, 1.442695
      %v730 = vpow.pop %v729
      %v731 = vmul.f32 %v680, 1.442695
      %v732 = vpow.pop %v731
      %v733 = vmul.f32 %v681, 1.442695
      %v734 = vpow.pop %v733
      %v735 = vmul.f32 %v682, 1.442695
      %v736 = vpow.pop %v735
      %v737 = vmul.f32 %v683, 1.442695
      %v738 = vpow.pop %v737
      %v739 = vmul.f32 %v684, 1.442695
      %v740 = vpow.pop %v739
      %v741 = vmul.f32 %v685, 1.442695
      %v742 = vpow.pop %v741
      %v743 = vmul.f32 %v686, 1.442695
      %v744 = vpow.pop %v743
      %v745 = vmul.f32 %v687, 1.442695
      %v746 = vpow.pop %v745
      %v747 = vmul.f32 %v688, 1.442695
      %v748 = vpow.pop %v747
      %v749 = vmul.f32 %v689, 1.442695
      %v750 = vpow.pop %v749
      %v751 = vmul.f32 %v690, 1.442695
      %v752 = vpow.pop %v751
      %v753 = vmul.f32 %v691, 1.442695
      %v754 = vpow.pop %v753
      %v755 = vmul.f32 %v692, 1.442695
      %v756 = vpow.pop %v755
      %v757 = vadd.f32 %v694, 1.0
      %v758 = vadd.f32 %v696, 1.0
      %v759 = vadd.f32 %v698, 1.0
      %v760 = vadd.f32 %v700, 1.0
      %v761 = vadd.f32 %v702, 1.0
      %v762 = vadd.f32 %v704, 1.0
      %v763 = vadd.f32 %v706, 1.0
      %v764 = vadd.f32 %v708, 1.0
      %v765 = vadd.f32 %v710, 1.0
      %v766 = vadd.f32 %v712, 1.0
      %v767 = vadd.f32 %v714, 1.0
      %v768 = vadd.f32 %v716, 1.0
      %v769 = vadd.f32 %v718, 1.0
      %v770 = vadd.f32 %v720, 1.0
      %v771 = vadd.f32 %v722, 1.0
      %v772 = vadd.f32 %v724, 1.0
      %v773 = vadd.f32 %v726, 1.0
      %v774 = vadd.f32 %v728, 1.0
      %v775 = vadd.f32 %v730, 1.0
      %v776 = vadd.f32 %v732, 1.0
      %v777 = vadd.f32 %v734, 1.0
      %v778 = vadd.f32 %v736, 1.0
      %v779 = vadd.f32 %v738, 1.0
      %v780 = vadd.f32 %v740, 1.0
      %v781 = vadd.f32 %v742, 1.0
      %v782 = vadd.f32 %v744, 1.0
      %v783 = vadd.f32 %v746, 1.0
      %v784 = vadd.f32 %v748, 1.0
      %v785 = vadd.f32 %v750, 1.0
      %v786 = vadd.f32 %v752, 1.0
      %v787 = vadd.f32 %v754, 1.0
      %v788 = vadd.f32 %v756, 1.0
      %v789 = vrcp.pop %v757
      %v790 = vmul.f32 1.0, %v789
      %v791 = vrcp.pop %v758
      %v792 = vmul.f32 1.0, %v791
      %v793 = vrcp.pop %v759
      %v794 = vmul.f32 1.0, %v793
      %v795 = vrcp.pop %v760
      %v796 = vmul.f32 1.0, %v795
      %v797 = vrcp.pop %v761
      %v798 = vmul.f32 1.0, %v797
      %v799 = vrcp.pop %v762
      %v800 = vmul.f32 1.0, %v799
      %v801 = vrcp.pop %v763
      %v802 = vmul.f32 1.0, %v801
      %v803 = vrcp.pop %v764
      %v804 = vmul.f32 1.0, %v803
      %v805 = vrcp.pop %v765
      %v806 = vmul.f32 1.0, %v805
      %v807 = vrcp.pop %v766
      %v808 = vmul.f32 1.0, %v807
      %v809 = vrcp.pop %v767
      %v810 = vmul.f32 1.0, %v809
      %v811 = vrcp.pop %v768
      %v812 = vmul.f32 1.0, %v811
      %v813 = vrcp.pop %v769
      %v814 = vmul.f32 1.0, %v813
      %v815 = vrcp.pop %v770
      %v816 = vmul.f32 1.0, %v815
      %v817 = vrcp.pop %v771
      %v818 = vmul.f32 1.0, %v817
      %v819 = vrcp.pop %v772
      %v820 = vmul.f32 1.0, %v819
      %v821 = vrcp.pop %v773
      %v822 = vmul.f32 1.0, %v821
      %v823 = vrcp.pop %v774
      %v824 = vmul.f32 1.0, %v823
      %v825 = vrcp.pop %v775
      %v826 = vmul.f32 1.0, %v825
      %v827 = vrcp.pop %v776
      %v828 = vmul.f32 1.0, %v827
      %v829 = vrcp.pop %v777
      %v830 = vmul.f32 1.0, %v829
      %v831 = vrcp.pop %v778
      %v832 = vmul.f32 1.0, %v831
      %v833 = vrcp.pop %v779
      %v834 = vmul.f32 1.0, %v833
      %v835 = vrcp.pop %v780
      %v836 = vmul.f32 1.0, %v835
      %v837 = vrcp.pop %v781
      %v838 = vmul.f32 1.0, %v837
      %v839 = vrcp.pop %v782
      %v840 = vmul.f32 1.0, %v839
      %v841 = vrcp.pop %v783
      %v842 = vmul.f32 1.0, %v841
      %v843 = vrcp.pop %v784
      %v844 = vmul.f32 1.0, %v843
      %v845 = vrcp.pop %v785
      %v846 = vmul.f32 1.0, %v845
      %v847 = vrcp.pop %v786
      %v848 = vmul.f32 1.0, %v847
      %v849 = vrcp.pop %v787
      %v850 = vmul.f32 1.0, %v849
      %v851 = vrcp.pop %v788
      %v852 = vmul.f32 1.0, %v851
      %v853 = vmul.f32 %v535, %v790
      %v854 = vmul.f32 %v538, %v792
      %v855 = vmul.f32 %v543, %v794
      %v856 = vmul.f32 %v546, %v796
      %v857 = vmul.f32 %v551, %v798
      %v858 = vmul.f32 %v554, %v800
      %v859 = vmul.f32 %v559, %v802
      %v860 = vmul.f32 %v562, %v804
      %v861 = vmul.f32 %v567, %v806
      %v862 = vmul.f32 %v570, %v808
      %v863 = vmul.f32 %v575, %v810
      %v864 = vmul.f32 %v578, %v812
      %v865 = vmul.f32 %v583, %v814
      %v866 = vmul.f32 %v586, %v816
      %v867 = vmul.f32 %v591, %v818
      %v868 = vmul.f32 %v594, %v820
      %v869 = vmul.f32 %v599, %v822
      %v870 = vmul.f32 %v602, %v824
      %v871 = vmul.f32 %v607, %v826
      %v872 = vmul.f32 %v610, %v828
      %v873 = vmul.f32 %v615, %v830
      %v874 = vmul.f32 %v618, %v832
      %v875 = vmul.f32 %v623, %v834
      %v876 = vmul.f32 %v626, %v836
      %v877 = vmul.f32 %v631, %v838
      %v878 = vmul.f32 %v634, %v840
      %v879 = vmul.f32 %v639, %v842
      %v880 = vmul.f32 %v642, %v844
      %v881 = vmul.f32 %v647, %v846
      %v882 = vmul.f32 %v650, %v848
      %v883 = vmul.f32 %v655, %v850
      %v884 = vmul.f32 %v658, %v852
      %v885 = vpack.c.bf16 %v854, %v853
      %v886 = vpack.c.bf16 %v856, %v855
      %v887 = vpack.c.bf16 %v858, %v857
      %v888 = vpack.c.bf16 %v860, %v859
      %v889 = vpack.c.bf16 %v862, %v861
      %v890 = vpack.c.bf16 %v864, %v863
      %v891 = vpack.c.bf16 %v866, %v865
      %v892 = vpack.c.bf16 %v868, %v867
      %v893 = vpack.c.bf16 %v870, %v869
      %v894 = vpack.c.bf16 %v872, %v871
      %v895 = vpack.c.bf16 %v874, %v873
      %v896 = vpack.c.bf16 %v876, %v875
      %v897 = vpack.c.bf16 %v878, %v877
      %v898 = vpack.c.bf16 %v880, %v879
      %v899 = vpack.c.bf16 %v882, %v881
      %v900 = vpack.c.bf16 %v884, %v883
      %v901 = vld [vmem:[%s3] sm:$0xff]
      %v902 = vld [vmem:[%s3 + $0x8] sm:$0xff]
      %v903 = vld [vmem:[%s3 + $0x10] sm:$0xff]
      %v904 = vld [vmem:[%s3 + $0x18] sm:$0xff]
      %v905 = vld [vmem:[%s3 + $0x20] sm:$0xff]
      %v906 = vld [vmem:[%s3 + $0x28] sm:$0xf]
      %v907 = vld [vmem:[%s3 + $0x2c] sm:$0xff]
      %v908 = vld [vmem:[%s3 + $0x34] sm:$0xff]
      %v909 = vld [vmem:[%s3 + $0x3c] sm:$0xff]
      %v910 = vld [vmem:[%s3 + $0x44] sm:$0xff]
      %v911 = vld [vmem:[%s3 + $0x4c] sm:$0xff]
      %v912 = vld [vmem:[%s3 + $0x54] sm:$0xf]
      %v913 = vld [vmem:[%s3 + $0x58] sm:$0xff]
      %v914 = vld [vmem:[%s3 + $0x60] sm:$0xff]
      %v915 = vld [vmem:[%s3 + $0x68] sm:$0xff]
      %v916 = vld [vmem:[%s3 + $0x70] sm:$0xff]
      %v917 = vld [vmem:[%s3 + $0x78] sm:$0xff]
      %v918 = vld [vmem:[%s3 + $0x80] sm:$0xf]
      %v919 = vld [vmem:[%s3 + $0x84] sm:$0xff]
      %v920 = vld [vmem:[%s3 + $0x8c] sm:$0xff]
      %v921 = vld [vmem:[%s3 + $0x94] sm:$0xff]
      %v922 = vld [vmem:[%s3 + $0x9c] sm:$0xff]
      %v923 = vld [vmem:[%s3 + $0xa4] sm:$0xff]
      %v924 = vld [vmem:[%s3 + $0xac] sm:$0xf]
      %v925 = vld [vmem:[%s4] sm:$0xff]
      %v926 = vld [vmem:[%s4 + $0x8] sm:$0x7]
      %v929 = vlaneseq
      %v930 = vshrl.u32 %v929, 7
      %v931 = vsub.s32 0, %v930
      %v932 = vrot.slane %v925, %v931
      %v933 = vlaneseq
      %v934 = vshrl.u32 %v933, 7
      %v935 = vsub.s32 1, %v934
      %v936 = vrot.slane %v925, %v935
      %v937 = vlaneseq
      %v938 = vshrl.u32 %v937, 7
      %v939 = vsub.s32 2, %v938
      %v940 = vrot.slane %v925, %v939
      %v941 = vlaneseq
      %v942 = vshrl.u32 %v941, 7
      %v943 = vsub.s32 3, %v942
      %v944 = vrot.slane %v925, %v943
      %v945 = vlaneseq
      %v946 = vshrl.u32 %v945, 7
      %v947 = vsub.s32 4, %v946
      %v948 = vrot.slane %v925, %v947
      %v949 = vlaneseq
      %v950 = vshrl.u32 %v949, 7
      %v951 = vsub.s32 5, %v950
      %v952 = vrot.slane %v925, %v951
      %v953 = vlaneseq
      %v954 = vshrl.u32 %v953, 7
      %v955 = vsub.s32 6, %v954
      %v956 = vrot.slane %v925, %v955
      %v957 = vlaneseq
      %v958 = vshrl.u32 %v957, 7
      %v959 = vsub.s32 7, %v958
      %v960 = vrot.slane %v925, %v959
      %v961 = vlaneseq
      %v962 = vshrl.u32 %v961, 7
      %v963 = vsub.s32 0, %v962
      %v964 = vrot.slane %v926, %v963
      %v965 = vlaneseq
      %v966 = vshrl.u32 %v965, 7
      %v967 = vsub.s32 1, %v966
      %v968 = vrot.slane %v926, %v967
      %v969 = vlaneseq
      %v970 = vshrl.u32 %v969, 7
      %v971 = vsub.s32 2, %v970
      %v972 = vrot.slane %v926, %v971
      %v1008 = vunpack.c.l.b16 %v901
      %v1009 = vunpack.c.h.b16 %v901
      %v1010 = vunpack.c.l.b16 %v902
      %v1011 = vunpack.c.h.b16 %v902
      %v1012 = vunpack.c.l.b16 %v903
      %v1013 = vunpack.c.h.b16 %v903
      %v1014 = vunpack.c.l.b16 %v904
      %v1015 = vunpack.c.h.b16 %v904
      %v1016 = vunpack.c.l.b16 %v905
      %v1017 = vunpack.c.h.b16 %v905
      %v1018 = vunpack.c.l.b16 %v906
      %v1019 = vunpack.c.l.b16 %v907
      %v1020 = vunpack.c.h.b16 %v907
      %v1021 = vunpack.c.l.b16 %v908
      %v1022 = vunpack.c.h.b16 %v908
      %v1023 = vunpack.c.l.b16 %v909
      %v1024 = vunpack.c.h.b16 %v909
      %v1025 = vunpack.c.l.b16 %v910
      %v1026 = vunpack.c.h.b16 %v910
      %v1027 = vunpack.c.l.b16 %v911
      %v1028 = vunpack.c.h.b16 %v911
      %v1029 = vunpack.c.l.b16 %v912
      %v1030 = vunpack.c.l.b16 %v913
      %v1031 = vunpack.c.h.b16 %v913
      %v1032 = vunpack.c.l.b16 %v914
      %v1033 = vunpack.c.h.b16 %v914
      %v1034 = vunpack.c.l.b16 %v915
      %v1035 = vunpack.c.h.b16 %v915
      %v1036 = vunpack.c.l.b16 %v916
      %v1037 = vunpack.c.h.b16 %v916
      %v1038 = vunpack.c.l.b16 %v917
      %v1039 = vunpack.c.h.b16 %v917
      %v1040 = vunpack.c.l.b16 %v918
      %v1041 = vunpack.c.l.b16 %v919
      %v1042 = vunpack.c.h.b16 %v919
      %v1043 = vunpack.c.l.b16 %v920
      %v1044 = vunpack.c.h.b16 %v920
      %v1045 = vunpack.c.l.b16 %v921
      %v1046 = vunpack.c.h.b16 %v921
      %v1047 = vunpack.c.l.b16 %v922
      %v1048 = vunpack.c.h.b16 %v922
      %v1049 = vunpack.c.l.b16 %v923
      %v1050 = vunpack.c.h.b16 %v923
      %v1051 = vunpack.c.l.b16 %v924
      %v1052 = vpack.c.b16 %v1019, %v1008
      %v1053 = vpack.c.b16 %v1020, %v1009
      %v1054 = vpack.c.b16 %v1021, %v1010
      %v1055 = vpack.c.b16 %v1022, %v1011
      %v1056 = vpack.c.b16 %v1023, %v1012
      %v1057 = vpack.c.b16 %v1024, %v1013
      %v1058 = vpack.c.b16 %v1025, %v1014
      %v1059 = vpack.c.b16 %v1026, %v1015
      %v1060 = vpack.c.b16 %v1027, %v1016
      %v1061 = vpack.c.b16 %v1028, %v1017
      %v1062 = vpack.c.b16 %v1029, %v1018
      %v1063 = vpack.c.b16 %v1041, %v1030
      %v1064 = vpack.c.b16 %v1042, %v1031
      %v1065 = vpack.c.b16 %v1043, %v1032
      %v1066 = vpack.c.b16 %v1044, %v1033
      %v1067 = vpack.c.b16 %v1045, %v1034
      %v1068 = vpack.c.b16 %v1046, %v1035
      %v1069 = vpack.c.b16 %v1047, %v1036
      %v1070 = vpack.c.b16 %v1048, %v1037
      %v1071 = vpack.c.b16 %v1049, %v1038
      %v1072 = vpack.c.b16 %v1050, %v1039
      %v1073 = vpack.c.b16 %v1051, %v1040
      %v1097 = vsel %vm451, %v885, 0
      %v1100 = vsel %vm451, %v886, 0
      %v1103 = vsel %vm451, %v887, 0
      %v1106 = vsel %vm451, %v888, 0
      %v1109 = vsel %vm451, %v889, 0
      %v1112 = vsel %vm451, %v890, 0
      %v1115 = vsel %vm451, %v891, 0
      %v1118 = vsel %vm451, %v892, 0
      %v1121 = vsel %vm451, %v893, 0
      %v1124 = vsel %vm451, %v894, 0
      %v1127 = vsel %vm451, %v895, 0
      %v1130 = vsel %vm451, %v896, 0
      %v1133 = vsel %vm451, %v897, 0
      %v1136 = vsel %vm451, %v898, 0
      %v1139 = vsel %vm451, %v899, 0
      %v1142 = vsel %vm451, %v900, 0
      %1144 = vmatprep.subr.bf16.mxu0 0
      %1145 = vmatpush1.bf16.msra.mxu0 0
      %1146 = vmatprep.subr.bf16.mxu0 0
      %1147 = vmatpush1.bf16.msra.mxu0 0
      %1148 = vmatprep.subr.bf16.mxu0 0
      %1149 = vmatpush1.bf16.msra.mxu0 0
      %1150 = vmatprep.subr.bf16.mxu0 0
      %1151 = vmatpush1.bf16.msra.mxu0 0
      %1152 = vmatprep.subr.bf16.mxu0 0
      %1153 = vmatpush1.bf16.msra.mxu0 0
      %1154 = vmatprep.subr.bf16.mxu0 0
      %1155 = vmatpush1.bf16.msra.mxu0 0
      %1156 = vmatprep.subr.bf16.mxu0 %v1064
      %1157 = vmatpush1.bf16.msra.mxu0 %v1063
      %1158 = vmatprep.subr.bf16.mxu0 %v1053
      %1159 = vmatpush1.bf16.msra.mxu0 %v1052
      %1160 = vmatprep.subr.bf16.mxu0 0
      %1161 = vmatpush2.bf16.msra.mxu0 0
      %1162 = vmatprep.subr.bf16.mxu0 0
      %1163 = vmatpush2.bf16.msra.mxu0 0
      %1164 = vmatprep.subr.bf16.mxu0 0
      %1165 = vmatpush2.bf16.msra.mxu0 0
      %1166 = vmatprep.subr.bf16.mxu0 0
      %1167 = vmatpush2.bf16.msra.mxu0 0
      %1168 = vmatprep.subr.bf16.mxu0 0
      %1169 = vmatpush2.bf16.msra.mxu0 0
      %1170 = vmatprep.subr.bf16.mxu0 0
      %1171 = vmatpush2.bf16.msra.mxu0 0
      %1172 = vmatprep.subr.bf16.mxu0 0
      %1173 = vmatpush2.bf16.msra.mxu0 0
      %1174 = vmatprep.subr.bf16.mxu0 0
      %1175 = vmatpush2.bf16.msra.mxu0 0
      %1176 = vmatprep.mubr.bf16.mxu0 0
      %1177 = vmatmul.mubr.bf16.gmra.mxu0 %v1097
      %v1178 = vpop.f32.mrf.mxu0
      %v1179 = vadd.f32 %v932, %v1178
      %v1180 = vpop.f32.mrf.mxu0
      %v1181 = vadd.f32 %v936, %v1180
      %v1182 = vpop.f32.mrf.mxu0
      %v1183 = vadd.f32 %v932, %v1182
      %v1184 = vpop.f32.mrf.mxu0
      %v1185 = vadd.f32 %v936, %v1184
      %1186 = vmatprep.mubr.bf16.mxu0 0
      %1187 = vmatmul.mubr.bf16.gmra.mxu0 %v1100
      %v1188 = vpop.f32.mrf.mxu0
      %v1189 = vadd.f32 %v932, %v1188
      %v1190 = vpop.f32.mrf.mxu0
      %v1191 = vadd.f32 %v936, %v1190
      %v1192 = vpop.f32.mrf.mxu0
      %v1193 = vadd.f32 %v932, %v1192
      %v1194 = vpop.f32.mrf.mxu0
      %v1195 = vadd.f32 %v936, %v1194
      %1196 = vmatprep.mubr.bf16.mxu0 0
      %1197 = vmatmul.mubr.bf16.gmra.mxu0 %v1103
      %v1198 = vpop.f32.mrf.mxu0
      %v1199 = vadd.f32 %v932, %v1198
      %v1200 = vpop.f32.mrf.mxu0
      %v1201 = vadd.f32 %v936, %v1200
      %v1202 = vpop.f32.mrf.mxu0
      %v1203 = vadd.f32 %v932, %v1202
      %v1204 = vpop.f32.mrf.mxu0
      %v1205 = vadd.f32 %v936, %v1204
      %1206 = vmatprep.mubr.bf16.mxu0 0
      %1207 = vmatmul.mubr.bf16.gmra.mxu0 %v1106
      %v1208 = vpop.f32.mrf.mxu0
      %v1209 = vadd.f32 %v932, %v1208
      %v1210 = vpop.f32.mrf.mxu0
      %v1211 = vadd.f32 %v936, %v1210
      %v1212 = vpop.f32.mrf.mxu0
      %v1213 = vadd.f32 %v932, %v1212
      %v1214 = vpop.f32.mrf.mxu0
      %v1215 = vadd.f32 %v936, %v1214
      %1216 = vmatprep.mubr.bf16.mxu0 0
      %1217 = vmatmul.mubr.bf16.gmra.mxu0 %v1109
      %v1218 = vpop.f32.mrf.mxu0
      %v1219 = vadd.f32 %v932, %v1218
      %v1220 = vpop.f32.mrf.mxu0
      %v1221 = vadd.f32 %v936, %v1220
      %v1222 = vpop.f32.mrf.mxu0
      %v1223 = vadd.f32 %v932, %v1222
      %v1224 = vpop.f32.mrf.mxu0
      %v1225 = vadd.f32 %v936, %v1224
      %1226 = vmatprep.mubr.bf16.mxu0 0
      %1227 = vmatmul.mubr.bf16.gmra.mxu0 %v1112
      %v1228 = vpop.f32.mrf.mxu0
      %v1229 = vadd.f32 %v932, %v1228
      %v1230 = vpop.f32.mrf.mxu0
      %v1231 = vadd.f32 %v936, %v1230
      %v1232 = vpop.f32.mrf.mxu0
      %v1233 = vadd.f32 %v932, %v1232
      %v1234 = vpop.f32.mrf.mxu0
      %v1235 = vadd.f32 %v936, %v1234
      %1236 = vmatprep.mubr.bf16.mxu0 0
      %1237 = vmatmul.mubr.bf16.gmra.mxu0 %v1115
      %v1238 = vpop.f32.mrf.mxu0
      %v1239 = vadd.f32 %v932, %v1238
      %v1240 = vpop.f32.mrf.mxu0
      %v1241 = vadd.f32 %v936, %v1240
      %v1242 = vpop.f32.mrf.mxu0
      %v1243 = vadd.f32 %v932, %v1242
      %v1244 = vpop.f32.mrf.mxu0
      %v1245 = vadd.f32 %v936, %v1244
      %1246 = vmatprep.mubr.bf16.mxu0 0
      %1247 = vmatmul.mubr.bf16.gmra.mxu0 %v1118
      %v1248 = vpop.f32.mrf.mxu0
      %v1249 = vadd.f32 %v932, %v1248
      %v1250 = vpop.f32.mrf.mxu0
      %v1251 = vadd.f32 %v936, %v1250
      %v1252 = vpop.f32.mrf.mxu0
      %v1253 = vadd.f32 %v932, %v1252
      %v1254 = vpop.f32.mrf.mxu0
      %v1255 = vadd.f32 %v936, %v1254
      %1256 = vmatprep.mubr.bf16.mxu0 0
      %1257 = vmatmul.mubr.bf16.gmra.mxu0 %v1121
      %v1258 = vpop.f32.mrf.mxu0
      %v1259 = vadd.f32 %v932, %v1258
      %v1260 = vpop.f32.mrf.mxu0
      %v1261 = vadd.f32 %v936, %v1260
      %v1262 = vpop.f32.mrf.mxu0
      %v1263 = vadd.f32 %v932, %v1262
      %v1264 = vpop.f32.mrf.mxu0
      %v1265 = vadd.f32 %v936, %v1264
      %1266 = vmatprep.mubr.bf16.mxu0 0
      %1267 = vmatmul.mubr.bf16.gmra.mxu0 %v1124
      %v1268 = vpop.f32.mrf.mxu0
      %v1269 = vadd.f32 %v932, %v1268
      %v1270 = vpop.f32.mrf.mxu0
      %v1271 = vadd.f32 %v936, %v1270
      %v1272 = vpop.f32.mrf.mxu0
      %v1273 = vadd.f32 %v932, %v1272
      %v1274 = vpop.f32.mrf.mxu0
      %v1275 = vadd.f32 %v936, %v1274
      %1276 = vmatprep.mubr.bf16.mxu0 0
      %1277 = vmatmul.mubr.bf16.gmra.mxu0 %v1127
      %v1278 = vpop.f32.mrf.mxu0
      %v1279 = vadd.f32 %v932, %v1278
      %v1280 = vpop.f32.mrf.mxu0
      %v1281 = vadd.f32 %v936, %v1280
      %v1282 = vpop.f32.mrf.mxu0
      %v1283 = vadd.f32 %v932, %v1282
      %v1284 = vpop.f32.mrf.mxu0
      %v1285 = vadd.f32 %v936, %v1284
      %1286 = vmatprep.mubr.bf16.mxu0 0
      %1287 = vmatmul.mubr.bf16.gmra.mxu0 %v1130
      %v1288 = vpop.f32.mrf.mxu0
      %v1289 = vadd.f32 %v932, %v1288
      %v1290 = vpop.f32.mrf.mxu0
      %v1291 = vadd.f32 %v936, %v1290
      %v1292 = vpop.f32.mrf.mxu0
      %v1293 = vadd.f32 %v932, %v1292
      %v1294 = vpop.f32.mrf.mxu0
      %v1295 = vadd.f32 %v936, %v1294
      %1296 = vmatprep.mubr.bf16.mxu0 0
      %1297 = vmatmul.mubr.bf16.gmra.mxu0 %v1133
      %v1298 = vpop.f32.mrf.mxu0
      %v1299 = vadd.f32 %v932, %v1298
      %v1300 = vpop.f32.mrf.mxu0
      %v1301 = vadd.f32 %v936, %v1300
      %v1302 = vpop.f32.mrf.mxu0
      %v1303 = vadd.f32 %v932, %v1302
      %v1304 = vpop.f32.mrf.mxu0
      %v1305 = vadd.f32 %v936, %v1304
      %1306 = vmatprep.mubr.bf16.mxu0 0
      %1307 = vmatmul.mubr.bf16.gmra.mxu0 %v1136
      %v1308 = vpop.f32.mrf.mxu0
      %v1309 = vadd.f32 %v932, %v1308
      %v1310 = vpop.f32.mrf.mxu0
      %v1311 = vadd.f32 %v936, %v1310
      %v1312 = vpop.f32.mrf.mxu0
      %v1313 = vadd.f32 %v932, %v1312
      %v1314 = vpop.f32.mrf.mxu0
      %v1315 = vadd.f32 %v936, %v1314
      %1316 = vmatprep.mubr.bf16.mxu0 0
      %1317 = vmatmul.mubr.bf16.gmra.mxu0 %v1139
      %v1318 = vpop.f32.mrf.mxu0
      %v1319 = vadd.f32 %v932, %v1318
      %v1320 = vpop.f32.mrf.mxu0
      %v1321 = vadd.f32 %v936, %v1320
      %v1322 = vpop.f32.mrf.mxu0
      %v1323 = vadd.f32 %v932, %v1322
      %v1324 = vpop.f32.mrf.mxu0
      %v1325 = vadd.f32 %v936, %v1324
      %1326 = vmatprep.mubr.bf16.mxu0 0
      %1327 = vmatmul.mubr.bf16.gmra.mxu0 %v1142
      %v1328 = vpop.f32.mrf.mxu0
      %v1329 = vadd.f32 %v932, %v1328
      %v1330 = vpop.f32.mrf.mxu0
      %v1331 = vadd.f32 %v936, %v1330
      %v1332 = vpop.f32.mrf.mxu0
      %v1333 = vadd.f32 %v932, %v1332
      %v1334 = vpop.f32.mrf.mxu0
      %v1335 = vadd.f32 %v936, %v1334
      %1336 = vdwg.mxu0
      %1337 = vmatprep.subr.bf16.mxu0 0
      %1338 = vmatpush1.bf16.msra.mxu0 0
      %1339 = vmatprep.subr.bf16.mxu0 0
      %1340 = vmatpush1.bf16.msra.mxu0 0
      %1341 = vmatprep.subr.bf16.mxu0 0
      %1342 = vmatpush1.bf16.msra.mxu0 0
      %1343 = vmatprep.subr.bf16.mxu0 0
      %1344 = vmatpush1.bf16.msra.mxu0 0
      %1345 = vmatprep.subr.bf16.mxu0 0
      %1346 = vmatpush1.bf16.msra.mxu0 0
      %1347 = vmatprep.subr.bf16.mxu0 0
      %1348 = vmatpush1.bf16.msra.mxu0 0
      %1349 = vmatprep.subr.bf16.mxu0 %v1066
      %1350 = vmatpush1.bf16.msra.mxu0 %v1065
      %1351 = vmatprep.subr.bf16.mxu0 %v1055
      %1352 = vmatpush1.bf16.msra.mxu0 %v1054
      %1353 = vmatprep.subr.bf16.mxu0 0
      %1354 = vmatpush2.bf16.msra.mxu0 0
      %1355 = vmatprep.subr.bf16.mxu0 0
      %1356 = vmatpush2.bf16.msra.mxu0 0
      %1357 = vmatprep.subr.bf16.mxu0 0
      %1358 = vmatpush2.bf16.msra.mxu0 0
      %1359 = vmatprep.subr.bf16.mxu0 0
      %1360 = vmatpush2.bf16.msra.mxu0 0
      %1361 = vmatprep.subr.bf16.mxu0 0
      %1362 = vmatpush2.bf16.msra.mxu0 0
      %1363 = vmatprep.subr.bf16.mxu0 0
      %1364 = vmatpush2.bf16.msra.mxu0 0
      %1365 = vmatprep.subr.bf16.mxu0 0
      %1366 = vmatpush2.bf16.msra.mxu0 0
      %1367 = vmatprep.subr.bf16.mxu0 0
      %1368 = vmatpush2.bf16.msra.mxu0 0
      %1369 = vmatprep.mubr.bf16.mxu0 0
      %1370 = vmatmul.mubr.bf16.gmra.mxu0 %v1097
      %v1371 = vpop.f32.mrf.mxu0
      %v1372 = vadd.f32 %v940, %v1371
      %v1373 = vpop.f32.mrf.mxu0
      %v1374 = vadd.f32 %v944, %v1373
      %v1375 = vpop.f32.mrf.mxu0
      %v1376 = vadd.f32 %v940, %v1375
      %v1377 = vpop.f32.mrf.mxu0
      %v1378 = vadd.f32 %v944, %v1377
      %1379 = vmatprep.mubr.bf16.mxu0 0
      %1380 = vmatmul.mubr.bf16.gmra.mxu0 %v1100
      %v1381 = vpop.f32.mrf.mxu0
      %v1382 = vadd.f32 %v940, %v1381
      %v1383 = vpop.f32.mrf.mxu0
      %v1384 = vadd.f32 %v944, %v1383
      %v1385 = vpop.f32.mrf.mxu0
      %v1386 = vadd.f32 %v940, %v1385
      %v1387 = vpop.f32.mrf.mxu0
      %v1388 = vadd.f32 %v944, %v1387
      %1389 = vmatprep.mubr.bf16.mxu0 0
      %1390 = vmatmul.mubr.bf16.gmra.mxu0 %v1103
      %v1391 = vpop.f32.mrf.mxu0
      %v1392 = vadd.f32 %v940, %v1391
      %v1393 = vpop.f32.mrf.mxu0
      %v1394 = vadd.f32 %v944, %v1393
      %v1395 = vpop.f32.mrf.mxu0
      %v1396 = vadd.f32 %v940, %v1395
      %v1397 = vpop.f32.mrf.mxu0
      %v1398 = vadd.f32 %v944, %v1397
      %1399 = vmatprep.mubr.bf16.mxu0 0
      %1400 = vmatmul.mubr.bf16.gmra.mxu0 %v1106
      %v1401 = vpop.f32.mrf.mxu0
      %v1402 = vadd.f32 %v940, %v1401
      %v1403 = vpop.f32.mrf.mxu0
      %v1404 = vadd.f32 %v944, %v1403
      %v1405 = vpop.f32.mrf.mxu0
      %v1406 = vadd.f32 %v940, %v1405
      %v1407 = vpop.f32.mrf.mxu0
      %v1408 = vadd.f32 %v944, %v1407
      %1409 = vmatprep.mubr.bf16.mxu0 0
      %1410 = vmatmul.mubr.bf16.gmra.mxu0 %v1109
      %v1411 = vpop.f32.mrf.mxu0
      %v1412 = vadd.f32 %v940, %v1411
      %v1413 = vpop.f32.mrf.mxu0
      %v1414 = vadd.f32 %v944, %v1413
      %v1415 = vpop.f32.mrf.mxu0
      %v1416 = vadd.f32 %v940, %v1415
      %v1417 = vpop.f32.mrf.mxu0
      %v1418 = vadd.f32 %v944, %v1417
      %1419 = vmatprep.mubr.bf16.mxu0 0
      %1420 = vmatmul.mubr.bf16.gmra.mxu0 %v1112
      %v1421 = vpop.f32.mrf.mxu0
      %v1422 = vadd.f32 %v940, %v1421
      %v1423 = vpop.f32.mrf.mxu0
      %v1424 = vadd.f32 %v944, %v1423
      %v1425 = vpop.f32.mrf.mxu0
      %v1426 = vadd.f32 %v940, %v1425
      %v1427 = vpop.f32.mrf.mxu0
      %v1428 = vadd.f32 %v944, %v1427
      %1429 = vmatprep.mubr.bf16.mxu0 0
      %1430 = vmatmul.mubr.bf16.gmra.mxu0 %v1115
      %v1431 = vpop.f32.mrf.mxu0
      %v1432 = vadd.f32 %v940, %v1431
      %v1433 = vpop.f32.mrf.mxu0
      %v1434 = vadd.f32 %v944, %v1433
      %v1435 = vpop.f32.mrf.mxu0
      %v1436 = vadd.f32 %v940, %v1435
      %v1437 = vpop.f32.mrf.mxu0
      %v1438 = vadd.f32 %v944, %v1437
      %1439 = vmatprep.mubr.bf16.mxu0 0
      %1440 = vmatmul.mubr.bf16.gmra.mxu0 %v1118
      %v1441 = vpop.f32.mrf.mxu0
      %v1442 = vadd.f32 %v940, %v1441
      %v1443 = vpop.f32.mrf.mxu0
      %v1444 = vadd.f32 %v944, %v1443
      %v1445 = vpop.f32.mrf.mxu0
      %v1446 = vadd.f32 %v940, %v1445
      %v1447 = vpop.f32.mrf.mxu0
      %v1448 = vadd.f32 %v944, %v1447
      %1449 = vmatprep.mubr.bf16.mxu0 0
      %1450 = vmatmul.mubr.bf16.gmra.mxu0 %v1121
      %v1451 = vpop.f32.mrf.mxu0
      %v1452 = vadd.f32 %v940, %v1451
      %v1453 = vpop.f32.mrf.mxu0
      %v1454 = vadd.f32 %v944, %v1453
      %v1455 = vpop.f32.mrf.mxu0
      %v1456 = vadd.f32 %v940, %v1455
      %v1457 = vpop.f32.mrf.mxu0
      %v1458 = vadd.f32 %v944, %v1457
      %1459 = vmatprep.mubr.bf16.mxu0 0
      %1460 = vmatmul.mubr.bf16.gmra.mxu0 %v1124
      %v1461 = vpop.f32.mrf.mxu0
      %v1462 = vadd.f32 %v940, %v1461
      %v1463 = vpop.f32.mrf.mxu0
      %v1464 = vadd.f32 %v944, %v1463
      %v1465 = vpop.f32.mrf.mxu0
      %v1466 = vadd.f32 %v940, %v1465
      %v1467 = vpop.f32.mrf.mxu0
      %v1468 = vadd.f32 %v944, %v1467
      %1469 = vmatprep.mubr.bf16.mxu0 0
      %1470 = vmatmul.mubr.bf16.gmra.mxu0 %v1127
      %v1471 = vpop.f32.mrf.mxu0
      %v1472 = vadd.f32 %v940, %v1471
      %v1473 = vpop.f32.mrf.mxu0
      %v1474 = vadd.f32 %v944, %v1473
      %v1475 = vpop.f32.mrf.mxu0
      %v1476 = vadd.f32 %v940, %v1475
      %v1477 = vpop.f32.mrf.mxu0
      %v1478 = vadd.f32 %v944, %v1477
      %1479 = vmatprep.mubr.bf16.mxu0 0
      %1480 = vmatmul.mubr.bf16.gmra.mxu0 %v1130
      %v1481 = vpop.f32.mrf.mxu0
      %v1482 = vadd.f32 %v940, %v1481
      %v1483 = vpop.f32.mrf.mxu0
      %v1484 = vadd.f32 %v944, %v1483
      %v1485 = vpop.f32.mrf.mxu0
      %v1486 = vadd.f32 %v940, %v1485
      %v1487 = vpop.f32.mrf.mxu0
      %v1488 = vadd.f32 %v944, %v1487
      %1489 = vmatprep.mubr.bf16.mxu0 0
      %1490 = vmatmul.mubr.bf16.gmra.mxu0 %v1133
      %v1491 = vpop.f32.mrf.mxu0
      %v1492 = vadd.f32 %v940, %v1491
      %v1493 = vpop.f32.mrf.mxu0
      %v1494 = vadd.f32 %v944, %v1493
      %v1495 = vpop.f32.mrf.mxu0
      %v1496 = vadd.f32 %v940, %v1495
      %v1497 = vpop.f32.mrf.mxu0
      %v1498 = vadd.f32 %v944, %v1497
      %1499 = vmatprep.mubr.bf16.mxu0 0
      %1500 = vmatmul.mubr.bf16.gmra.mxu0 %v1136
      %v1501 = vpop.f32.mrf.mxu0
      %v1502 = vadd.f32 %v940, %v1501
      %v1503 = vpop.f32.mrf.mxu0
      %v1504 = vadd.f32 %v944, %v1503
      %v1505 = vpop.f32.mrf.mxu0
      %v1506 = vadd.f32 %v940, %v1505
      %v1507 = vpop.f32.mrf.mxu0
      %v1508 = vadd.f32 %v944, %v1507
      %1509 = vmatprep.mubr.bf16.mxu0 0
      %1510 = vmatmul.mubr.bf16.gmra.mxu0 %v1139
      %v1511 = vpop.f32.mrf.mxu0
      %v1512 = vadd.f32 %v940, %v1511
      %v1513 = vpop.f32.mrf.mxu0
      %v1514 = vadd.f32 %v944, %v1513
      %v1515 = vpop.f32.mrf.mxu0
      %v1516 = vadd.f32 %v940, %v1515
      %v1517 = vpop.f32.mrf.mxu0
      %v1518 = vadd.f32 %v944, %v1517
      %1519 = vmatprep.mubr.bf16.mxu0 0
      %1520 = vmatmul.mubr.bf16.gmra.mxu0 %v1142
      %v1521 = vpop.f32.mrf.mxu0
      %v1522 = vadd.f32 %v940, %v1521
      %v1523 = vpop.f32.mrf.mxu0
      %v1524 = vadd.f32 %v944, %v1523
      %v1525 = vpop.f32.mrf.mxu0
      %v1526 = vadd.f32 %v940, %v1525
      %v1527 = vpop.f32.mrf.mxu0
      %v1528 = vadd.f32 %v944, %v1527
      %1529 = vdwg.mxu0
      %1530 = vmatprep.subr.bf16.mxu0 0
      %1531 = vmatpush1.bf16.msra.mxu0 0
      %1532 = vmatprep.subr.bf16.mxu0 0
      %1533 = vmatpush1.bf16.msra.mxu0 0
      %1534 = vmatprep.subr.bf16.mxu0 0
      %1535 = vmatpush1.bf16.msra.mxu0 0
      %1536 = vmatprep.subr.bf16.mxu0 0
      %1537 = vmatpush1.bf16.msra.mxu0 0
      %1538 = vmatprep.subr.bf16.mxu0 0
      %1539 = vmatpush1.bf16.msra.mxu0 0
      %1540 = vmatprep.subr.bf16.mxu0 0
      %1541 = vmatpush1.bf16.msra.mxu0 0
      %1542 = vmatprep.subr.bf16.mxu0 %v1068
      %1543 = vmatpush1.bf16.msra.mxu0 %v1067
      %1544 = vmatprep.subr.bf16.mxu0 %v1057
      %1545 = vmatpush1.bf16.msra.mxu0 %v1056
      %1546 = vmatprep.subr.bf16.mxu0 0
      %1547 = vmatpush2.bf16.msra.mxu0 0
      %1548 = vmatprep.subr.bf16.mxu0 0
      %1549 = vmatpush2.bf16.msra.mxu0 0
      %1550 = vmatprep.subr.bf16.mxu0 0
      %1551 = vmatpush2.bf16.msra.mxu0 0
      %1552 = vmatprep.subr.bf16.mxu0 0
      %1553 = vmatpush2.bf16.msra.mxu0 0
      %1554 = vmatprep.subr.bf16.mxu0 0
      %1555 = vmatpush2.bf16.msra.mxu0 0
      %1556 = vmatprep.subr.bf16.mxu0 0
      %1557 = vmatpush2.bf16.msra.mxu0 0
      %1558 = vmatprep.subr.bf16.mxu0 0
      %1559 = vmatpush2.bf16.msra.mxu0 0
      %1560 = vmatprep.subr.bf16.mxu0 0
      %1561 = vmatpush2.bf16.msra.mxu0 0
      %1562 = vmatprep.mubr.bf16.mxu0 0
      %1563 = vmatmul.mubr.bf16.gmra.mxu0 %v1097
      %v1564 = vpop.f32.mrf.mxu0
      %v1565 = vadd.f32 %v948, %v1564
      %v1566 = vpop.f32.mrf.mxu0
      %v1567 = vadd.f32 %v952, %v1566
      %v1568 = vpop.f32.mrf.mxu0
      %v1569 = vadd.f32 %v948, %v1568
      %v1570 = vpop.f32.mrf.mxu0
      %v1571 = vadd.f32 %v952, %v1570
      %1572 = vmatprep.mubr.bf16.mxu0 0
      %1573 = vmatmul.mubr.bf16.gmra.mxu0 %v1100
      %v1574 = vpop.f32.mrf.mxu0
      %v1575 = vadd.f32 %v948, %v1574
      %v1576 = vpop.f32.mrf.mxu0
      %v1577 = vadd.f32 %v952, %v1576
      %v1578 = vpop.f32.mrf.mxu0
      %v1579 = vadd.f32 %v948, %v1578
      %v1580 = vpop.f32.mrf.mxu0
      %v1581 = vadd.f32 %v952, %v1580
      %1582 = vmatprep.mubr.bf16.mxu0 0
      %1583 = vmatmul.mubr.bf16.gmra.mxu0 %v1103
      %v1584 = vpop.f32.mrf.mxu0
      %v1585 = vadd.f32 %v948, %v1584
      %v1586 = vpop.f32.mrf.mxu0
      %v1587 = vadd.f32 %v952, %v1586
      %v1588 = vpop.f32.mrf.mxu0
      %v1589 = vadd.f32 %v948, %v1588
      %v1590 = vpop.f32.mrf.mxu0
      %v1591 = vadd.f32 %v952, %v1590
      %1592 = vmatprep.mubr.bf16.mxu0 0
      %1593 = vmatmul.mubr.bf16.gmra.mxu0 %v1106
      %v1594 = vpop.f32.mrf.mxu0
      %v1595 = vadd.f32 %v948, %v1594
      %v1596 = vpop.f32.mrf.mxu0
      %v1597 = vadd.f32 %v952, %v1596
      %v1598 = vpop.f32.mrf.mxu0
      %v1599 = vadd.f32 %v948, %v1598
      %v1600 = vpop.f32.mrf.mxu0
      %v1601 = vadd.f32 %v952, %v1600
      %1602 = vmatprep.mubr.bf16.mxu0 0
      %1603 = vmatmul.mubr.bf16.gmra.mxu0 %v1109
      %v1604 = vpop.f32.mrf.mxu0
      %v1605 = vadd.f32 %v948, %v1604
      %v1606 = vpop.f32.mrf.mxu0
      %v1607 = vadd.f32 %v952, %v1606
      %v1608 = vpop.f32.mrf.mxu0
      %v1609 = vadd.f32 %v948, %v1608
      %v1610 = vpop.f32.mrf.mxu0
      %v1611 = vadd.f32 %v952, %v1610
      %1612 = vmatprep.mubr.bf16.mxu0 0
      %1613 = vmatmul.mubr.bf16.gmra.mxu0 %v1112
      %v1614 = vpop.f32.mrf.mxu0
      %v1615 = vadd.f32 %v948, %v1614
      %v1616 = vpop.f32.mrf.mxu0
      %v1617 = vadd.f32 %v952, %v1616
      %v1618 = vpop.f32.mrf.mxu0
      %v1619 = vadd.f32 %v948, %v1618
      %v1620 = vpop.f32.mrf.mxu0
      %v1621 = vadd.f32 %v952, %v1620
      %1622 = vmatprep.mubr.bf16.mxu0 0
      %1623 = vmatmul.mubr.bf16.gmra.mxu0 %v1115
      %v1624 = vpop.f32.mrf.mxu0
      %v1625 = vadd.f32 %v948, %v1624
      %v1626 = vpop.f32.mrf.mxu0
      %v1627 = vadd.f32 %v952, %v1626
      %v1628 = vpop.f32.mrf.mxu0
      %v1629 = vadd.f32 %v948, %v1628
      %v1630 = vpop.f32.mrf.mxu0
      %v1631 = vadd.f32 %v952, %v1630
      %1632 = vmatprep.mubr.bf16.mxu0 0
      %1633 = vmatmul.mubr.bf16.gmra.mxu0 %v1118
      %v1634 = vpop.f32.mrf.mxu0
      %v1635 = vadd.f32 %v948, %v1634
      %v1636 = vpop.f32.mrf.mxu0
      %v1637 = vadd.f32 %v952, %v1636
      %v1638 = vpop.f32.mrf.mxu0
      %v1639 = vadd.f32 %v948, %v1638
      %v1640 = vpop.f32.mrf.mxu0
      %v1641 = vadd.f32 %v952, %v1640
      %1642 = vmatprep.mubr.bf16.mxu0 0
      %1643 = vmatmul.mubr.bf16.gmra.mxu0 %v1121
      %v1644 = vpop.f32.mrf.mxu0
      %v1645 = vadd.f32 %v948, %v1644
      %v1646 = vpop.f32.mrf.mxu0
      %v1647 = vadd.f32 %v952, %v1646
      %v1648 = vpop.f32.mrf.mxu0
      %v1649 = vadd.f32 %v948, %v1648
      %v1650 = vpop.f32.mrf.mxu0
      %v1651 = vadd.f32 %v952, %v1650
      %1652 = vmatprep.mubr.bf16.mxu0 0
      %1653 = vmatmul.mubr.bf16.gmra.mxu0 %v1124
      %v1654 = vpop.f32.mrf.mxu0
      %v1655 = vadd.f32 %v948, %v1654
      %v1656 = vpop.f32.mrf.mxu0
      %v1657 = vadd.f32 %v952, %v1656
      %v1658 = vpop.f32.mrf.mxu0
      %v1659 = vadd.f32 %v948, %v1658
      %v1660 = vpop.f32.mrf.mxu0
      %v1661 = vadd.f32 %v952, %v1660
      %1662 = vmatprep.mubr.bf16.mxu0 0
      %1663 = vmatmul.mubr.bf16.gmra.mxu0 %v1127
      %v1664 = vpop.f32.mrf.mxu0
      %v1665 = vadd.f32 %v948, %v1664
      %v1666 = vpop.f32.mrf.mxu0
      %v1667 = vadd.f32 %v952, %v1666
      %v1668 = vpop.f32.mrf.mxu0
      %v1669 = vadd.f32 %v948, %v1668
      %v1670 = vpop.f32.mrf.mxu0
      %v1671 = vadd.f32 %v952, %v1670
      %1672 = vmatprep.mubr.bf16.mxu0 0
      %1673 = vmatmul.mubr.bf16.gmra.mxu0 %v1130
      %v1674 = vpop.f32.mrf.mxu0
      %v1675 = vadd.f32 %v948, %v1674
      %v1676 = vpop.f32.mrf.mxu0
      %v1677 = vadd.f32 %v952, %v1676
      %v1678 = vpop.f32.mrf.mxu0
      %v1679 = vadd.f32 %v948, %v1678
      %v1680 = vpop.f32.mrf.mxu0
      %v1681 = vadd.f32 %v952, %v1680
      %1682 = vmatprep.mubr.bf16.mxu0 0
      %1683 = vmatmul.mubr.bf16.gmra.mxu0 %v1133
      %v1684 = vpop.f32.mrf.mxu0
      %v1685 = vadd.f32 %v948, %v1684
      %v1686 = vpop.f32.mrf.mxu0
      %v1687 = vadd.f32 %v952, %v1686
      %v1688 = vpop.f32.mrf.mxu0
      %v1689 = vadd.f32 %v948, %v1688
      %v1690 = vpop.f32.mrf.mxu0
      %v1691 = vadd.f32 %v952, %v1690
      %1692 = vmatprep.mubr.bf16.mxu0 0
      %1693 = vmatmul.mubr.bf16.gmra.mxu0 %v1136
      %v1694 = vpop.f32.mrf.mxu0
      %v1695 = vadd.f32 %v948, %v1694
      %v1696 = vpop.f32.mrf.mxu0
      %v1697 = vadd.f32 %v952, %v1696
      %v1698 = vpop.f32.mrf.mxu0
      %v1699 = vadd.f32 %v948, %v1698
      %v1700 = vpop.f32.mrf.mxu0
      %v1701 = vadd.f32 %v952, %v1700
      %1702 = vmatprep.mubr.bf16.mxu0 0
      %1703 = vmatmul.mubr.bf16.gmra.mxu0 %v1139
      %v1704 = vpop.f32.mrf.mxu0
      %v1705 = vadd.f32 %v948, %v1704
      %v1706 = vpop.f32.mrf.mxu0
      %v1707 = vadd.f32 %v952, %v1706
      %v1708 = vpop.f32.mrf.mxu0
      %v1709 = vadd.f32 %v948, %v1708
      %v1710 = vpop.f32.mrf.mxu0
      %v1711 = vadd.f32 %v952, %v1710
      %1712 = vmatprep.mubr.bf16.mxu0 0
      %1713 = vmatmul.mubr.bf16.gmra.mxu0 %v1142
      %v1714 = vpop.f32.mrf.mxu0
      %v1715 = vadd.f32 %v948, %v1714
      %v1716 = vpop.f32.mrf.mxu0
      %v1717 = vadd.f32 %v952, %v1716
      %v1718 = vpop.f32.mrf.mxu0
      %v1719 = vadd.f32 %v948, %v1718
      %v1720 = vpop.f32.mrf.mxu0
      %v1721 = vadd.f32 %v952, %v1720
      %1722 = vdwg.mxu0
      %1723 = vmatprep.subr.bf16.mxu0 0
      %1724 = vmatpush1.bf16.msra.mxu0 0
      %1725 = vmatprep.subr.bf16.mxu0 0
      %1726 = vmatpush1.bf16.msra.mxu0 0
      %1727 = vmatprep.subr.bf16.mxu0 0
      %1728 = vmatpush1.bf16.msra.mxu0 0
      %1729 = vmatprep.subr.bf16.mxu0 0
      %1730 = vmatpush1.bf16.msra.mxu0 0
      %1731 = vmatprep.subr.bf16.mxu0 0
      %1732 = vmatpush1.bf16.msra.mxu0 0
      %1733 = vmatprep.subr.bf16.mxu0 0
      %1734 = vmatpush1.bf16.msra.mxu0 0
      %1735 = vmatprep.subr.bf16.mxu0 %v1070
      %1736 = vmatpush1.bf16.msra.mxu0 %v1069
      %1737 = vmatprep.subr.bf16.mxu0 %v1059
      %1738 = vmatpush1.bf16.msra.mxu0 %v1058
      %1739 = vmatprep.subr.bf16.mxu0 0
      %1740 = vmatpush2.bf16.msra.mxu0 0
      %1741 = vmatprep.subr.bf16.mxu0 0
      %1742 = vmatpush2.bf16.msra.mxu0 0
      %1743 = vmatprep.subr.bf16.mxu0 0
      %1744 = vmatpush2.bf16.msra.mxu0 0
      %1745 = vmatprep.subr.bf16.mxu0 0
      %1746 = vmatpush2.bf16.msra.mxu0 0
      %1747 = vmatprep.subr.bf16.mxu0 0
      %1748 = vmatpush2.bf16.msra.mxu0 0
      %1749 = vmatprep.subr.bf16.mxu0 0
      %1750 = vmatpush2.bf16.msra.mxu0 0
      %1751 = vmatprep.subr.bf16.mxu0 0
      %1752 = vmatpush2.bf16.msra.mxu0 0
      %1753 = vmatprep.subr.bf16.mxu0 0
      %1754 = vmatpush2.bf16.msra.mxu0 0
      %1755 = vmatprep.mubr.bf16.mxu0 0
      %1756 = vmatmul.mubr.bf16.gmra.mxu0 %v1097
      %v1757 = vpop.f32.mrf.mxu0
      %v1758 = vadd.f32 %v956, %v1757
      %v1759 = vpop.f32.mrf.mxu0
      %v1760 = vadd.f32 %v960, %v1759
      %v1761 = vpop.f32.mrf.mxu0
      %v1762 = vadd.f32 %v956, %v1761
      %v1763 = vpop.f32.mrf.mxu0
      %v1764 = vadd.f32 %v960, %v1763
      %1765 = vmatprep.mubr.bf16.mxu0 0
      %1766 = vmatmul.mubr.bf16.gmra.mxu0 %v1100
      %v1767 = vpop.f32.mrf.mxu0
      %v1768 = vadd.f32 %v956, %v1767
      %v1769 = vpop.f32.mrf.mxu0
      %v1770 = vadd.f32 %v960, %v1769
      %v1771 = vpop.f32.mrf.mxu0
      %v1772 = vadd.f32 %v956, %v1771
      %v1773 = vpop.f32.mrf.mxu0
      %v1774 = vadd.f32 %v960, %v1773
      %1775 = vmatprep.mubr.bf16.mxu0 0
      %1776 = vmatmul.mubr.bf16.gmra.mxu0 %v1103
      %v1777 = vpop.f32.mrf.mxu0
      %v1778 = vadd.f32 %v956, %v1777
      %v1779 = vpop.f32.mrf.mxu0
      %v1780 = vadd.f32 %v960, %v1779
      %v1781 = vpop.f32.mrf.mxu0
      %v1782 = vadd.f32 %v956, %v1781
      %v1783 = vpop.f32.mrf.mxu0
      %v1784 = vadd.f32 %v960, %v1783
      %1785 = vmatprep.mubr.bf16.mxu0 0
      %1786 = vmatmul.mubr.bf16.gmra.mxu0 %v1106
      %v1787 = vpop.f32.mrf.mxu0
      %v1788 = vadd.f32 %v956, %v1787
      %v1789 = vpop.f32.mrf.mxu0
      %v1790 = vadd.f32 %v960, %v1789
      %v1791 = vpop.f32.mrf.mxu0
      %v1792 = vadd.f32 %v956, %v1791
      %v1793 = vpop.f32.mrf.mxu0
      %v1794 = vadd.f32 %v960, %v1793
      %1795 = vmatprep.mubr.bf16.mxu0 0
      %1796 = vmatmul.mubr.bf16.gmra.mxu0 %v1109
      %v1797 = vpop.f32.mrf.mxu0
      %v1798 = vadd.f32 %v956, %v1797
      %v1799 = vpop.f32.mrf.mxu0
      %v1800 = vadd.f32 %v960, %v1799
      %v1801 = vpop.f32.mrf.mxu0
      %v1802 = vadd.f32 %v956, %v1801
      %v1803 = vpop.f32.mrf.mxu0
      %v1804 = vadd.f32 %v960, %v1803
      %1805 = vmatprep.mubr.bf16.mxu0 0
      %1806 = vmatmul.mubr.bf16.gmra.mxu0 %v1112
      %v1807 = vpop.f32.mrf.mxu0
      %v1808 = vadd.f32 %v956, %v1807
      %v1809 = vpop.f32.mrf.mxu0
      %v1810 = vadd.f32 %v960, %v1809
      %v1811 = vpop.f32.mrf.mxu0
      %v1812 = vadd.f32 %v956, %v1811
      %v1813 = vpop.f32.mrf.mxu0
      %v1814 = vadd.f32 %v960, %v1813
      %1815 = vmatprep.mubr.bf16.mxu0 0
      %1816 = vmatmul.mubr.bf16.gmra.mxu0 %v1115
      %v1817 = vpop.f32.mrf.mxu0
      %v1818 = vadd.f32 %v956, %v1817
      %v1819 = vpop.f32.mrf.mxu0
      %v1820 = vadd.f32 %v960, %v1819
      %v1821 = vpop.f32.mrf.mxu0
      %v1822 = vadd.f32 %v956, %v1821
      %v1823 = vpop.f32.mrf.mxu0
      %v1824 = vadd.f32 %v960, %v1823
      %1825 = vmatprep.mubr.bf16.mxu0 0
      %1826 = vmatmul.mubr.bf16.gmra.mxu0 %v1118
      %v1827 = vpop.f32.mrf.mxu0
      %v1828 = vadd.f32 %v956, %v1827
      %v1829 = vpop.f32.mrf.mxu0
      %v1830 = vadd.f32 %v960, %v1829
      %v1831 = vpop.f32.mrf.mxu0
      %v1832 = vadd.f32 %v956, %v1831
      %v1833 = vpop.f32.mrf.mxu0
      %v1834 = vadd.f32 %v960, %v1833
      %1835 = vmatprep.mubr.bf16.mxu0 0
      %1836 = vmatmul.mubr.bf16.gmra.mxu0 %v1121
      %v1837 = vpop.f32.mrf.mxu0
      %v1838 = vadd.f32 %v956, %v1837
      %v1839 = vpop.f32.mrf.mxu0
      %v1840 = vadd.f32 %v960, %v1839
      %v1841 = vpop.f32.mrf.mxu0
      %v1842 = vadd.f32 %v956, %v1841
      %v1843 = vpop.f32.mrf.mxu0
      %v1844 = vadd.f32 %v960, %v1843
      %1845 = vmatprep.mubr.bf16.mxu0 0
      %1846 = vmatmul.mubr.bf16.gmra.mxu0 %v1124
      %v1847 = vpop.f32.mrf.mxu0
      %v1848 = vadd.f32 %v956, %v1847
      %v1849 = vpop.f32.mrf.mxu0
      %v1850 = vadd.f32 %v960, %v1849
      %v1851 = vpop.f32.mrf.mxu0
      %v1852 = vadd.f32 %v956, %v1851
      %v1853 = vpop.f32.mrf.mxu0
      %v1854 = vadd.f32 %v960, %v1853
      %1855 = vmatprep.mubr.bf16.mxu0 0
      %1856 = vmatmul.mubr.bf16.gmra.mxu0 %v1127
      %v1857 = vpop.f32.mrf.mxu0
      %v1858 = vadd.f32 %v956, %v1857
      %v1859 = vpop.f32.mrf.mxu0
      %v1860 = vadd.f32 %v960, %v1859
      %v1861 = vpop.f32.mrf.mxu0
      %v1862 = vadd.f32 %v956, %v1861
      %v1863 = vpop.f32.mrf.mxu0
      %v1864 = vadd.f32 %v960, %v1863
      %1865 = vmatprep.mubr.bf16.mxu0 0
      %1866 = vmatmul.mubr.bf16.gmra.mxu0 %v1130
      %v1867 = vpop.f32.mrf.mxu0
      %v1868 = vadd.f32 %v956, %v1867
      %v1869 = vpop.f32.mrf.mxu0
      %v1870 = vadd.f32 %v960, %v1869
      %v1871 = vpop.f32.mrf.mxu0
      %v1872 = vadd.f32 %v956, %v1871
      %v1873 = vpop.f32.mrf.mxu0
      %v1874 = vadd.f32 %v960, %v1873
      %1875 = vmatprep.mubr.bf16.mxu0 0
      %1876 = vmatmul.mubr.bf16.gmra.mxu0 %v1133
      %v1877 = vpop.f32.mrf.mxu0
      %v1878 = vadd.f32 %v956, %v1877
      %v1879 = vpop.f32.mrf.mxu0
      %v1880 = vadd.f32 %v960, %v1879
      %v1881 = vpop.f32.mrf.mxu0
      %v1882 = vadd.f32 %v956, %v1881
      %v1883 = vpop.f32.mrf.mxu0
      %v1884 = vadd.f32 %v960, %v1883
      %1885 = vmatprep.mubr.bf16.mxu0 0
      %1886 = vmatmul.mubr.bf16.gmra.mxu0 %v1136
      %v1887 = vpop.f32.mrf.mxu0
      %v1888 = vadd.f32 %v956, %v1887
      %v1889 = vpop.f32.mrf.mxu0
      %v1890 = vadd.f32 %v960, %v1889
      %v1891 = vpop.f32.mrf.mxu0
      %v1892 = vadd.f32 %v956, %v1891
      %v1893 = vpop.f32.mrf.mxu0
      %v1894 = vadd.f32 %v960, %v1893
      %1895 = vmatprep.mubr.bf16.mxu0 0
      %1896 = vmatmul.mubr.bf16.gmra.mxu0 %v1139
      %v1897 = vpop.f32.mrf.mxu0
      %v1898 = vadd.f32 %v956, %v1897
      %v1899 = vpop.f32.mrf.mxu0
      %v1900 = vadd.f32 %v960, %v1899
      %v1901 = vpop.f32.mrf.mxu0
      %v1902 = vadd.f32 %v956, %v1901
      %v1903 = vpop.f32.mrf.mxu0
      %v1904 = vadd.f32 %v960, %v1903
      %1905 = vmatprep.mubr.bf16.mxu0 0
      %1906 = vmatmul.mubr.bf16.gmra.mxu0 %v1142
      %v1907 = vpop.f32.mrf.mxu0
      %v1908 = vadd.f32 %v956, %v1907
      %v1909 = vpop.f32.mrf.mxu0
      %v1910 = vadd.f32 %v960, %v1909
      %v1911 = vpop.f32.mrf.mxu0
      %v1912 = vadd.f32 %v956, %v1911
      %v1913 = vpop.f32.mrf.mxu0
      %v1914 = vadd.f32 %v960, %v1913
      %1915 = vdwg.mxu0
      %1916 = vmatprep.subr.bf16.mxu0 0
      %1917 = vmatpush1.bf16.msra.mxu0 0
      %1918 = vmatprep.subr.bf16.mxu0 0
      %1919 = vmatpush1.bf16.msra.mxu0 0
      %1920 = vmatprep.subr.bf16.mxu0 0
      %1921 = vmatpush1.bf16.msra.mxu0 0
      %1922 = vmatprep.subr.bf16.mxu0 0
      %1923 = vmatpush1.bf16.msra.mxu0 0
      %1924 = vmatprep.subr.bf16.mxu0 0
      %1925 = vmatpush1.bf16.msra.mxu0 0
      %1926 = vmatprep.subr.bf16.mxu0 0
      %1927 = vmatpush1.bf16.msra.mxu0 0
      %1928 = vmatprep.subr.bf16.mxu0 %v1072
      %1929 = vmatpush1.bf16.msra.mxu0 %v1071
      %1930 = vmatprep.subr.bf16.mxu0 %v1061
      %1931 = vmatpush1.bf16.msra.mxu0 %v1060
      %1932 = vmatprep.subr.bf16.mxu0 0
      %1933 = vmatpush2.bf16.msra.mxu0 0
      %1934 = vmatprep.subr.bf16.mxu0 0
      %1935 = vmatpush2.bf16.msra.mxu0 0
      %1936 = vmatprep.subr.bf16.mxu0 0
      %1937 = vmatpush2.bf16.msra.mxu0 0
      %1938 = vmatprep.subr.bf16.mxu0 0
      %1939 = vmatpush2.bf16.msra.mxu0 0
      %1940 = vmatprep.subr.bf16.mxu0 0
      %1941 = vmatpush2.bf16.msra.mxu0 0
      %1942 = vmatprep.subr.bf16.mxu0 0
      %1943 = vmatpush2.bf16.msra.mxu0 0
      %1944 = vmatprep.subr.bf16.mxu0 0
      %1945 = vmatpush2.bf16.msra.mxu0 0
      %1946 = vmatprep.subr.bf16.mxu0 0
      %1947 = vmatpush2.bf16.msra.mxu0 0
      %1948 = vmatprep.mubr.bf16.mxu0 0
      %1949 = vmatmul.mubr.bf16.gmra.mxu0 %v1097
      %v1950 = vpop.f32.mrf.mxu0
      %v1951 = vadd.f32 %v964, %v1950
      %v1952 = vpop.f32.mrf.mxu0
      %v1953 = vadd.f32 %v968, %v1952
      %v1954 = vpop.f32.mrf.mxu0
      %v1955 = vadd.f32 %v964, %v1954
      %v1956 = vpop.f32.mrf.mxu0
      %v1957 = vadd.f32 %v968, %v1956
      %1958 = vmatprep.mubr.bf16.mxu0 0
      %1959 = vmatmul.mubr.bf16.gmra.mxu0 %v1100
      %v1960 = vpop.f32.mrf.mxu0
      %v1961 = vadd.f32 %v964, %v1960
      %v1962 = vpop.f32.mrf.mxu0
      %v1963 = vadd.f32 %v968, %v1962
      %v1964 = vpop.f32.mrf.mxu0
      %v1965 = vadd.f32 %v964, %v1964
      %v1966 = vpop.f32.mrf.mxu0
      %v1967 = vadd.f32 %v968, %v1966
      %1968 = vmatprep.mubr.bf16.mxu0 0
      %1969 = vmatmul.mubr.bf16.gmra.mxu0 %v1103
      %v1970 = vpop.f32.mrf.mxu0
      %v1971 = vadd.f32 %v964, %v1970
      %v1972 = vpop.f32.mrf.mxu0
      %v1973 = vadd.f32 %v968, %v1972
      %v1974 = vpop.f32.mrf.mxu0
      %v1975 = vadd.f32 %v964, %v1974
      %v1976 = vpop.f32.mrf.mxu0
      %v1977 = vadd.f32 %v968, %v1976
      %1978 = vmatprep.mubr.bf16.mxu0 0
      %1979 = vmatmul.mubr.bf16.gmra.mxu0 %v1106
      %v1980 = vpop.f32.mrf.mxu0
      %v1981 = vadd.f32 %v964, %v1980
      %v1982 = vpop.f32.mrf.mxu0
      %v1983 = vadd.f32 %v968, %v1982
      %v1984 = vpop.f32.mrf.mxu0
      %v1985 = vadd.f32 %v964, %v1984
      %v1986 = vpop.f32.mrf.mxu0
      %v1987 = vadd.f32 %v968, %v1986
      %1988 = vmatprep.mubr.bf16.mxu0 0
      %1989 = vmatmul.mubr.bf16.gmra.mxu0 %v1109
      %v1990 = vpop.f32.mrf.mxu0
      %v1991 = vadd.f32 %v964, %v1990
      %v1992 = vpop.f32.mrf.mxu0
      %v1993 = vadd.f32 %v968, %v1992
      %v1994 = vpop.f32.mrf.mxu0
      %v1995 = vadd.f32 %v964, %v1994
      %v1996 = vpop.f32.mrf.mxu0
      %v1997 = vadd.f32 %v968, %v1996
      %1998 = vmatprep.mubr.bf16.mxu0 0
      %1999 = vmatmul.mubr.bf16.gmra.mxu0 %v1112
      %v2000 = vpop.f32.mrf.mxu0
      %v2001 = vadd.f32 %v964, %v2000
      %v2002 = vpop.f32.mrf.mxu0
      %v2003 = vadd.f32 %v968, %v2002
      %v2004 = vpop.f32.mrf.mxu0
      %v2005 = vadd.f32 %v964, %v2004
      %v2006 = vpop.f32.mrf.mxu0
      %v2007 = vadd.f32 %v968, %v2006
      %2008 = vmatprep.mubr.bf16.mxu0 0
      %2009 = vmatmul.mubr.bf16.gmra.mxu0 %v1115
      %v2010 = vpop.f32.mrf.mxu0
      %v2011 = vadd.f32 %v964, %v2010
      %v2012 = vpop.f32.mrf.mxu0
      %v2013 = vadd.f32 %v968, %v2012
      %v2014 = vpop.f32.mrf.mxu0
      %v2015 = vadd.f32 %v964, %v2014
      %v2016 = vpop.f32.mrf.mxu0
      %v2017 = vadd.f32 %v968, %v2016
      %2018 = vmatprep.mubr.bf16.mxu0 0
      %2019 = vmatmul.mubr.bf16.gmra.mxu0 %v1118
      %v2020 = vpop.f32.mrf.mxu0
      %v2021 = vadd.f32 %v964, %v2020
      %v2022 = vpop.f32.mrf.mxu0
      %v2023 = vadd.f32 %v968, %v2022
      %v2024 = vpop.f32.mrf.mxu0
      %v2025 = vadd.f32 %v964, %v2024
      %v2026 = vpop.f32.mrf.mxu0
      %v2027 = vadd.f32 %v968, %v2026
      %2028 = vmatprep.mubr.bf16.mxu0 0
      %2029 = vmatmul.mubr.bf16.gmra.mxu0 %v1121
      %v2030 = vpop.f32.mrf.mxu0
      %v2031 = vadd.f32 %v964, %v2030
      %v2032 = vpop.f32.mrf.mxu0
      %v2033 = vadd.f32 %v968, %v2032
      %v2034 = vpop.f32.mrf.mxu0
      %v2035 = vadd.f32 %v964, %v2034
      %v2036 = vpop.f32.mrf.mxu0
      %v2037 = vadd.f32 %v968, %v2036
      %2038 = vmatprep.mubr.bf16.mxu0 0
      %2039 = vmatmul.mubr.bf16.gmra.mxu0 %v1124
      %v2040 = vpop.f32.mrf.mxu0
      %v2041 = vadd.f32 %v964, %v2040
      %v2042 = vpop.f32.mrf.mxu0
      %v2043 = vadd.f32 %v968, %v2042
      %v2044 = vpop.f32.mrf.mxu0
      %v2045 = vadd.f32 %v964, %v2044
      %v2046 = vpop.f32.mrf.mxu0
      %v2047 = vadd.f32 %v968, %v2046
      %2048 = vmatprep.mubr.bf16.mxu0 0
      %2049 = vmatmul.mubr.bf16.gmra.mxu0 %v1127
      %v2050 = vpop.f32.mrf.mxu0
      %v2051 = vadd.f32 %v964, %v2050
      %v2052 = vpop.f32.mrf.mxu0
      %v2053 = vadd.f32 %v968, %v2052
      %v2054 = vpop.f32.mrf.mxu0
      %v2055 = vadd.f32 %v964, %v2054
      %v2056 = vpop.f32.mrf.mxu0
      %v2057 = vadd.f32 %v968, %v2056
      %2058 = vmatprep.mubr.bf16.mxu0 0
      %2059 = vmatmul.mubr.bf16.gmra.mxu0 %v1130
      %v2060 = vpop.f32.mrf.mxu0
      %v2061 = vadd.f32 %v964, %v2060
      %v2062 = vpop.f32.mrf.mxu0
      %v2063 = vadd.f32 %v968, %v2062
      %v2064 = vpop.f32.mrf.mxu0
      %v2065 = vadd.f32 %v964, %v2064
      %v2066 = vpop.f32.mrf.mxu0
      %v2067 = vadd.f32 %v968, %v2066
      %2068 = vmatprep.mubr.bf16.mxu0 0
      %2069 = vmatmul.mubr.bf16.gmra.mxu0 %v1133
      %v2070 = vpop.f32.mrf.mxu0
      %v2071 = vadd.f32 %v964, %v2070
      %v2072 = vpop.f32.mrf.mxu0
      %v2073 = vadd.f32 %v968, %v2072
      %v2074 = vpop.f32.mrf.mxu0
      %v2075 = vadd.f32 %v964, %v2074
      %v2076 = vpop.f32.mrf.mxu0
      %v2077 = vadd.f32 %v968, %v2076
      %2078 = vmatprep.mubr.bf16.mxu0 0
      %2079 = vmatmul.mubr.bf16.gmra.mxu0 %v1136
      %v2080 = vpop.f32.mrf.mxu0
      %v2081 = vadd.f32 %v964, %v2080
      %v2082 = vpop.f32.mrf.mxu0
      %v2083 = vadd.f32 %v968, %v2082
      %v2084 = vpop.f32.mrf.mxu0
      %v2085 = vadd.f32 %v964, %v2084
      %v2086 = vpop.f32.mrf.mxu0
      %v2087 = vadd.f32 %v968, %v2086
      %2088 = vmatprep.mubr.bf16.mxu0 0
      %2089 = vmatmul.mubr.bf16.gmra.mxu0 %v1139
      %v2090 = vpop.f32.mrf.mxu0
      %v2091 = vadd.f32 %v964, %v2090
      %v2092 = vpop.f32.mrf.mxu0
      %v2093 = vadd.f32 %v968, %v2092
      %v2094 = vpop.f32.mrf.mxu0
      %v2095 = vadd.f32 %v964, %v2094
      %v2096 = vpop.f32.mrf.mxu0
      %v2097 = vadd.f32 %v968, %v2096
      %2098 = vmatprep.mubr.bf16.mxu0 0
      %2099 = vmatmul.mubr.bf16.gmra.mxu0 %v1142
      %v2100 = vpop.f32.mrf.mxu0
      %v2101 = vadd.f32 %v964, %v2100
      %v2102 = vpop.f32.mrf.mxu0
      %v2103 = vadd.f32 %v968, %v2102
      %v2104 = vpop.f32.mrf.mxu0
      %v2105 = vadd.f32 %v964, %v2104
      %v2106 = vpop.f32.mrf.mxu0
      %v2107 = vadd.f32 %v968, %v2106
      %2108 = vdwg.mxu0
      %2109 = vmatprep.subr.bf16.mxu0 0
      %2110 = vmatpush1.bf16.msra.mxu0 0
      %2111 = vmatprep.subr.bf16.mxu0 0
      %2112 = vmatpush1.bf16.msra.mxu0 0
      %2113 = vmatprep.subr.bf16.mxu0 0
      %2114 = vmatpush1.bf16.msra.mxu0 0
      %2115 = vmatprep.subr.bf16.mxu0 0
      %2116 = vmatpush1.bf16.msra.mxu0 0
      %2117 = vmatprep.subr.bf16.mxu0 0
      %2118 = vmatpush1.bf16.msra.mxu0 0
      %2119 = vmatprep.subr.bf16.mxu0 0
      %2120 = vmatpush1.bf16.msra.mxu0 0
      %2121 = vmatprep.subr.bf16.mxu0 0
      %2122 = vmatpush1.bf16.msra.mxu0 %v1073
      %2123 = vmatprep.subr.bf16.mxu0 0
      %2124 = vmatpush1.bf16.msra.mxu0 %v1062
      %2125 = vmatprep.subr.bf16.mxu0 0
      %2126 = vmatpush2.bf16.msra.mxu0 0
      %2127 = vmatprep.subr.bf16.mxu0 0
      %2128 = vmatpush2.bf16.msra.mxu0 0
      %2129 = vmatprep.subr.bf16.mxu0 0
      %2130 = vmatpush2.bf16.msra.mxu0 0
      %2131 = vmatprep.subr.bf16.mxu0 0
      %2132 = vmatpush2.bf16.msra.mxu0 0
      %2133 = vmatprep.subr.bf16.mxu0 0
      %2134 = vmatpush2.bf16.msra.mxu0 0
      %2135 = vmatprep.subr.bf16.mxu0 0
      %2136 = vmatpush2.bf16.msra.mxu0 0
      %2137 = vmatprep.subr.bf16.mxu0 0
      %2138 = vmatpush2.bf16.msra.mxu0 0
      %2139 = vmatprep.subr.bf16.mxu0 0
      %2140 = vmatpush2.bf16.msra.mxu0 0
      %2141 = vmatprep.mubr.bf16.mxu0 0
      %2142 = vmatmul.mubr.bf16.gmra.mxu0 %v1097
      %v2143 = vpop.f32.mrf.mxu0
      %v2144 = vadd.f32 %v972, %v2143
      %v2145 = vpop.f32.mrf.mxu0
      %v2146 = vpop.f32.mrf.mxu0
      %v2147 = vadd.f32 %v972, %v2146
      %v2148 = vpop.f32.mrf.mxu0
      %2149 = vmatprep.mubr.bf16.mxu0 0
      %2150 = vmatmul.mubr.bf16.gmra.mxu0 %v1100
      %v2151 = vpop.f32.mrf.mxu0
      %v2152 = vadd.f32 %v972, %v2151
      %v2153 = vpop.f32.mrf.mxu0
      %v2154 = vpop.f32.mrf.mxu0
      %v2155 = vadd.f32 %v972, %v2154
      %v2156 = vpop.f32.mrf.mxu0
      %2157 = vmatprep.mubr.bf16.mxu0 0
      %2158 = vmatmul.mubr.bf16.gmra.mxu0 %v1103
      %v2159 = vpop.f32.mrf.mxu0
      %v2160 = vadd.f32 %v972, %v2159
      %v2161 = vpop.f32.mrf.mxu0
      %v2162 = vpop.f32.mrf.mxu0
      %v2163 = vadd.f32 %v972, %v2162
      %v2164 = vpop.f32.mrf.mxu0
      %2165 = vmatprep.mubr.bf16.mxu0 0
      %2166 = vmatmul.mubr.bf16.gmra.mxu0 %v1106
      %v2167 = vpop.f32.mrf.mxu0
      %v2168 = vadd.f32 %v972, %v2167
      %v2169 = vpop.f32.mrf.mxu0
      %v2170 = vpop.f32.mrf.mxu0
      %v2171 = vadd.f32 %v972, %v2170
      %v2172 = vpop.f32.mrf.mxu0
      %2173 = vmatprep.mubr.bf16.mxu0 0
      %2174 = vmatmul.mubr.bf16.gmra.mxu0 %v1109
      %v2175 = vpop.f32.mrf.mxu0
      %v2176 = vadd.f32 %v972, %v2175
      %v2177 = vpop.f32.mrf.mxu0
      %v2178 = vpop.f32.mrf.mxu0
      %v2179 = vadd.f32 %v972, %v2178
      %v2180 = vpop.f32.mrf.mxu0
      %2181 = vmatprep.mubr.bf16.mxu0 0
      %2182 = vmatmul.mubr.bf16.gmra.mxu0 %v1112
      %v2183 = vpop.f32.mrf.mxu0
      %v2184 = vadd.f32 %v972, %v2183
      %v2185 = vpop.f32.mrf.mxu0
      %v2186 = vpop.f32.mrf.mxu0
      %v2187 = vadd.f32 %v972, %v2186
      %v2188 = vpop.f32.mrf.mxu0
      %2189 = vmatprep.mubr.bf16.mxu0 0
      %2190 = vmatmul.mubr.bf16.gmra.mxu0 %v1115
      %v2191 = vpop.f32.mrf.mxu0
      %v2192 = vadd.f32 %v972, %v2191
      %v2193 = vpop.f32.mrf.mxu0
      %v2194 = vpop.f32.mrf.mxu0
      %v2195 = vadd.f32 %v972, %v2194
      %v2196 = vpop.f32.mrf.mxu0
      %2197 = vmatprep.mubr.bf16.mxu0 0
      %2198 = vmatmul.mubr.bf16.gmra.mxu0 %v1118
      %v2199 = vpop.f32.mrf.mxu0
      %v2200 = vadd.f32 %v972, %v2199
      %v2201 = vpop.f32.mrf.mxu0
      %v2202 = vpop.f32.mrf.mxu0
      %v2203 = vadd.f32 %v972, %v2202
      %v2204 = vpop.f32.mrf.mxu0
      %2205 = vmatprep.mubr.bf16.mxu0 0
      %2206 = vmatmul.mubr.bf16.gmra.mxu0 %v1121
      %v2207 = vpop.f32.mrf.mxu0
      %v2208 = vadd.f32 %v972, %v2207
      %v2209 = vpop.f32.mrf.mxu0
      %v2210 = vpop.f32.mrf.mxu0
      %v2211 = vadd.f32 %v972, %v2210
      %v2212 = vpop.f32.mrf.mxu0
      %2213 = vmatprep.mubr.bf16.mxu0 0
      %2214 = vmatmul.mubr.bf16.gmra.mxu0 %v1124
      %v2215 = vpop.f32.mrf.mxu0
      %v2216 = vadd.f32 %v972, %v2215
      %v2217 = vpop.f32.mrf.mxu0
      %v2218 = vpop.f32.mrf.mxu0
      %v2219 = vadd.f32 %v972, %v2218
      %v2220 = vpop.f32.mrf.mxu0
      %2221 = vmatprep.mubr.bf16.mxu0 0
      %2222 = vmatmul.mubr.bf16.gmra.mxu0 %v1127
      %v2223 = vpop.f32.mrf.mxu0
      %v2224 = vadd.f32 %v972, %v2223
      %v2225 = vpop.f32.mrf.mxu0
      %v2226 = vpop.f32.mrf.mxu0
      %v2227 = vadd.f32 %v972, %v2226
      %v2228 = vpop.f32.mrf.mxu0
      %2229 = vmatprep.mubr.bf16.mxu0 0
      %2230 = vmatmul.mubr.bf16.gmra.mxu0 %v1130
      %v2231 = vpop.f32.mrf.mxu0
      %v2232 = vadd.f32 %v972, %v2231
      %v2233 = vpop.f32.mrf.mxu0
      %v2234 = vpop.f32.mrf.mxu0
      %v2235 = vadd.f32 %v972, %v2234
      %v2236 = vpop.f32.mrf.mxu0
      %2237 = vmatprep.mubr.bf16.mxu0 0
      %2238 = vmatmul.mubr.bf16.gmra.mxu0 %v1133
      %v2239 = vpop.f32.mrf.mxu0
      %v2240 = vadd.f32 %v972, %v2239
      %v2241 = vpop.f32.mrf.mxu0
      %v2242 = vpop.f32.mrf.mxu0
      %v2243 = vadd.f32 %v972, %v2242
      %v2244 = vpop.f32.mrf.mxu0
      %2245 = vmatprep.mubr.bf16.mxu0 0
      %2246 = vmatmul.mubr.bf16.gmra.mxu0 %v1136
      %v2247 = vpop.f32.mrf.mxu0
      %v2248 = vadd.f32 %v972, %v2247
      %v2249 = vpop.f32.mrf.mxu0
      %v2250 = vpop.f32.mrf.mxu0
      %v2251 = vadd.f32 %v972, %v2250
      %v2252 = vpop.f32.mrf.mxu0
      %2253 = vmatprep.mubr.bf16.mxu0 0
      %2254 = vmatmul.mubr.bf16.gmra.mxu0 %v1139
      %v2255 = vpop.f32.mrf.mxu0
      %v2256 = vadd.f32 %v972, %v2255
      %v2257 = vpop.f32.mrf.mxu0
      %v2258 = vpop.f32.mrf.mxu0
      %v2259 = vadd.f32 %v972, %v2258
      %v2260 = vpop.f32.mrf.mxu0
      %2261 = vmatprep.mubr.bf16.mxu0 0
      %2262 = vmatmul.mubr.bf16.gmra.mxu0 %v1142
      %v2263 = vpop.f32.mrf.mxu0
      %v2264 = vadd.f32 %v972, %v2263
      %v2265 = vpop.f32.mrf.mxu0
      %v2266 = vpop.f32.mrf.mxu0
      %v2267 = vadd.f32 %v972, %v2266
      %v2268 = vpop.f32.mrf.mxu0
      %2269 = vdwg.mxu0
      %v2270 = vxor.u32 %v1179, 2147483648
      %v2271 = vxor.u32 %v1181, 2147483648
      %v2272 = vxor.u32 %v1372, 2147483648
      %v2273 = vxor.u32 %v1374, 2147483648
      %v2274 = vxor.u32 %v1565, 2147483648
      %v2275 = vxor.u32 %v1567, 2147483648
      %v2276 = vxor.u32 %v1758, 2147483648
      %v2277 = vxor.u32 %v1760, 2147483648
      %v2278 = vxor.u32 %v1951, 2147483648
      %v2279 = vxor.u32 %v1953, 2147483648
      %v2280 = vxor.u32 %v2144, 2147483648
      %v2281 = vxor.u32 %v1183, 2147483648
      %v2282 = vxor.u32 %v1185, 2147483648
      %v2283 = vxor.u32 %v1376, 2147483648
      %v2284 = vxor.u32 %v1378, 2147483648
      %v2285 = vxor.u32 %v1569, 2147483648
      %v2286 = vxor.u32 %v1571, 2147483648
      %v2287 = vxor.u32 %v1762, 2147483648
      %v2288 = vxor.u32 %v1764, 2147483648
      %v2289 = vxor.u32 %v1955, 2147483648
      %v2290 = vxor.u32 %v1957, 2147483648
      %v2291 = vxor.u32 %v2147, 2147483648
      %v2292 = vxor.u32 %v1189, 2147483648
      %v2293 = vxor.u32 %v1191, 2147483648
      %v2294 = vxor.u32 %v1382, 2147483648
      %v2295 = vxor.u32 %v1384, 2147483648
      %v2296 = vxor.u32 %v1575, 2147483648
      %v2297 = vxor.u32 %v1577, 2147483648
      %v2298 = vxor.u32 %v1768, 2147483648
      %v2299 = vxor.u32 %v1770, 2147483648
      %v2300 = vxor.u32 %v1961, 2147483648
      %v2301 = vxor.u32 %v1963, 2147483648
      %v2302 = vxor.u32 %v2152, 2147483648
      %v2303 = vxor.u32 %v1193, 2147483648
      %v2304 = vxor.u32 %v1195, 2147483648
      %v2305 = vxor.u32 %v1386, 2147483648
      %v2306 = vxor.u32 %v1388, 2147483648
      %v2307 = vxor.u32 %v1579, 2147483648
      %v2308 = vxor.u32 %v1581, 2147483648
      %v2309 = vxor.u32 %v1772, 2147483648
      %v2310 = vxor.u32 %v1774, 2147483648
      %v2311 = vxor.u32 %v1965, 2147483648
      %v2312 = vxor.u32 %v1967, 2147483648
      %v2313 = vxor.u32 %v2155, 2147483648
      %v2314 = vxor.u32 %v1199, 2147483648
      %v2315 = vxor.u32 %v1201, 2147483648
      %v2316 = vxor.u32 %v1392, 2147483648
      %v2317 = vxor.u32 %v1394, 2147483648
      %v2318 = vxor.u32 %v1585, 2147483648
      %v2319 = vxor.u32 %v1587, 2147483648
      %v2320 = vxor.u32 %v1778, 2147483648
      %v2321 = vxor.u32 %v1780, 2147483648
      %v2322 = vxor.u32 %v1971, 2147483648
      %v2323 = vxor.u32 %v1973, 2147483648
      %v2324 = vxor.u32 %v2160, 2147483648
      %v2325 = vxor.u32 %v1203, 2147483648
      %v2326 = vxor.u32 %v1205, 2147483648
      %v2327 = vxor.u32 %v1396, 2147483648
      %v2328 = vxor.u32 %v1398, 2147483648
      %v2329 = vxor.u32 %v1589, 2147483648
      %v2330 = vxor.u32 %v1591, 2147483648
      %v2331 = vxor.u32 %v1782, 2147483648
      %v2332 = vxor.u32 %v1784, 2147483648
      %v2333 = vxor.u32 %v1975, 2147483648
      %v2334 = vxor.u32 %v1977, 2147483648
      %v2335 = vxor.u32 %v2163, 2147483648
      %v2336 = vxor.u32 %v1209, 2147483648
      %v2337 = vxor.u32 %v1211, 2147483648
      %v2338 = vxor.u32 %v1402, 2147483648
      %v2339 = vxor.u32 %v1404, 2147483648
      %v2340 = vxor.u32 %v1595, 2147483648
      %v2341 = vxor.u32 %v1597, 2147483648
      %v2342 = vxor.u32 %v1788, 2147483648
      %v2343 = vxor.u32 %v1790, 2147483648
      %v2344 = vxor.u32 %v1981, 2147483648
      %v2345 = vxor.u32 %v1983, 2147483648
      %v2346 = vxor.u32 %v2168, 2147483648
      %v2347 = vxor.u32 %v1213, 2147483648
      %v2348 = vxor.u32 %v1215, 2147483648
      %v2349 = vxor.u32 %v1406, 2147483648
      %v2350 = vxor.u32 %v1408, 2147483648
      %v2351 = vxor.u32 %v1599, 2147483648
      %v2352 = vxor.u32 %v1601, 2147483648
      %v2353 = vxor.u32 %v1792, 2147483648
      %v2354 = vxor.u32 %v1794, 2147483648
      %v2355 = vxor.u32 %v1985, 2147483648
      %v2356 = vxor.u32 %v1987, 2147483648
      %v2357 = vxor.u32 %v2171, 2147483648
      %v2358 = vxor.u32 %v1219, 2147483648
      %v2359 = vxor.u32 %v1221, 2147483648
      %v2360 = vxor.u32 %v1412, 2147483648
      %v2361 = vxor.u32 %v1414, 2147483648
      %v2362 = vxor.u32 %v1605, 2147483648
      %v2363 = vxor.u32 %v1607, 2147483648
      %v2364 = vxor.u32 %v1798, 2147483648
      %v2365 = vxor.u32 %v1800, 2147483648
      %v2366 = vxor.u32 %v1991, 2147483648
      %v2367 = vxor.u32 %v1993, 2147483648
      %v2368 = vxor.u32 %v2176, 2147483648
      %v2369 = vxor.u32 %v1223, 2147483648
      %v2370 = vxor.u32 %v1225, 2147483648
      %v2371 = vxor.u32 %v1416, 2147483648
      %v2372 = vxor.u32 %v1418, 2147483648
      %v2373 = vxor.u32 %v1609, 2147483648
      %v2374 = vxor.u32 %v1611, 2147483648
      %v2375 = vxor.u32 %v1802, 2147483648
      %v2376 = vxor.u32 %v1804, 2147483648
      %v2377 = vxor.u32 %v1995, 2147483648
      %v2378 = vxor.u32 %v1997, 2147483648
      %v2379 = vxor.u32 %v2179, 2147483648
      %v2380 = vxor.u32 %v1229, 2147483648
      %v2381 = vxor.u32 %v1231, 2147483648
      %v2382 = vxor.u32 %v1422, 2147483648
      %v2383 = vxor.u32 %v1424, 2147483648
      %v2384 = vxor.u32 %v1615, 2147483648
      %v2385 = vxor.u32 %v1617, 2147483648
      %v2386 = vxor.u32 %v1808, 2147483648
      %v2387 = vxor.u32 %v1810, 2147483648
      %v2388 = vxor.u32 %v2001, 2147483648
      %v2389 = vxor.u32 %v2003, 2147483648
      %v2390 = vxor.u32 %v2184, 2147483648
      %v2391 = vxor.u32 %v1233, 2147483648
      %v2392 = vxor.u32 %v1235, 2147483648
      %v2393 = vxor.u32 %v1426, 2147483648
      %v2394 = vxor.u32 %v1428, 2147483648
      %v2395 = vxor.u32 %v1619, 2147483648
      %v2396 = vxor.u32 %v1621, 2147483648
      %v2397 = vxor.u32 %v1812, 2147483648
      %v2398 = vxor.u32 %v1814, 2147483648
      %v2399 = vxor.u32 %v2005, 2147483648
      %v2400 = vxor.u32 %v2007, 2147483648
      %v2401 = vxor.u32 %v2187, 2147483648
      %v2402 = vxor.u32 %v1239, 2147483648
      %v2403 = vxor.u32 %v1241, 2147483648
      %v2404 = vxor.u32 %v1432, 2147483648
      %v2405 = vxor.u32 %v1434, 2147483648
      %v2406 = vxor.u32 %v1625, 2147483648
      %v2407 = vxor.u32 %v1627, 2147483648
      %v2408 = vxor.u32 %v1818, 2147483648
      %v2409 = vxor.u32 %v1820, 2147483648
      %v2410 = vxor.u32 %v2011, 2147483648
      %v2411 = vxor.u32 %v2013, 2147483648
      %v2412 = vxor.u32 %v2192, 2147483648
      %v2413 = vxor.u32 %v1243, 2147483648
      %v2414 = vxor.u32 %v1245, 2147483648
      %v2415 = vxor.u32 %v1436, 2147483648
      %v2416 = vxor.u32 %v1438, 2147483648
      %v2417 = vxor.u32 %v1629, 2147483648
      %v2418 = vxor.u32 %v1631, 2147483648
      %v2419 = vxor.u32 %v1822, 2147483648
      %v2420 = vxor.u32 %v1824, 2147483648
      %v2421 = vxor.u32 %v2015, 2147483648
      %v2422 = vxor.u32 %v2017, 2147483648
      %v2423 = vxor.u32 %v2195, 2147483648
      %v2424 = vxor.u32 %v1249, 2147483648
      %v2425 = vxor.u32 %v1251, 2147483648
      %v2426 = vxor.u32 %v1442, 2147483648
      %v2427 = vxor.u32 %v1444, 2147483648
      %v2428 = vxor.u32 %v1635, 2147483648
      %v2429 = vxor.u32 %v1637, 2147483648
      %v2430 = vxor.u32 %v1828, 2147483648
      %v2431 = vxor.u32 %v1830, 2147483648
      %v2432 = vxor.u32 %v2021, 2147483648
      %v2433 = vxor.u32 %v2023, 2147483648
      %v2434 = vxor.u32 %v2200, 2147483648
      %v2435 = vxor.u32 %v1253, 2147483648
      %v2436 = vxor.u32 %v1255, 2147483648
      %v2437 = vxor.u32 %v1446, 2147483648
      %v2438 = vxor.u32 %v1448, 2147483648
      %v2439 = vxor.u32 %v1639, 2147483648
      %v2440 = vxor.u32 %v1641, 2147483648
      %v2441 = vxor.u32 %v1832, 2147483648
      %v2442 = vxor.u32 %v1834, 2147483648
      %v2443 = vxor.u32 %v2025, 2147483648
      %v2444 = vxor.u32 %v2027, 2147483648
      %v2445 = vxor.u32 %v2203, 2147483648
      %v2446 = vxor.u32 %v1259, 2147483648
      %v2447 = vxor.u32 %v1261, 2147483648
      %v2448 = vxor.u32 %v1452, 2147483648
      %v2449 = vxor.u32 %v1454, 2147483648
      %v2450 = vxor.u32 %v1645, 2147483648
      %v2451 = vxor.u32 %v1647, 2147483648
      %v2452 = vxor.u32 %v1838, 2147483648
      %v2453 = vxor.u32 %v1840, 2147483648
      %v2454 = vxor.u32 %v2031, 2147483648
      %v2455 = vxor.u32 %v2033, 2147483648
      %v2456 = vxor.u32 %v2208, 2147483648
      %v2457 = vxor.u32 %v1263, 2147483648
      %v2458 = vxor.u32 %v1265, 2147483648
      %v2459 = vxor.u32 %v1456, 2147483648
      %v2460 = vxor.u32 %v1458, 2147483648
      %v2461 = vxor.u32 %v1649, 2147483648
      %v2462 = vxor.u32 %v1651, 2147483648
      %v2463 = vxor.u32 %v1842, 2147483648
      %v2464 = vxor.u32 %v1844, 2147483648
      %v2465 = vxor.u32 %v2035, 2147483648
      %v2466 = vxor.u32 %v2037, 2147483648
      %v2467 = vxor.u32 %v2211, 2147483648
      %v2468 = vxor.u32 %v1269, 2147483648
      %v2469 = vxor.u32 %v1271, 2147483648
      %v2470 = vxor.u32 %v1462, 2147483648
      %v2471 = vxor.u32 %v1464, 2147483648
      %v2472 = vxor.u32 %v1655, 2147483648
      %v2473 = vxor.u32 %v1657, 2147483648
      %v2474 = vxor.u32 %v1848, 2147483648
      %v2475 = vxor.u32 %v1850, 2147483648
      %v2476 = vxor.u32 %v2041, 2147483648
      %v2477 = vxor.u32 %v2043, 2147483648
      %v2478 = vxor.u32 %v2216, 2147483648
      %v2479 = vxor.u32 %v1273, 2147483648
      %v2480 = vxor.u32 %v1275, 2147483648
      %v2481 = vxor.u32 %v1466, 2147483648
      %v2482 = vxor.u32 %v1468, 2147483648
      %v2483 = vxor.u32 %v1659, 2147483648
      %v2484 = vxor.u32 %v1661, 2147483648
      %v2485 = vxor.u32 %v1852, 2147483648
      %v2486 = vxor.u32 %v1854, 2147483648
      %v2487 = vxor.u32 %v2045, 2147483648
      %v2488 = vxor.u32 %v2047, 2147483648
      %v2489 = vxor.u32 %v2219, 2147483648
      %v2490 = vxor.u32 %v1279, 2147483648
      %v2491 = vxor.u32 %v1281, 2147483648
      %v2492 = vxor.u32 %v1472, 2147483648
      %v2493 = vxor.u32 %v1474, 2147483648
      %v2494 = vxor.u32 %v1665, 2147483648
      %v2495 = vxor.u32 %v1667, 2147483648
      %v2496 = vxor.u32 %v1858, 2147483648
      %v2497 = vxor.u32 %v1860, 2147483648
      %v2498 = vxor.u32 %v2051, 2147483648
      %v2499 = vxor.u32 %v2053, 2147483648
      %v2500 = vxor.u32 %v2224, 2147483648
      %v2501 = vxor.u32 %v1283, 2147483648
      %v2502 = vxor.u32 %v1285, 2147483648
      %v2503 = vxor.u32 %v1476, 2147483648
      %v2504 = vxor.u32 %v1478, 2147483648
      %v2505 = vxor.u32 %v1669, 2147483648
      %v2506 = vxor.u32 %v1671, 2147483648
      %v2507 = vxor.u32 %v1862, 2147483648
      %v2508 = vxor.u32 %v1864, 2147483648
      %v2509 = vxor.u32 %v2055, 2147483648
      %v2510 = vxor.u32 %v2057, 2147483648
      %v2511 = vxor.u32 %v2227, 2147483648
      %v2512 = vxor.u32 %v1289, 2147483648
      %v2513 = vxor.u32 %v1291, 2147483648
      %v2514 = vxor.u32 %v1482, 2147483648
      %v2515 = vxor.u32 %v1484, 2147483648
      %v2516 = vxor.u32 %v1675, 2147483648
      %v2517 = vxor.u32 %v1677, 2147483648
      %v2518 = vxor.u32 %v1868, 2147483648
      %v2519 = vxor.u32 %v1870, 2147483648
      %v2520 = vxor.u32 %v2061, 2147483648
      %v2521 = vxor.u32 %v2063, 2147483648
      %v2522 = vxor.u32 %v2232, 2147483648
      %v2523 = vxor.u32 %v1293, 2147483648
      %v2524 = vxor.u32 %v1295, 2147483648
      %v2525 = vxor.u32 %v1486, 2147483648
      %v2526 = vxor.u32 %v1488, 2147483648
      %v2527 = vxor.u32 %v1679, 2147483648
      %v2528 = vxor.u32 %v1681, 2147483648
      %v2529 = vxor.u32 %v1872, 2147483648
      %v2530 = vxor.u32 %v1874, 2147483648
      %v2531 = vxor.u32 %v2065, 2147483648
      %v2532 = vxor.u32 %v2067, 2147483648
      %v2533 = vxor.u32 %v2235, 2147483648
      %v2534 = vxor.u32 %v1299, 2147483648
      %v2535 = vxor.u32 %v1301, 2147483648
      %v2536 = vxor.u32 %v1492, 2147483648
      %v2537 = vxor.u32 %v1494, 2147483648
      %v2538 = vxor.u32 %v1685, 2147483648
      %v2539 = vxor.u32 %v1687, 2147483648
      %v2540 = vxor.u32 %v1878, 2147483648
      %v2541 = vxor.u32 %v1880, 2147483648
      %v2542 = vxor.u32 %v2071, 2147483648
      %v2543 = vxor.u32 %v2073, 2147483648
      %v2544 = vxor.u32 %v2240, 2147483648
      %v2545 = vxor.u32 %v1303, 2147483648
      %v2546 = vxor.u32 %v1305, 2147483648
      %v2547 = vxor.u32 %v1496, 2147483648
      %v2548 = vxor.u32 %v1498, 2147483648
      %v2549 = vxor.u32 %v1689, 2147483648
      %v2550 = vxor.u32 %v1691, 2147483648
      %v2551 = vxor.u32 %v1882, 2147483648
      %v2552 = vxor.u32 %v1884, 2147483648
      %v2553 = vxor.u32 %v2075, 2147483648
      %v2554 = vxor.u32 %v2077, 2147483648
      %v2555 = vxor.u32 %v2243, 2147483648
      %v2556 = vxor.u32 %v1309, 2147483648
      %v2557 = vxor.u32 %v1311, 2147483648
      %v2558 = vxor.u32 %v1502, 2147483648
      %v2559 = vxor.u32 %v1504, 2147483648
      %v2560 = vxor.u32 %v1695, 2147483648
      %v2561 = vxor.u32 %v1697, 2147483648
      %v2562 = vxor.u32 %v1888, 2147483648
      %v2563 = vxor.u32 %v1890, 2147483648
      %v2564 = vxor.u32 %v2081, 2147483648
      %v2565 = vxor.u32 %v2083, 2147483648
      %v2566 = vxor.u32 %v2248, 2147483648
      %v2567 = vxor.u32 %v1313, 2147483648
      %v2568 = vxor.u32 %v1315, 2147483648
      %v2569 = vxor.u32 %v1506, 2147483648
      %v2570 = vxor.u32 %v1508, 2147483648
      %v2571 = vxor.u32 %v1699, 2147483648
      %v2572 = vxor.u32 %v1701, 2147483648
      %v2573 = vxor.u32 %v1892, 2147483648
      %v2574 = vxor.u32 %v1894, 2147483648
      %v2575 = vxor.u32 %v2085, 2147483648
      %v2576 = vxor.u32 %v2087, 2147483648
      %v2577 = vxor.u32 %v2251, 2147483648
      %v2578 = vxor.u32 %v1319, 2147483648
      %v2579 = vxor.u32 %v1321, 2147483648
      %v2580 = vxor.u32 %v1512, 2147483648
      %v2581 = vxor.u32 %v1514, 2147483648
      %v2582 = vxor.u32 %v1705, 2147483648
      %v2583 = vxor.u32 %v1707, 2147483648
      %v2584 = vxor.u32 %v1898, 2147483648
      %v2585 = vxor.u32 %v1900, 2147483648
      %v2586 = vxor.u32 %v2091, 2147483648
      %v2587 = vxor.u32 %v2093, 2147483648
      %v2588 = vxor.u32 %v2256, 2147483648
      %v2589 = vxor.u32 %v1323, 2147483648
      %v2590 = vxor.u32 %v1325, 2147483648
      %v2591 = vxor.u32 %v1516, 2147483648
      %v2592 = vxor.u32 %v1518, 2147483648
      %v2593 = vxor.u32 %v1709, 2147483648
      %v2594 = vxor.u32 %v1711, 2147483648
      %v2595 = vxor.u32 %v1902, 2147483648
      %v2596 = vxor.u32 %v1904, 2147483648
      %v2597 = vxor.u32 %v2095, 2147483648
      %v2598 = vxor.u32 %v2097, 2147483648
      %v2599 = vxor.u32 %v2259, 2147483648
      %v2600 = vxor.u32 %v1329, 2147483648
      %v2601 = vxor.u32 %v1331, 2147483648
      %v2602 = vxor.u32 %v1522, 2147483648
      %v2603 = vxor.u32 %v1524, 2147483648
      %v2604 = vxor.u32 %v1715, 2147483648
      %v2605 = vxor.u32 %v1717, 2147483648
      %v2606 = vxor.u32 %v1908, 2147483648
      %v2607 = vxor.u32 %v1910, 2147483648
      %v2608 = vxor.u32 %v2101, 2147483648
      %v2609 = vxor.u32 %v2103, 2147483648
      %v2610 = vxor.u32 %v2264, 2147483648
      %v2611 = vxor.u32 %v1333, 2147483648
      %v2612 = vxor.u32 %v1335, 2147483648
      %v2613 = vxor.u32 %v1526, 2147483648
      %v2614 = vxor.u32 %v1528, 2147483648
      %v2615 = vxor.u32 %v1719, 2147483648
      %v2616 = vxor.u32 %v1721, 2147483648
      %v2617 = vxor.u32 %v1912, 2147483648
      %v2618 = vxor.u32 %v1914, 2147483648
      %v2619 = vxor.u32 %v2105, 2147483648
      %v2620 = vxor.u32 %v2107, 2147483648
      %v2621 = vxor.u32 %v2267, 2147483648
      %v2622 = vmul.f32 %v2270, 1.442695
      %v2623 = vpow.pop %v2622
      %v2624 = vmul.f32 %v2271, 1.442695
      %v2625 = vpow.pop %v2624
      %v2626 = vmul.f32 %v2272, 1.442695
      %v2627 = vpow.pop %v2626
      %v2628 = vmul.f32 %v2273, 1.442695
      %v2629 = vpow.pop %v2628
      %v2630 = vmul.f32 %v2274, 1.442695
      %v2631 = vpow.pop %v2630
      %v2632 = vmul.f32 %v2275, 1.442695
      %v2633 = vpow.pop %v2632
      %v2634 = vmul.f32 %v2276, 1.442695
      %v2635 = vpow.pop %v2634
      %v2636 = vmul.f32 %v2277, 1.442695
      %v2637 = vpow.pop %v2636
      %v2638 = vmul.f32 %v2278, 1.442695
      %v2639 = vpow.pop %v2638
      %v2640 = vmul.f32 %v2279, 1.442695
      %v2641 = vpow.pop %v2640
      %v2642 = vmul.f32 %v2280, 1.442695
      %v2643 = vpow.pop %v2642
      %v2644 = vmul.f32 %v2281, 1.442695
      %v2645 = vpow.pop %v2644
      %v2646 = vmul.f32 %v2282, 1.442695
      %v2647 = vpow.pop %v2646
      %v2648 = vmul.f32 %v2283, 1.442695
      %v2649 = vpow.pop %v2648
      %v2650 = vmul.f32 %v2284, 1.442695
      %v2651 = vpow.pop %v2650
      %v2652 = vmul.f32 %v2285, 1.442695
      %v2653 = vpow.pop %v2652
      %v2654 = vmul.f32 %v2286, 1.442695
      %v2655 = vpow.pop %v2654
      %v2656 = vmul.f32 %v2287, 1.442695
      %v2657 = vpow.pop %v2656
      %v2658 = vmul.f32 %v2288, 1.442695
      %v2659 = vpow.pop %v2658
      %v2660 = vmul.f32 %v2289, 1.442695
      %v2661 = vpow.pop %v2660
      %v2662 = vmul.f32 %v2290, 1.442695
      %v2663 = vpow.pop %v2662
      %v2664 = vmul.f32 %v2291, 1.442695
      %v2665 = vpow.pop %v2664
      %v2666 = vmul.f32 %v2292, 1.442695
      %v2667 = vpow.pop %v2666
      %v2668 = vmul.f32 %v2293, 1.442695
      %v2669 = vpow.pop %v2668
      %v2670 = vmul.f32 %v2294, 1.442695
      %v2671 = vpow.pop %v2670
      %v2672 = vmul.f32 %v2295, 1.442695
      %v2673 = vpow.pop %v2672
      %v2674 = vmul.f32 %v2296, 1.442695
      %v2675 = vpow.pop %v2674
      %v2676 = vmul.f32 %v2297, 1.442695
      %v2677 = vpow.pop %v2676
      %v2678 = vmul.f32 %v2298, 1.442695
      %v2679 = vpow.pop %v2678
      %v2680 = vmul.f32 %v2299, 1.442695
      %v2681 = vpow.pop %v2680
      %v2682 = vmul.f32 %v2300, 1.442695
      %v2683 = vpow.pop %v2682
      %v2684 = vmul.f32 %v2301, 1.442695
      %v2685 = vpow.pop %v2684
      %v2686 = vmul.f32 %v2302, 1.442695
      %v2687 = vpow.pop %v2686
      %v2688 = vmul.f32 %v2303, 1.442695
      %v2689 = vpow.pop %v2688
      %v2690 = vmul.f32 %v2304, 1.442695
      %v2691 = vpow.pop %v2690
      %v2692 = vmul.f32 %v2305, 1.442695
      %v2693 = vpow.pop %v2692
      %v2694 = vmul.f32 %v2306, 1.442695
      %v2695 = vpow.pop %v2694
      %v2696 = vmul.f32 %v2307, 1.442695
      %v2697 = vpow.pop %v2696
      %v2698 = vmul.f32 %v2308, 1.442695
      %v2699 = vpow.pop %v2698
      %v2700 = vmul.f32 %v2309, 1.442695
      %v2701 = vpow.pop %v2700
      %v2702 = vmul.f32 %v2310, 1.442695
      %v2703 = vpow.pop %v2702
      %v2704 = vmul.f32 %v2311, 1.442695
      %v2705 = vpow.pop %v2704
      %v2706 = vmul.f32 %v2312, 1.442695
      %v2707 = vpow.pop %v2706
      %v2708 = vmul.f32 %v2313, 1.442695
      %v2709 = vpow.pop %v2708
      %v2710 = vmul.f32 %v2314, 1.442695
      %v2711 = vpow.pop %v2710
      %v2712 = vmul.f32 %v2315, 1.442695
      %v2713 = vpow.pop %v2712
      %v2714 = vmul.f32 %v2316, 1.442695
      %v2715 = vpow.pop %v2714
      %v2716 = vmul.f32 %v2317, 1.442695
      %v2717 = vpow.pop %v2716
      %v2718 = vmul.f32 %v2318, 1.442695
      %v2719 = vpow.pop %v2718
      %v2720 = vmul.f32 %v2319, 1.442695
      %v2721 = vpow.pop %v2720
      %v2722 = vmul.f32 %v2320, 1.442695
      %v2723 = vpow.pop %v2722
      %v2724 = vmul.f32 %v2321, 1.442695
      %v2725 = vpow.pop %v2724
      %v2726 = vmul.f32 %v2322, 1.442695
      %v2727 = vpow.pop %v2726
      %v2728 = vmul.f32 %v2323, 1.442695
      %v2729 = vpow.pop %v2728
      %v2730 = vmul.f32 %v2324, 1.442695
      %v2731 = vpow.pop %v2730
      %v2732 = vmul.f32 %v2325, 1.442695
      %v2733 = vpow.pop %v2732
      %v2734 = vmul.f32 %v2326, 1.442695
      %v2735 = vpow.pop %v2734
      %v2736 = vmul.f32 %v2327, 1.442695
      %v2737 = vpow.pop %v2736
      %v2738 = vmul.f32 %v2328, 1.442695
      %v2739 = vpow.pop %v2738
      %v2740 = vmul.f32 %v2329, 1.442695
      %v2741 = vpow.pop %v2740
      %v2742 = vmul.f32 %v2330, 1.442695
      %v2743 = vpow.pop %v2742
      %v2744 = vmul.f32 %v2331, 1.442695
      %v2745 = vpow.pop %v2744
      %v2746 = vmul.f32 %v2332, 1.442695
      %v2747 = vpow.pop %v2746
      %v2748 = vmul.f32 %v2333, 1.442695
      %v2749 = vpow.pop %v2748
      %v2750 = vmul.f32 %v2334, 1.442695
      %v2751 = vpow.pop %v2750
      %v2752 = vmul.f32 %v2335, 1.442695
      %v2753 = vpow.pop %v2752
      %v2754 = vmul.f32 %v2336, 1.442695
      %v2755 = vpow.pop %v2754
      %v2756 = vmul.f32 %v2337, 1.442695
      %v2757 = vpow.pop %v2756
      %v2758 = vmul.f32 %v2338, 1.442695
      %v2759 = vpow.pop %v2758
      %v2760 = vmul.f32 %v2339, 1.442695
      %v2761 = vpow.pop %v2760
      %v2762 = vmul.f32 %v2340, 1.442695
      %v2763 = vpow.pop %v2762
      %v2764 = vmul.f32 %v2341, 1.442695
      %v2765 = vpow.pop %v2764
      %v2766 = vmul.f32 %v2342, 1.442695
      %v2767 = vpow.pop %v2766
      %v2768 = vmul.f32 %v2343, 1.442695
      %v2769 = vpow.pop %v2768
      %v2770 = vmul.f32 %v2344, 1.442695
      %v2771 = vpow.pop %v2770
      %v2772 = vmul.f32 %v2345, 1.442695
      %v2773 = vpow.pop %v2772
      %v2774 = vmul.f32 %v2346, 1.442695
      %v2775 = vpow.pop %v2774
      %v2776 = vmul.f32 %v2347, 1.442695
      %v2777 = vpow.pop %v2776
      %v2778 = vmul.f32 %v2348, 1.442695
      %v2779 = vpow.pop %v2778
      %v2780 = vmul.f32 %v2349, 1.442695
      %v2781 = vpow.pop %v2780
      %v2782 = vmul.f32 %v2350, 1.442695
      %v2783 = vpow.pop %v2782
      %v2784 = vmul.f32 %v2351, 1.442695
      %v2785 = vpow.pop %v2784
      %v2786 = vmul.f32 %v2352, 1.442695
      %v2787 = vpow.pop %v2786
      %v2788 = vmul.f32 %v2353, 1.442695
      %v2789 = vpow.pop %v2788
      %v2790 = vmul.f32 %v2354, 1.442695
      %v2791 = vpow.pop %v2790
      %v2792 = vmul.f32 %v2355, 1.442695
      %v2793 = vpow.pop %v2792
      %v2794 = vmul.f32 %v2356, 1.442695
      %v2795 = vpow.pop %v2794
      %v2796 = vmul.f32 %v2357, 1.442695
      %v2797 = vpow.pop %v2796
      %v2798 = vmul.f32 %v2358, 1.442695
      %v2799 = vpow.pop %v2798
      %v2800 = vmul.f32 %v2359, 1.442695
      %v2801 = vpow.pop %v2800
      %v2802 = vmul.f32 %v2360, 1.442695
      %v2803 = vpow.pop %v2802
      %v2804 = vmul.f32 %v2361, 1.442695
      %v2805 = vpow.pop %v2804
      %v2806 = vmul.f32 %v2362, 1.442695
      %v2807 = vpow.pop %v2806
      %v2808 = vmul.f32 %v2363, 1.442695
      %v2809 = vpow.pop %v2808
      %v2810 = vmul.f32 %v2364, 1.442695
      %v2811 = vpow.pop %v2810
      %v2812 = vmul.f32 %v2365, 1.442695
      %v2813 = vpow.pop %v2812
      %v2814 = vmul.f32 %v2366, 1.442695
      %v2815 = vpow.pop %v2814
      %v2816 = vmul.f32 %v2367, 1.442695
      %v2817 = vpow.pop %v2816
      %v2818 = vmul.f32 %v2368, 1.442695
      %v2819 = vpow.pop %v2818
      %v2820 = vmul.f32 %v2369, 1.442695
      %v2821 = vpow.pop %v2820
      %v2822 = vmul.f32 %v2370, 1.442695
      %v2823 = vpow.pop %v2822
      %v2824 = vmul.f32 %v2371, 1.442695
      %v2825 = vpow.pop %v2824
      %v2826 = vmul.f32 %v2372, 1.442695
      %v2827 = vpow.pop %v2826
      %v2828 = vmul.f32 %v2373, 1.442695
      %v2829 = vpow.pop %v2828
      %v2830 = vmul.f32 %v2374, 1.442695
      %v2831 = vpow.pop %v2830
      %v2832 = vmul.f32 %v2375, 1.442695
      %v2833 = vpow.pop %v2832
      %v2834 = vmul.f32 %v2376, 1.442695
      %v2835 = vpow.pop %v2834
      %v2836 = vmul.f32 %v2377, 1.442695
      %v2837 = vpow.pop %v2836
      %v2838 = vmul.f32 %v2378, 1.442695
      %v2839 = vpow.pop %v2838
      %v2840 = vmul.f32 %v2379, 1.442695
      %v2841 = vpow.pop %v2840
      %v2842 = vmul.f32 %v2380, 1.442695
      %v2843 = vpow.pop %v2842
      %v2844 = vmul.f32 %v2381, 1.442695
      %v2845 = vpow.pop %v2844
      %v2846 = vmul.f32 %v2382, 1.442695
      %v2847 = vpow.pop %v2846
      %v2848 = vmul.f32 %v2383, 1.442695
      %v2849 = vpow.pop %v2848
      %v2850 = vmul.f32 %v2384, 1.442695
      %v2851 = vpow.pop %v2850
      %v2852 = vmul.f32 %v2385, 1.442695
      %v2853 = vpow.pop %v2852
      %v2854 = vmul.f32 %v2386, 1.442695
      %v2855 = vpow.pop %v2854
      %v2856 = vmul.f32 %v2387, 1.442695
      %v2857 = vpow.pop %v2856
      %v2858 = vmul.f32 %v2388, 1.442695
      %v2859 = vpow.pop %v2858
      %v2860 = vmul.f32 %v2389, 1.442695
      %v2861 = vpow.pop %v2860
      %v2862 = vmul.f32 %v2390, 1.442695
      %v2863 = vpow.pop %v2862
      %v2864 = vmul.f32 %v2391, 1.442695
      %v2865 = vpow.pop %v2864
      %v2866 = vmul.f32 %v2392, 1.442695
      %v2867 = vpow.pop %v2866
      %v2868 = vmul.f32 %v2393, 1.442695
      %v2869 = vpow.pop %v2868
      %v2870 = vmul.f32 %v2394, 1.442695
      %v2871 = vpow.pop %v2870
      %v2872 = vmul.f32 %v2395, 1.442695
      %v2873 = vpow.pop %v2872
      %v2874 = vmul.f32 %v2396, 1.442695
      %v2875 = vpow.pop %v2874
      %v2876 = vmul.f32 %v2397, 1.442695
      %v2877 = vpow.pop %v2876
      %v2878 = vmul.f32 %v2398, 1.442695
      %v2879 = vpow.pop %v2878
      %v2880 = vmul.f32 %v2399, 1.442695
      %v2881 = vpow.pop %v2880
      %v2882 = vmul.f32 %v2400, 1.442695
      %v2883 = vpow.pop %v2882
      %v2884 = vmul.f32 %v2401, 1.442695
      %v2885 = vpow.pop %v2884
      %v2886 = vmul.f32 %v2402, 1.442695
      %v2887 = vpow.pop %v2886
      %v2888 = vmul.f32 %v2403, 1.442695
      %v2889 = vpow.pop %v2888
      %v2890 = vmul.f32 %v2404, 1.442695
      %v2891 = vpow.pop %v2890
      %v2892 = vmul.f32 %v2405, 1.442695
      %v2893 = vpow.pop %v2892
      %v2894 = vmul.f32 %v2406, 1.442695
      %v2895 = vpow.pop %v2894
      %v2896 = vmul.f32 %v2407, 1.442695
      %v2897 = vpow.pop %v2896
      %v2898 = vmul.f32 %v2408, 1.442695
      %v2899 = vpow.pop %v2898
      %v2900 = vmul.f32 %v2409, 1.442695
      %v2901 = vpow.pop %v2900
      %v2902 = vmul.f32 %v2410, 1.442695
      %v2903 = vpow.pop %v2902
      %v2904 = vmul.f32 %v2411, 1.442695
      %v2905 = vpow.pop %v2904
      %v2906 = vmul.f32 %v2412, 1.442695
      %v2907 = vpow.pop %v2906
      %v2908 = vmul.f32 %v2413, 1.442695
      %v2909 = vpow.pop %v2908
      %v2910 = vmul.f32 %v2414, 1.442695
      %v2911 = vpow.pop %v2910
      %v2912 = vmul.f32 %v2415, 1.442695
      %v2913 = vpow.pop %v2912
      %v2914 = vmul.f32 %v2416, 1.442695
      %v2915 = vpow.pop %v2914
      %v2916 = vmul.f32 %v2417, 1.442695
      %v2917 = vpow.pop %v2916
      %v2918 = vmul.f32 %v2418, 1.442695
      %v2919 = vpow.pop %v2918
      %v2920 = vmul.f32 %v2419, 1.442695
      %v2921 = vpow.pop %v2920
      %v2922 = vmul.f32 %v2420, 1.442695
      %v2923 = vpow.pop %v2922
      %v2924 = vmul.f32 %v2421, 1.442695
      %v2925 = vpow.pop %v2924
      %v2926 = vmul.f32 %v2422, 1.442695
      %v2927 = vpow.pop %v2926
      %v2928 = vmul.f32 %v2423, 1.442695
      %v2929 = vpow.pop %v2928
      %v2930 = vmul.f32 %v2424, 1.442695
      %v2931 = vpow.pop %v2930
      %v2932 = vmul.f32 %v2425, 1.442695
      %v2933 = vpow.pop %v2932
      %v2934 = vmul.f32 %v2426, 1.442695
      %v2935 = vpow.pop %v2934
      %v2936 = vmul.f32 %v2427, 1.442695
      %v2937 = vpow.pop %v2936
      %v2938 = vmul.f32 %v2428, 1.442695
      %v2939 = vpow.pop %v2938
      %v2940 = vmul.f32 %v2429, 1.442695
      %v2941 = vpow.pop %v2940
      %v2942 = vmul.f32 %v2430, 1.442695
      %v2943 = vpow.pop %v2942
      %v2944 = vmul.f32 %v2431, 1.442695
      %v2945 = vpow.pop %v2944
      %v2946 = vmul.f32 %v2432, 1.442695
      %v2947 = vpow.pop %v2946
      %v2948 = vmul.f32 %v2433, 1.442695
      %v2949 = vpow.pop %v2948
      %v2950 = vmul.f32 %v2434, 1.442695
      %v2951 = vpow.pop %v2950
      %v2952 = vmul.f32 %v2435, 1.442695
      %v2953 = vpow.pop %v2952
      %v2954 = vmul.f32 %v2436, 1.442695
      %v2955 = vpow.pop %v2954
      %v2956 = vmul.f32 %v2437, 1.442695
      %v2957 = vpow.pop %v2956
      %v2958 = vmul.f32 %v2438, 1.442695
      %v2959 = vpow.pop %v2958
      %v2960 = vmul.f32 %v2439, 1.442695
      %v2961 = vpow.pop %v2960
      %v2962 = vmul.f32 %v2440, 1.442695
      %v2963 = vpow.pop %v2962
      %v2964 = vmul.f32 %v2441, 1.442695
      %v2965 = vpow.pop %v2964
      %v2966 = vmul.f32 %v2442, 1.442695
      %v2967 = vpow.pop %v2966
      %v2968 = vmul.f32 %v2443, 1.442695
      %v2969 = vpow.pop %v2968
      %v2970 = vmul.f32 %v2444, 1.442695
      %v2971 = vpow.pop %v2970
      %v2972 = vmul.f32 %v2445, 1.442695
      %v2973 = vpow.pop %v2972
      %v2974 = vmul.f32 %v2446, 1.442695
      %v2975 = vpow.pop %v2974
      %v2976 = vmul.f32 %v2447, 1.442695
      %v2977 = vpow.pop %v2976
      %v2978 = vmul.f32 %v2448, 1.442695
      %v2979 = vpow.pop %v2978
      %v2980 = vmul.f32 %v2449, 1.442695
      %v2981 = vpow.pop %v2980
      %v2982 = vmul.f32 %v2450, 1.442695
      %v2983 = vpow.pop %v2982
      %v2984 = vmul.f32 %v2451, 1.442695
      %v2985 = vpow.pop %v2984
      %v2986 = vmul.f32 %v2452, 1.442695
      %v2987 = vpow.pop %v2986
      %v2988 = vmul.f32 %v2453, 1.442695
      %v2989 = vpow.pop %v2988
      %v2990 = vmul.f32 %v2454, 1.442695
      %v2991 = vpow.pop %v2990
      %v2992 = vmul.f32 %v2455, 1.442695
      %v2993 = vpow.pop %v2992
      %v2994 = vmul.f32 %v2456, 1.442695
      %v2995 = vpow.pop %v2994
      %v2996 = vmul.f32 %v2457, 1.442695
      %v2997 = vpow.pop %v2996
      %v2998 = vmul.f32 %v2458, 1.442695
      %v2999 = vpow.pop %v2998
      %v3000 = vmul.f32 %v2459, 1.442695
      %v3001 = vpow.pop %v3000
      %v3002 = vmul.f32 %v2460, 1.442695
      %v3003 = vpow.pop %v3002
      %v3004 = vmul.f32 %v2461, 1.442695
      %v3005 = vpow.pop %v3004
      %v3006 = vmul.f32 %v2462, 1.442695
      %v3007 = vpow.pop %v3006
      %v3008 = vmul.f32 %v2463, 1.442695
      %v3009 = vpow.pop %v3008
      %v3010 = vmul.f32 %v2464, 1.442695
      %v3011 = vpow.pop %v3010
      %v3012 = vmul.f32 %v2465, 1.442695
      %v3013 = vpow.pop %v3012
      %v3014 = vmul.f32 %v2466, 1.442695
      %v3015 = vpow.pop %v3014
      %v3016 = vmul.f32 %v2467, 1.442695
      %v3017 = vpow.pop %v3016
      %v3018 = vmul.f32 %v2468, 1.442695
      %v3019 = vpow.pop %v3018
      %v3020 = vmul.f32 %v2469, 1.442695
      %v3021 = vpow.pop %v3020
      %v3022 = vmul.f32 %v2470, 1.442695
      %v3023 = vpow.pop %v3022
      %v3024 = vmul.f32 %v2471, 1.442695
      %v3025 = vpow.pop %v3024
      %v3026 = vmul.f32 %v2472, 1.442695
      %v3027 = vpow.pop %v3026
      %v3028 = vmul.f32 %v2473, 1.442695
      %v3029 = vpow.pop %v3028
      %v3030 = vmul.f32 %v2474, 1.442695
      %v3031 = vpow.pop %v3030
      %v3032 = vmul.f32 %v2475, 1.442695
      %v3033 = vpow.pop %v3032
      %v3034 = vmul.f32 %v2476, 1.442695
      %v3035 = vpow.pop %v3034
      %v3036 = vmul.f32 %v2477, 1.442695
      %v3037 = vpow.pop %v3036
      %v3038 = vmul.f32 %v2478, 1.442695
      %v3039 = vpow.pop %v3038
      %v3040 = vmul.f32 %v2479, 1.442695
      %v3041 = vpow.pop %v3040
      %v3042 = vmul.f32 %v2480, 1.442695
      %v3043 = vpow.pop %v3042
      %v3044 = vmul.f32 %v2481, 1.442695
      %v3045 = vpow.pop %v3044
      %v3046 = vmul.f32 %v2482, 1.442695
      %v3047 = vpow.pop %v3046
      %v3048 = vmul.f32 %v2483, 1.442695
      %v3049 = vpow.pop %v3048
      %v3050 = vmul.f32 %v2484, 1.442695
      %v3051 = vpow.pop %v3050
      %v3052 = vmul.f32 %v2485, 1.442695
      %v3053 = vpow.pop %v3052
      %v3054 = vmul.f32 %v2486, 1.442695
      %v3055 = vpow.pop %v3054
      %v3056 = vmul.f32 %v2487, 1.442695
      %v3057 = vpow.pop %v3056
      %v3058 = vmul.f32 %v2488, 1.442695
      %v3059 = vpow.pop %v3058
      %v3060 = vmul.f32 %v2489, 1.442695
      %v3061 = vpow.pop %v3060
      %v3062 = vmul.f32 %v2490, 1.442695
      %v3063 = vpow.pop %v3062
      %v3064 = vmul.f32 %v2491, 1.442695
      %v3065 = vpow.pop %v3064
      %v3066 = vmul.f32 %v2492, 1.442695
      %v3067 = vpow.pop %v3066
      %v3068 = vmul.f32 %v2493, 1.442695
      %v3069 = vpow.pop %v3068
      %v3070 = vmul.f32 %v2494, 1.442695
      %v3071 = vpow.pop %v3070
      %v3072 = vmul.f32 %v2495, 1.442695
      %v3073 = vpow.pop %v3072
      %v3074 = vmul.f32 %v2496, 1.442695
      %v3075 = vpow.pop %v3074
      %v3076 = vmul.f32 %v2497, 1.442695
      %v3077 = vpow.pop %v3076
      %v3078 = vmul.f32 %v2498, 1.442695
      %v3079 = vpow.pop %v3078
      %v3080 = vmul.f32 %v2499, 1.442695
      %v3081 = vpow.pop %v3080
      %v3082 = vmul.f32 %v2500, 1.442695
      %v3083 = vpow.pop %v3082
      %v3084 = vmul.f32 %v2501, 1.442695
      %v3085 = vpow.pop %v3084
      %v3086 = vmul.f32 %v2502, 1.442695
      %v3087 = vpow.pop %v3086
      %v3088 = vmul.f32 %v2503, 1.442695
      %v3089 = vpow.pop %v3088
      %v3090 = vmul.f32 %v2504, 1.442695
      %v3091 = vpow.pop %v3090
      %v3092 = vmul.f32 %v2505, 1.442695
      %v3093 = vpow.pop %v3092
      %v3094 = vmul.f32 %v2506, 1.442695
      %v3095 = vpow.pop %v3094
      %v3096 = vmul.f32 %v2507, 1.442695
      %v3097 = vpow.pop %v3096
      %v3098 = vmul.f32 %v2508, 1.442695
      %v3099 = vpow.pop %v3098
      %v3100 = vmul.f32 %v2509, 1.442695
      %v3101 = vpow.pop %v3100
      %v3102 = vmul.f32 %v2510, 1.442695
      %v3103 = vpow.pop %v3102
      %v3104 = vmul.f32 %v2511, 1.442695
      %v3105 = vpow.pop %v3104
      %v3106 = vmul.f32 %v2512, 1.442695
      %v3107 = vpow.pop %v3106
      %v3108 = vmul.f32 %v2513, 1.442695
      %v3109 = vpow.pop %v3108
      %v3110 = vmul.f32 %v2514, 1.442695
      %v3111 = vpow.pop %v3110
      %v3112 = vmul.f32 %v2515, 1.442695
      %v3113 = vpow.pop %v3112
      %v3114 = vmul.f32 %v2516, 1.442695
      %v3115 = vpow.pop %v3114
      %v3116 = vmul.f32 %v2517, 1.442695
      %v3117 = vpow.pop %v3116
      %v3118 = vmul.f32 %v2518, 1.442695
      %v3119 = vpow.pop %v3118
      %v3120 = vmul.f32 %v2519, 1.442695
      %v3121 = vpow.pop %v3120
      %v3122 = vmul.f32 %v2520, 1.442695
      %v3123 = vpow.pop %v3122
      %v3124 = vmul.f32 %v2521, 1.442695
      %v3125 = vpow.pop %v3124
      %v3126 = vmul.f32 %v2522, 1.442695
      %v3127 = vpow.pop %v3126
      %v3128 = vmul.f32 %v2523, 1.442695
      %v3129 = vpow.pop %v3128
      %v3130 = vmul.f32 %v2524, 1.442695
      %v3131 = vpow.pop %v3130
      %v3132 = vmul.f32 %v2525, 1.442695
      %v3133 = vpow.pop %v3132
      %v3134 = vmul.f32 %v2526, 1.442695
      %v3135 = vpow.pop %v3134
      %v3136 = vmul.f32 %v2527, 1.442695
      %v3137 = vpow.pop %v3136
      %v3138 = vmul.f32 %v2528, 1.442695
      %v3139 = vpow.pop %v3138
      %v3140 = vmul.f32 %v2529, 1.442695
      %v3141 = vpow.pop %v3140
      %v3142 = vmul.f32 %v2530, 1.442695
      %v3143 = vpow.pop %v3142
      %v3144 = vmul.f32 %v2531, 1.442695
      %v3145 = vpow.pop %v3144
      %v3146 = vmul.f32 %v2532, 1.442695
      %v3147 = vpow.pop %v3146
      %v3148 = vmul.f32 %v2533, 1.442695
      %v3149 = vpow.pop %v3148
      %v3150 = vmul.f32 %v2534, 1.442695
      %v3151 = vpow.pop %v3150
      %v3152 = vmul.f32 %v2535, 1.442695
      %v3153 = vpow.pop %v3152
      %v3154 = vmul.f32 %v2536, 1.442695
      %v3155 = vpow.pop %v3154
      %v3156 = vmul.f32 %v2537, 1.442695
      %v3157 = vpow.pop %v3156
      %v3158 = vmul.f32 %v2538, 1.442695
      %v3159 = vpow.pop %v3158
      %v3160 = vmul.f32 %v2539, 1.442695
      %v3161 = vpow.pop %v3160
      %v3162 = vmul.f32 %v2540, 1.442695
      %v3163 = vpow.pop %v3162
      %v3164 = vmul.f32 %v2541, 1.442695
      %v3165 = vpow.pop %v3164
      %v3166 = vmul.f32 %v2542, 1.442695
      %v3167 = vpow.pop %v3166
      %v3168 = vmul.f32 %v2543, 1.442695
      %v3169 = vpow.pop %v3168
      %v3170 = vmul.f32 %v2544, 1.442695
      %v3171 = vpow.pop %v3170
      %v3172 = vmul.f32 %v2545, 1.442695
      %v3173 = vpow.pop %v3172
      %v3174 = vmul.f32 %v2546, 1.442695
      %v3175 = vpow.pop %v3174
      %v3176 = vmul.f32 %v2547, 1.442695
      %v3177 = vpow.pop %v3176
      %v3178 = vmul.f32 %v2548, 1.442695
      %v3179 = vpow.pop %v3178
      %v3180 = vmul.f32 %v2549, 1.442695
      %v3181 = vpow.pop %v3180
      %v3182 = vmul.f32 %v2550, 1.442695
      %v3183 = vpow.pop %v3182
      %v3184 = vmul.f32 %v2551, 1.442695
      %v3185 = vpow.pop %v3184
      %v3186 = vmul.f32 %v2552, 1.442695
      %v3187 = vpow.pop %v3186
      %v3188 = vmul.f32 %v2553, 1.442695
      %v3189 = vpow.pop %v3188
      %v3190 = vmul.f32 %v2554, 1.442695
      %v3191 = vpow.pop %v3190
      %v3192 = vmul.f32 %v2555, 1.442695
      %v3193 = vpow.pop %v3192
      %v3194 = vmul.f32 %v2556, 1.442695
      %v3195 = vpow.pop %v3194
      %v3196 = vmul.f32 %v2557, 1.442695
      %v3197 = vpow.pop %v3196
      %v3198 = vmul.f32 %v2558, 1.442695
      %v3199 = vpow.pop %v3198
      %v3200 = vmul.f32 %v2559, 1.442695
      %v3201 = vpow.pop %v3200
      %v3202 = vmul.f32 %v2560, 1.442695
      %v3203 = vpow.pop %v3202
      %v3204 = vmul.f32 %v2561, 1.442695
      %v3205 = vpow.pop %v3204
      %v3206 = vmul.f32 %v2562, 1.442695
      %v3207 = vpow.pop %v3206
      %v3208 = vmul.f32 %v2563, 1.442695
      %v3209 = vpow.pop %v3208
      %v3210 = vmul.f32 %v2564, 1.442695
      %v3211 = vpow.pop %v3210
      %v3212 = vmul.f32 %v2565, 1.442695
      %v3213 = vpow.pop %v3212
      %v3214 = vmul.f32 %v2566, 1.442695
      %v3215 = vpow.pop %v3214
      %v3216 = vmul.f32 %v2567, 1.442695
      %v3217 = vpow.pop %v3216
      %v3218 = vmul.f32 %v2568, 1.442695
      %v3219 = vpow.pop %v3218
      %v3220 = vmul.f32 %v2569, 1.442695
      %v3221 = vpow.pop %v3220
      %v3222 = vmul.f32 %v2570, 1.442695
      %v3223 = vpow.pop %v3222
      %v3224 = vmul.f32 %v2571, 1.442695
      %v3225 = vpow.pop %v3224
      %v3226 = vmul.f32 %v2572, 1.442695
      %v3227 = vpow.pop %v3226
      %v3228 = vmul.f32 %v2573, 1.442695
      %v3229 = vpow.pop %v3228
      %v3230 = vmul.f32 %v2574, 1.442695
      %v3231 = vpow.pop %v3230
      %v3232 = vmul.f32 %v2575, 1.442695
      %v3233 = vpow.pop %v3232
      %v3234 = vmul.f32 %v2576, 1.442695
      %v3235 = vpow.pop %v3234
      %v3236 = vmul.f32 %v2577, 1.442695
      %v3237 = vpow.pop %v3236
      %v3238 = vmul.f32 %v2578, 1.442695
      %v3239 = vpow.pop %v3238
      %v3240 = vmul.f32 %v2579, 1.442695
      %v3241 = vpow.pop %v3240
      %v3242 = vmul.f32 %v2580, 1.442695
      %v3243 = vpow.pop %v3242
      %v3244 = vmul.f32 %v2581, 1.442695
      %v3245 = vpow.pop %v3244
      %v3246 = vmul.f32 %v2582, 1.442695
      %v3247 = vpow.pop %v3246
      %v3248 = vmul.f32 %v2583, 1.442695
      %v3249 = vpow.pop %v3248
      %v3250 = vmul.f32 %v2584, 1.442695
      %v3251 = vpow.pop %v3250
      %v3252 = vmul.f32 %v2585, 1.442695
      %v3253 = vpow.pop %v3252
      %v3254 = vmul.f32 %v2586, 1.442695
      %v3255 = vpow.pop %v3254
      %v3256 = vmul.f32 %v2587, 1.442695
      %v3257 = vpow.pop %v3256
      %v3258 = vmul.f32 %v2588, 1.442695
      %v3259 = vpow.pop %v3258
      %v3260 = vmul.f32 %v2589, 1.442695
      %v3261 = vpow.pop %v3260
      %v3262 = vmul.f32 %v2590, 1.442695
      %v3263 = vpow.pop %v3262
      %v3264 = vmul.f32 %v2591, 1.442695
      %v3265 = vpow.pop %v3264
      %v3266 = vmul.f32 %v2592, 1.442695
      %v3267 = vpow.pop %v3266
      %v3268 = vmul.f32 %v2593, 1.442695
      %v3269 = vpow.pop %v3268
      %v3270 = vmul.f32 %v2594, 1.442695
      %v3271 = vpow.pop %v3270
      %v3272 = vmul.f32 %v2595, 1.442695
      %v3273 = vpow.pop %v3272
      %v3274 = vmul.f32 %v2596, 1.442695
      %v3275 = vpow.pop %v3274
      %v3276 = vmul.f32 %v2597, 1.442695
      %v3277 = vpow.pop %v3276
      %v3278 = vmul.f32 %v2598, 1.442695
      %v3279 = vpow.pop %v3278
      %v3280 = vmul.f32 %v2599, 1.442695
      %v3281 = vpow.pop %v3280
      %v3282 = vmul.f32 %v2600, 1.442695
      %v3283 = vpow.pop %v3282
      %v3284 = vmul.f32 %v2601, 1.442695
      %v3285 = vpow.pop %v3284
      %v3286 = vmul.f32 %v2602, 1.442695
      %v3287 = vpow.pop %v3286
      %v3288 = vmul.f32 %v2603, 1.442695
      %v3289 = vpow.pop %v3288
      %v3290 = vmul.f32 %v2604, 1.442695
      %v3291 = vpow.pop %v3290
      %v3292 = vmul.f32 %v2605, 1.442695
      %v3293 = vpow.pop %v3292
      %v3294 = vmul.f32 %v2606, 1.442695
      %v3295 = vpow.pop %v3294
      %v3296 = vmul.f32 %v2607, 1.442695
      %v3297 = vpow.pop %v3296
      %v3298 = vmul.f32 %v2608, 1.442695
      %v3299 = vpow.pop %v3298
      %v3300 = vmul.f32 %v2609, 1.442695
      %v3301 = vpow.pop %v3300
      %v3302 = vmul.f32 %v2610, 1.442695
      %v3303 = vpow.pop %v3302
      %v3304 = vmul.f32 %v2611, 1.442695
      %v3305 = vpow.pop %v3304
      %v3306 = vmul.f32 %v2612, 1.442695
      %v3307 = vpow.pop %v3306
      %v3308 = vmul.f32 %v2613, 1.442695
      %v3309 = vpow.pop %v3308
      %v3310 = vmul.f32 %v2614, 1.442695
      %v3311 = vpow.pop %v3310
      %v3312 = vmul.f32 %v2615, 1.442695
      %v3313 = vpow.pop %v3312
      %v3314 = vmul.f32 %v2616, 1.442695
      %v3315 = vpow.pop %v3314
      %v3316 = vmul.f32 %v2617, 1.442695
      %v3317 = vpow.pop %v3316
      %v3318 = vmul.f32 %v2618, 1.442695
      %v3319 = vpow.pop %v3318
      %v3320 = vmul.f32 %v2619, 1.442695
      %v3321 = vpow.pop %v3320
      %v3322 = vmul.f32 %v2620, 1.442695
      %v3323 = vpow.pop %v3322
      %v3324 = vmul.f32 %v2621, 1.442695
      %v3325 = vpow.pop %v3324
      %v3326 = vadd.f32 %v2623, 1.0
      %v3327 = vadd.f32 %v2625, 1.0
      %v3328 = vadd.f32 %v2627, 1.0
      %v3329 = vadd.f32 %v2629, 1.0
      %v3330 = vadd.f32 %v2631, 1.0
      %v3331 = vadd.f32 %v2633, 1.0
      %v3332 = vadd.f32 %v2635, 1.0
      %v3333 = vadd.f32 %v2637, 1.0
      %v3334 = vadd.f32 %v2639, 1.0
      %v3335 = vadd.f32 %v2641, 1.0
      %v3336 = vadd.f32 %v2643, 1.0
      %v3337 = vadd.f32 %v2645, 1.0
      %v3338 = vadd.f32 %v2647, 1.0
      %v3339 = vadd.f32 %v2649, 1.0
      %v3340 = vadd.f32 %v2651, 1.0
      %v3341 = vadd.f32 %v2653, 1.0
      %v3342 = vadd.f32 %v2655, 1.0
      %v3343 = vadd.f32 %v2657, 1.0
      %v3344 = vadd.f32 %v2659, 1.0
      %v3345 = vadd.f32 %v2661, 1.0
      %v3346 = vadd.f32 %v2663, 1.0
      %v3347 = vadd.f32 %v2665, 1.0
      %v3348 = vadd.f32 %v2667, 1.0
      %v3349 = vadd.f32 %v2669, 1.0
      %v3350 = vadd.f32 %v2671, 1.0
      %v3351 = vadd.f32 %v2673, 1.0
      %v3352 = vadd.f32 %v2675, 1.0
      %v3353 = vadd.f32 %v2677, 1.0
      %v3354 = vadd.f32 %v2679, 1.0
      %v3355 = vadd.f32 %v2681, 1.0
      %v3356 = vadd.f32 %v2683, 1.0
      %v3357 = vadd.f32 %v2685, 1.0
      %v3358 = vadd.f32 %v2687, 1.0
      %v3359 = vadd.f32 %v2689, 1.0
      %v3360 = vadd.f32 %v2691, 1.0
      %v3361 = vadd.f32 %v2693, 1.0
      %v3362 = vadd.f32 %v2695, 1.0
      %v3363 = vadd.f32 %v2697, 1.0
      %v3364 = vadd.f32 %v2699, 1.0
      %v3365 = vadd.f32 %v2701, 1.0
      %v3366 = vadd.f32 %v2703, 1.0
      %v3367 = vadd.f32 %v2705, 1.0
      %v3368 = vadd.f32 %v2707, 1.0
      %v3369 = vadd.f32 %v2709, 1.0
      %v3370 = vadd.f32 %v2711, 1.0
      %v3371 = vadd.f32 %v2713, 1.0
      %v3372 = vadd.f32 %v2715, 1.0
      %v3373 = vadd.f32 %v2717, 1.0
      %v3374 = vadd.f32 %v2719, 1.0
      %v3375 = vadd.f32 %v2721, 1.0
      %v3376 = vadd.f32 %v2723, 1.0
      %v3377 = vadd.f32 %v2725, 1.0
      %v3378 = vadd.f32 %v2727, 1.0
      %v3379 = vadd.f32 %v2729, 1.0
      %v3380 = vadd.f32 %v2731, 1.0
      %v3381 = vadd.f32 %v2733, 1.0
      %v3382 = vadd.f32 %v2735, 1.0
      %v3383 = vadd.f32 %v2737, 1.0
      %v3384 = vadd.f32 %v2739, 1.0
      %v3385 = vadd.f32 %v2741, 1.0
      %v3386 = vadd.f32 %v2743, 1.0
      %v3387 = vadd.f32 %v2745, 1.0
      %v3388 = vadd.f32 %v2747, 1.0
      %v3389 = vadd.f32 %v2749, 1.0
      %v3390 = vadd.f32 %v2751, 1.0
      %v3391 = vadd.f32 %v2753, 1.0
      %v3392 = vadd.f32 %v2755, 1.0
      %v3393 = vadd.f32 %v2757, 1.0
      %v3394 = vadd.f32 %v2759, 1.0
      %v3395 = vadd.f32 %v2761, 1.0
      %v3396 = vadd.f32 %v2763, 1.0
      %v3397 = vadd.f32 %v2765, 1.0
      %v3398 = vadd.f32 %v2767, 1.0
      %v3399 = vadd.f32 %v2769, 1.0
      %v3400 = vadd.f32 %v2771, 1.0
      %v3401 = vadd.f32 %v2773, 1.0
      %v3402 = vadd.f32 %v2775, 1.0
      %v3403 = vadd.f32 %v2777, 1.0
      %v3404 = vadd.f32 %v2779, 1.0
      %v3405 = vadd.f32 %v2781, 1.0
      %v3406 = vadd.f32 %v2783, 1.0
      %v3407 = vadd.f32 %v2785, 1.0
      %v3408 = vadd.f32 %v2787, 1.0
      %v3409 = vadd.f32 %v2789, 1.0
      %v3410 = vadd.f32 %v2791, 1.0
      %v3411 = vadd.f32 %v2793, 1.0
      %v3412 = vadd.f32 %v2795, 1.0
      %v3413 = vadd.f32 %v2797, 1.0
      %v3414 = vadd.f32 %v2799, 1.0
      %v3415 = vadd.f32 %v2801, 1.0
      %v3416 = vadd.f32 %v2803, 1.0
      %v3417 = vadd.f32 %v2805, 1.0
      %v3418 = vadd.f32 %v2807, 1.0
      %v3419 = vadd.f32 %v2809, 1.0
      %v3420 = vadd.f32 %v2811, 1.0
      %v3421 = vadd.f32 %v2813, 1.0
      %v3422 = vadd.f32 %v2815, 1.0
      %v3423 = vadd.f32 %v2817, 1.0
      %v3424 = vadd.f32 %v2819, 1.0
      %v3425 = vadd.f32 %v2821, 1.0
      %v3426 = vadd.f32 %v2823, 1.0
      %v3427 = vadd.f32 %v2825, 1.0
      %v3428 = vadd.f32 %v2827, 1.0
      %v3429 = vadd.f32 %v2829, 1.0
      %v3430 = vadd.f32 %v2831, 1.0
      %v3431 = vadd.f32 %v2833, 1.0
      %v3432 = vadd.f32 %v2835, 1.0
      %v3433 = vadd.f32 %v2837, 1.0
      %v3434 = vadd.f32 %v2839, 1.0
      %v3435 = vadd.f32 %v2841, 1.0
      %v3436 = vadd.f32 %v2843, 1.0
      %v3437 = vadd.f32 %v2845, 1.0
      %v3438 = vadd.f32 %v2847, 1.0
      %v3439 = vadd.f32 %v2849, 1.0
      %v3440 = vadd.f32 %v2851, 1.0
      %v3441 = vadd.f32 %v2853, 1.0
      %v3442 = vadd.f32 %v2855, 1.0
      %v3443 = vadd.f32 %v2857, 1.0
      %v3444 = vadd.f32 %v2859, 1.0
      %v3445 = vadd.f32 %v2861, 1.0
      %v3446 = vadd.f32 %v2863, 1.0
      %v3447 = vadd.f32 %v2865, 1.0
      %v3448 = vadd.f32 %v2867, 1.0
      %v3449 = vadd.f32 %v2869, 1.0
      %v3450 = vadd.f32 %v2871, 1.0
      %v3451 = vadd.f32 %v2873, 1.0
      %v3452 = vadd.f32 %v2875, 1.0
      %v3453 = vadd.f32 %v2877, 1.0
      %v3454 = vadd.f32 %v2879, 1.0
      %v3455 = vadd.f32 %v2881, 1.0
      %v3456 = vadd.f32 %v2883, 1.0
      %v3457 = vadd.f32 %v2885, 1.0
      %v3458 = vadd.f32 %v2887, 1.0
      %v3459 = vadd.f32 %v2889, 1.0
      %v3460 = vadd.f32 %v2891, 1.0
      %v3461 = vadd.f32 %v2893, 1.0
      %v3462 = vadd.f32 %v2895, 1.0
      %v3463 = vadd.f32 %v2897, 1.0
      %v3464 = vadd.f32 %v2899, 1.0
      %v3465 = vadd.f32 %v2901, 1.0
      %v3466 = vadd.f32 %v2903, 1.0
      %v3467 = vadd.f32 %v2905, 1.0
      %v3468 = vadd.f32 %v2907, 1.0
      %v3469 = vadd.f32 %v2909, 1.0
      %v3470 = vadd.f32 %v2911, 1.0
      %v3471 = vadd.f32 %v2913, 1.0
      %v3472 = vadd.f32 %v2915, 1.0
      %v3473 = vadd.f32 %v2917, 1.0
      %v3474 = vadd.f32 %v2919, 1.0
      %v3475 = vadd.f32 %v2921, 1.0
      %v3476 = vadd.f32 %v2923, 1.0
      %v3477 = vadd.f32 %v2925, 1.0
      %v3478 = vadd.f32 %v2927, 1.0
      %v3479 = vadd.f32 %v2929, 1.0
      %v3480 = vadd.f32 %v2931, 1.0
      %v3481 = vadd.f32 %v2933, 1.0
      %v3482 = vadd.f32 %v2935, 1.0
      %v3483 = vadd.f32 %v2937, 1.0
      %v3484 = vadd.f32 %v2939, 1.0
      %v3485 = vadd.f32 %v2941, 1.0
      %v3486 = vadd.f32 %v2943, 1.0
      %v3487 = vadd.f32 %v2945, 1.0
      %v3488 = vadd.f32 %v2947, 1.0
      %v3489 = vadd.f32 %v2949, 1.0
      %v3490 = vadd.f32 %v2951, 1.0
      %v3491 = vadd.f32 %v2953, 1.0
      %v3492 = vadd.f32 %v2955, 1.0
      %v3493 = vadd.f32 %v2957, 1.0
      %v3494 = vadd.f32 %v2959, 1.0
      %v3495 = vadd.f32 %v2961, 1.0
      %v3496 = vadd.f32 %v2963, 1.0
      %v3497 = vadd.f32 %v2965, 1.0
      %v3498 = vadd.f32 %v2967, 1.0
      %v3499 = vadd.f32 %v2969, 1.0
      %v3500 = vadd.f32 %v2971, 1.0
      %v3501 = vadd.f32 %v2973, 1.0
      %v3502 = vadd.f32 %v2975, 1.0
      %v3503 = vadd.f32 %v2977, 1.0
      %v3504 = vadd.f32 %v2979, 1.0
      %v3505 = vadd.f32 %v2981, 1.0
      %v3506 = vadd.f32 %v2983, 1.0
      %v3507 = vadd.f32 %v2985, 1.0
      %v3508 = vadd.f32 %v2987, 1.0
      %v3509 = vadd.f32 %v2989, 1.0
      %v3510 = vadd.f32 %v2991, 1.0
      %v3511 = vadd.f32 %v2993, 1.0
      %v3512 = vadd.f32 %v2995, 1.0
      %v3513 = vadd.f32 %v2997, 1.0
      %v3514 = vadd.f32 %v2999, 1.0
      %v3515 = vadd.f32 %v3001, 1.0
      %v3516 = vadd.f32 %v3003, 1.0
      %v3517 = vadd.f32 %v3005, 1.0
      %v3518 = vadd.f32 %v3007, 1.0
      %v3519 = vadd.f32 %v3009, 1.0
      %v3520 = vadd.f32 %v3011, 1.0
      %v3521 = vadd.f32 %v3013, 1.0
      %v3522 = vadd.f32 %v3015, 1.0
      %v3523 = vadd.f32 %v3017, 1.0
      %v3524 = vadd.f32 %v3019, 1.0
      %v3525 = vadd.f32 %v3021, 1.0
      %v3526 = vadd.f32 %v3023, 1.0
      %v3527 = vadd.f32 %v3025, 1.0
      %v3528 = vadd.f32 %v3027, 1.0
      %v3529 = vadd.f32 %v3029, 1.0
      %v3530 = vadd.f32 %v3031, 1.0
      %v3531 = vadd.f32 %v3033, 1.0
      %v3532 = vadd.f32 %v3035, 1.0
      %v3533 = vadd.f32 %v3037, 1.0
      %v3534 = vadd.f32 %v3039, 1.0
      %v3535 = vadd.f32 %v3041, 1.0
      %v3536 = vadd.f32 %v3043, 1.0
      %v3537 = vadd.f32 %v3045, 1.0
      %v3538 = vadd.f32 %v3047, 1.0
      %v3539 = vadd.f32 %v3049, 1.0
      %v3540 = vadd.f32 %v3051, 1.0
      %v3541 = vadd.f32 %v3053, 1.0
      %v3542 = vadd.f32 %v3055, 1.0
      %v3543 = vadd.f32 %v3057, 1.0
      %v3544 = vadd.f32 %v3059, 1.0
      %v3545 = vadd.f32 %v3061, 1.0
      %v3546 = vadd.f32 %v3063, 1.0
      %v3547 = vadd.f32 %v3065, 1.0
      %v3548 = vadd.f32 %v3067, 1.0
      %v3549 = vadd.f32 %v3069, 1.0
      %v3550 = vadd.f32 %v3071, 1.0
      %v3551 = vadd.f32 %v3073, 1.0
      %v3552 = vadd.f32 %v3075, 1.0
      %v3553 = vadd.f32 %v3077, 1.0
      %v3554 = vadd.f32 %v3079, 1.0
      %v3555 = vadd.f32 %v3081, 1.0
      %v3556 = vadd.f32 %v3083, 1.0
      %v3557 = vadd.f32 %v3085, 1.0
      %v3558 = vadd.f32 %v3087, 1.0
      %v3559 = vadd.f32 %v3089, 1.0
      %v3560 = vadd.f32 %v3091, 1.0
      %v3561 = vadd.f32 %v3093, 1.0
      %v3562 = vadd.f32 %v3095, 1.0
      %v3563 = vadd.f32 %v3097, 1.0
      %v3564 = vadd.f32 %v3099, 1.0
      %v3565 = vadd.f32 %v3101, 1.0
      %v3566 = vadd.f32 %v3103, 1.0
      %v3567 = vadd.f32 %v3105, 1.0
      %v3568 = vadd.f32 %v3107, 1.0
      %v3569 = vadd.f32 %v3109, 1.0
      %v3570 = vadd.f32 %v3111, 1.0
      %v3571 = vadd.f32 %v3113, 1.0
      %v3572 = vadd.f32 %v3115, 1.0
      %v3573 = vadd.f32 %v3117, 1.0
      %v3574 = vadd.f32 %v3119, 1.0
      %v3575 = vadd.f32 %v3121, 1.0
      %v3576 = vadd.f32 %v3123, 1.0
      %v3577 = vadd.f32 %v3125, 1.0
      %v3578 = vadd.f32 %v3127, 1.0
      %v3579 = vadd.f32 %v3129, 1.0
      %v3580 = vadd.f32 %v3131, 1.0
      %v3581 = vadd.f32 %v3133, 1.0
      %v3582 = vadd.f32 %v3135, 1.0
      %v3583 = vadd.f32 %v3137, 1.0
      %v3584 = vadd.f32 %v3139, 1.0
      %v3585 = vadd.f32 %v3141, 1.0
      %v3586 = vadd.f32 %v3143, 1.0
      %v3587 = vadd.f32 %v3145, 1.0
      %v3588 = vadd.f32 %v3147, 1.0
      %v3589 = vadd.f32 %v3149, 1.0
      %v3590 = vadd.f32 %v3151, 1.0
      %v3591 = vadd.f32 %v3153, 1.0
      %v3592 = vadd.f32 %v3155, 1.0
      %v3593 = vadd.f32 %v3157, 1.0
      %v3594 = vadd.f32 %v3159, 1.0
      %v3595 = vadd.f32 %v3161, 1.0
      %v3596 = vadd.f32 %v3163, 1.0
      %v3597 = vadd.f32 %v3165, 1.0
      %v3598 = vadd.f32 %v3167, 1.0
      %v3599 = vadd.f32 %v3169, 1.0
      %v3600 = vadd.f32 %v3171, 1.0
      %v3601 = vadd.f32 %v3173, 1.0
      %v3602 = vadd.f32 %v3175, 1.0
      %v3603 = vadd.f32 %v3177, 1.0
      %v3604 = vadd.f32 %v3179, 1.0
      %v3605 = vadd.f32 %v3181, 1.0
      %v3606 = vadd.f32 %v3183, 1.0
      %v3607 = vadd.f32 %v3185, 1.0
      %v3608 = vadd.f32 %v3187, 1.0
      %v3609 = vadd.f32 %v3189, 1.0
      %v3610 = vadd.f32 %v3191, 1.0
      %v3611 = vadd.f32 %v3193, 1.0
      %v3612 = vadd.f32 %v3195, 1.0
      %v3613 = vadd.f32 %v3197, 1.0
      %v3614 = vadd.f32 %v3199, 1.0
      %v3615 = vadd.f32 %v3201, 1.0
      %v3616 = vadd.f32 %v3203, 1.0
      %v3617 = vadd.f32 %v3205, 1.0
      %v3618 = vadd.f32 %v3207, 1.0
      %v3619 = vadd.f32 %v3209, 1.0
      %v3620 = vadd.f32 %v3211, 1.0
      %v3621 = vadd.f32 %v3213, 1.0
      %v3622 = vadd.f32 %v3215, 1.0
      %v3623 = vadd.f32 %v3217, 1.0
      %v3624 = vadd.f32 %v3219, 1.0
      %v3625 = vadd.f32 %v3221, 1.0
      %v3626 = vadd.f32 %v3223, 1.0
      %v3627 = vadd.f32 %v3225, 1.0
      %v3628 = vadd.f32 %v3227, 1.0
      %v3629 = vadd.f32 %v3229, 1.0
      %v3630 = vadd.f32 %v3231, 1.0
      %v3631 = vadd.f32 %v3233, 1.0
      %v3632 = vadd.f32 %v3235, 1.0
      %v3633 = vadd.f32 %v3237, 1.0
      %v3634 = vadd.f32 %v3239, 1.0
      %v3635 = vadd.f32 %v3241, 1.0
      %v3636 = vadd.f32 %v3243, 1.0
      %v3637 = vadd.f32 %v3245, 1.0
      %v3638 = vadd.f32 %v3247, 1.0
      %v3639 = vadd.f32 %v3249, 1.0
      %v3640 = vadd.f32 %v3251, 1.0
      %v3641 = vadd.f32 %v3253, 1.0
      %v3642 = vadd.f32 %v3255, 1.0
      %v3643 = vadd.f32 %v3257, 1.0
      %v3644 = vadd.f32 %v3259, 1.0
      %v3645 = vadd.f32 %v3261, 1.0
      %v3646 = vadd.f32 %v3263, 1.0
      %v3647 = vadd.f32 %v3265, 1.0
      %v3648 = vadd.f32 %v3267, 1.0
      %v3649 = vadd.f32 %v3269, 1.0
      %v3650 = vadd.f32 %v3271, 1.0
      %v3651 = vadd.f32 %v3273, 1.0
      %v3652 = vadd.f32 %v3275, 1.0
      %v3653 = vadd.f32 %v3277, 1.0
      %v3654 = vadd.f32 %v3279, 1.0
      %v3655 = vadd.f32 %v3281, 1.0
      %v3656 = vadd.f32 %v3283, 1.0
      %v3657 = vadd.f32 %v3285, 1.0
      %v3658 = vadd.f32 %v3287, 1.0
      %v3659 = vadd.f32 %v3289, 1.0
      %v3660 = vadd.f32 %v3291, 1.0
      %v3661 = vadd.f32 %v3293, 1.0
      %v3662 = vadd.f32 %v3295, 1.0
      %v3663 = vadd.f32 %v3297, 1.0
      %v3664 = vadd.f32 %v3299, 1.0
      %v3665 = vadd.f32 %v3301, 1.0
      %v3666 = vadd.f32 %v3303, 1.0
      %v3667 = vadd.f32 %v3305, 1.0
      %v3668 = vadd.f32 %v3307, 1.0
      %v3669 = vadd.f32 %v3309, 1.0
      %v3670 = vadd.f32 %v3311, 1.0
      %v3671 = vadd.f32 %v3313, 1.0
      %v3672 = vadd.f32 %v3315, 1.0
      %v3673 = vadd.f32 %v3317, 1.0
      %v3674 = vadd.f32 %v3319, 1.0
      %v3675 = vadd.f32 %v3321, 1.0
      %v3676 = vadd.f32 %v3323, 1.0
      %v3677 = vadd.f32 %v3325, 1.0
      %v3678 = vrcp.pop %v3326
      %v3679 = vmul.f32 1.0, %v3678
      %v3680 = vrcp.pop %v3327
      %v3681 = vmul.f32 1.0, %v3680
      %v3682 = vrcp.pop %v3328
      %v3683 = vmul.f32 1.0, %v3682
      %v3684 = vrcp.pop %v3329
      %v3685 = vmul.f32 1.0, %v3684
      %v3686 = vrcp.pop %v3330
      %v3687 = vmul.f32 1.0, %v3686
      %v3688 = vrcp.pop %v3331
      %v3689 = vmul.f32 1.0, %v3688
      %v3690 = vrcp.pop %v3332
      %v3691 = vmul.f32 1.0, %v3690
      %v3692 = vrcp.pop %v3333
      %v3693 = vmul.f32 1.0, %v3692
      %v3694 = vrcp.pop %v3334
      %v3695 = vmul.f32 1.0, %v3694
      %v3696 = vrcp.pop %v3335
      %v3697 = vmul.f32 1.0, %v3696
      %v3698 = vrcp.pop %v3336
      %v3699 = vmul.f32 1.0, %v3698
      %v3700 = vrcp.pop %v3337
      %v3701 = vmul.f32 1.0, %v3700
      %v3702 = vrcp.pop %v3338
      %v3703 = vmul.f32 1.0, %v3702
      %v3704 = vrcp.pop %v3339
      %v3705 = vmul.f32 1.0, %v3704
      %v3706 = vrcp.pop %v3340
      %v3707 = vmul.f32 1.0, %v3706
      %v3708 = vrcp.pop %v3341
      %v3709 = vmul.f32 1.0, %v3708
      %v3710 = vrcp.pop %v3342
      %v3711 = vmul.f32 1.0, %v3710
      %v3712 = vrcp.pop %v3343
      %v3713 = vmul.f32 1.0, %v3712
      %v3714 = vrcp.pop %v3344
      %v3715 = vmul.f32 1.0, %v3714
      %v3716 = vrcp.pop %v3345
      %v3717 = vmul.f32 1.0, %v3716
      %v3718 = vrcp.pop %v3346
      %v3719 = vmul.f32 1.0, %v3718
      %v3720 = vrcp.pop %v3347
      %v3721 = vmul.f32 1.0, %v3720
      %v3722 = vrcp.pop %v3348
      %v3723 = vmul.f32 1.0, %v3722
      %v3724 = vrcp.pop %v3349
      %v3725 = vmul.f32 1.0, %v3724
      %v3726 = vrcp.pop %v3350
      %v3727 = vmul.f32 1.0, %v3726
      %v3728 = vrcp.pop %v3351
      %v3729 = vmul.f32 1.0, %v3728
      %v3730 = vrcp.pop %v3352
      %v3731 = vmul.f32 1.0, %v3730
      %v3732 = vrcp.pop %v3353
      %v3733 = vmul.f32 1.0, %v3732
      %v3734 = vrcp.pop %v3354
      %v3735 = vmul.f32 1.0, %v3734
      %v3736 = vrcp.pop %v3355
      %v3737 = vmul.f32 1.0, %v3736
      %v3738 = vrcp.pop %v3356
      %v3739 = vmul.f32 1.0, %v3738
      %v3740 = vrcp.pop %v3357
      %v3741 = vmul.f32 1.0, %v3740
      %v3742 = vrcp.pop %v3358
      %v3743 = vmul.f32 1.0, %v3742
      %v3744 = vrcp.pop %v3359
      %v3745 = vmul.f32 1.0, %v3744
      %v3746 = vrcp.pop %v3360
      %v3747 = vmul.f32 1.0, %v3746
      %v3748 = vrcp.pop %v3361
      %v3749 = vmul.f32 1.0, %v3748
      %v3750 = vrcp.pop %v3362
      %v3751 = vmul.f32 1.0, %v3750
      %v3752 = vrcp.pop %v3363
      %v3753 = vmul.f32 1.0, %v3752
      %v3754 = vrcp.pop %v3364
      %v3755 = vmul.f32 1.0, %v3754
      %v3756 = vrcp.pop %v3365
      %v3757 = vmul.f32 1.0, %v3756
      %v3758 = vrcp.pop %v3366
      %v3759 = vmul.f32 1.0, %v3758
      %v3760 = vrcp.pop %v3367
      %v3761 = vmul.f32 1.0, %v3760
      %v3762 = vrcp.pop %v3368
      %v3763 = vmul.f32 1.0, %v3762
      %v3764 = vrcp.pop %v3369
      %v3765 = vmul.f32 1.0, %v3764
      %v3766 = vrcp.pop %v3370
      %v3767 = vmul.f32 1.0, %v3766
      %v3768 = vrcp.pop %v3371
      %v3769 = vmul.f32 1.0, %v3768
      %v3770 = vrcp.pop %v3372
      %v3771 = vmul.f32 1.0, %v3770
      %v3772 = vrcp.pop %v3373
      %v3773 = vmul.f32 1.0, %v3772
      %v3774 = vrcp.pop %v3374
      %v3775 = vmul.f32 1.0, %v3774
      %v3776 = vrcp.pop %v3375
      %v3777 = vmul.f32 1.0, %v3776
      %v3778 = vrcp.pop %v3376
      %v3779 = vmul.f32 1.0, %v3778
      %v3780 = vrcp.pop %v3377
      %v3781 = vmul.f32 1.0, %v3780
      %v3782 = vrcp.pop %v3378
      %v3783 = vmul.f32 1.0, %v3782
      %v3784 = vrcp.pop %v3379
      %v3785 = vmul.f32 1.0, %v3784
      %v3786 = vrcp.pop %v3380
      %v3787 = vmul.f32 1.0, %v3786
      %v3788 = vrcp.pop %v3381
      %v3789 = vmul.f32 1.0, %v3788
      %v3790 = vrcp.pop %v3382
      %v3791 = vmul.f32 1.0, %v3790
      %v3792 = vrcp.pop %v3383
      %v3793 = vmul.f32 1.0, %v3792
      %v3794 = vrcp.pop %v3384
      %v3795 = vmul.f32 1.0, %v3794
      %v3796 = vrcp.pop %v3385
      %v3797 = vmul.f32 1.0, %v3796
      %v3798 = vrcp.pop %v3386
      %v3799 = vmul.f32 1.0, %v3798
      %v3800 = vrcp.pop %v3387
      %v3801 = vmul.f32 1.0, %v3800
      %v3802 = vrcp.pop %v3388
      %v3803 = vmul.f32 1.0, %v3802
      %v3804 = vrcp.pop %v3389
      %v3805 = vmul.f32 1.0, %v3804
      %v3806 = vrcp.pop %v3390
      %v3807 = vmul.f32 1.0, %v3806
      %v3808 = vrcp.pop %v3391
      %v3809 = vmul.f32 1.0, %v3808
      %v3810 = vrcp.pop %v3392
      %v3811 = vmul.f32 1.0, %v3810
      %v3812 = vrcp.pop %v3393
      %v3813 = vmul.f32 1.0, %v3812
      %v3814 = vrcp.pop %v3394
      %v3815 = vmul.f32 1.0, %v3814
      %v3816 = vrcp.pop %v3395
      %v3817 = vmul.f32 1.0, %v3816
      %v3818 = vrcp.pop %v3396
      %v3819 = vmul.f32 1.0, %v3818
      %v3820 = vrcp.pop %v3397
      %v3821 = vmul.f32 1.0, %v3820
      %v3822 = vrcp.pop %v3398
      %v3823 = vmul.f32 1.0, %v3822
      %v3824 = vrcp.pop %v3399
      %v3825 = vmul.f32 1.0, %v3824
      %v3826 = vrcp.pop %v3400
      %v3827 = vmul.f32 1.0, %v3826
      %v3828 = vrcp.pop %v3401
      %v3829 = vmul.f32 1.0, %v3828
      %v3830 = vrcp.pop %v3402
      %v3831 = vmul.f32 1.0, %v3830
      %v3832 = vrcp.pop %v3403
      %v3833 = vmul.f32 1.0, %v3832
      %v3834 = vrcp.pop %v3404
      %v3835 = vmul.f32 1.0, %v3834
      %v3836 = vrcp.pop %v3405
      %v3837 = vmul.f32 1.0, %v3836
      %v3838 = vrcp.pop %v3406
      %v3839 = vmul.f32 1.0, %v3838
      %v3840 = vrcp.pop %v3407
      %v3841 = vmul.f32 1.0, %v3840
      %v3842 = vrcp.pop %v3408
      %v3843 = vmul.f32 1.0, %v3842
      %v3844 = vrcp.pop %v3409
      %v3845 = vmul.f32 1.0, %v3844
      %v3846 = vrcp.pop %v3410
      %v3847 = vmul.f32 1.0, %v3846
      %v3848 = vrcp.pop %v3411
      %v3849 = vmul.f32 1.0, %v3848
      %v3850 = vrcp.pop %v3412
      %v3851 = vmul.f32 1.0, %v3850
      %v3852 = vrcp.pop %v3413
      %v3853 = vmul.f32 1.0, %v3852
      %v3854 = vrcp.pop %v3414
      %v3855 = vmul.f32 1.0, %v3854
      %v3856 = vrcp.pop %v3415
      %v3857 = vmul.f32 1.0, %v3856
      %v3858 = vrcp.pop %v3416
      %v3859 = vmul.f32 1.0, %v3858
      %v3860 = vrcp.pop %v3417
      %v3861 = vmul.f32 1.0, %v3860
      %v3862 = vrcp.pop %v3418
      %v3863 = vmul.f32 1.0, %v3862
      %v3864 = vrcp.pop %v3419
      %v3865 = vmul.f32 1.0, %v3864
      %v3866 = vrcp.pop %v3420
      %v3867 = vmul.f32 1.0, %v3866
      %v3868 = vrcp.pop %v3421
      %v3869 = vmul.f32 1.0, %v3868
      %v3870 = vrcp.pop %v3422
      %v3871 = vmul.f32 1.0, %v3870
      %v3872 = vrcp.pop %v3423
      %v3873 = vmul.f32 1.0, %v3872
      %v3874 = vrcp.pop %v3424
      %v3875 = vmul.f32 1.0, %v3874
      %v3876 = vrcp.pop %v3425
      %v3877 = vmul.f32 1.0, %v3876
      %v3878 = vrcp.pop %v3426
      %v3879 = vmul.f32 1.0, %v3878
      %v3880 = vrcp.pop %v3427
      %v3881 = vmul.f32 1.0, %v3880
      %v3882 = vrcp.pop %v3428
      %v3883 = vmul.f32 1.0, %v3882
      %v3884 = vrcp.pop %v3429
      %v3885 = vmul.f32 1.0, %v3884
      %v3886 = vrcp.pop %v3430
      %v3887 = vmul.f32 1.0, %v3886
      %v3888 = vrcp.pop %v3431
      %v3889 = vmul.f32 1.0, %v3888
      %v3890 = vrcp.pop %v3432
      %v3891 = vmul.f32 1.0, %v3890
      %v3892 = vrcp.pop %v3433
      %v3893 = vmul.f32 1.0, %v3892
      %v3894 = vrcp.pop %v3434
      %v3895 = vmul.f32 1.0, %v3894
      %v3896 = vrcp.pop %v3435
      %v3897 = vmul.f32 1.0, %v3896
      %v3898 = vrcp.pop %v3436
      %v3899 = vmul.f32 1.0, %v3898
      %v3900 = vrcp.pop %v3437
      %v3901 = vmul.f32 1.0, %v3900
      %v3902 = vrcp.pop %v3438
      %v3903 = vmul.f32 1.0, %v3902
      %v3904 = vrcp.pop %v3439
      %v3905 = vmul.f32 1.0, %v3904
      %v3906 = vrcp.pop %v3440
      %v3907 = vmul.f32 1.0, %v3906
      %v3908 = vrcp.pop %v3441
      %v3909 = vmul.f32 1.0, %v3908
      %v3910 = vrcp.pop %v3442
      %v3911 = vmul.f32 1.0, %v3910
      %v3912 = vrcp.pop %v3443
      %v3913 = vmul.f32 1.0, %v3912
      %v3914 = vrcp.pop %v3444
      %v3915 = vmul.f32 1.0, %v3914
      %v3916 = vrcp.pop %v3445
      %v3917 = vmul.f32 1.0, %v3916
      %v3918 = vrcp.pop %v3446
      %v3919 = vmul.f32 1.0, %v3918
      %v3920 = vrcp.pop %v3447
      %v3921 = vmul.f32 1.0, %v3920
      %v3922 = vrcp.pop %v3448
      %v3923 = vmul.f32 1.0, %v3922
      %v3924 = vrcp.pop %v3449
      %v3925 = vmul.f32 1.0, %v3924
      %v3926 = vrcp.pop %v3450
      %v3927 = vmul.f32 1.0, %v3926
      %v3928 = vrcp.pop %v3451
      %v3929 = vmul.f32 1.0, %v3928
      %v3930 = vrcp.pop %v3452
      %v3931 = vmul.f32 1.0, %v3930
      %v3932 = vrcp.pop %v3453
      %v3933 = vmul.f32 1.0, %v3932
      %v3934 = vrcp.pop %v3454
      %v3935 = vmul.f32 1.0, %v3934
      %v3936 = vrcp.pop %v3455
      %v3937 = vmul.f32 1.0, %v3936
      %v3938 = vrcp.pop %v3456
      %v3939 = vmul.f32 1.0, %v3938
      %v3940 = vrcp.pop %v3457
      %v3941 = vmul.f32 1.0, %v3940
      %v3942 = vrcp.pop %v3458
      %v3943 = vmul.f32 1.0, %v3942
      %v3944 = vrcp.pop %v3459
      %v3945 = vmul.f32 1.0, %v3944
      %v3946 = vrcp.pop %v3460
      %v3947 = vmul.f32 1.0, %v3946
      %v3948 = vrcp.pop %v3461
      %v3949 = vmul.f32 1.0, %v3948
      %v3950 = vrcp.pop %v3462
      %v3951 = vmul.f32 1.0, %v3950
      %v3952 = vrcp.pop %v3463
      %v3953 = vmul.f32 1.0, %v3952
      %v3954 = vrcp.pop %v3464
      %v3955 = vmul.f32 1.0, %v3954
      %v3956 = vrcp.pop %v3465
      %v3957 = vmul.f32 1.0, %v3956
      %v3958 = vrcp.pop %v3466
      %v3959 = vmul.f32 1.0, %v3958
      %v3960 = vrcp.pop %v3467
      %v3961 = vmul.f32 1.0, %v3960
      %v3962 = vrcp.pop %v3468
      %v3963 = vmul.f32 1.0, %v3962
      %v3964 = vrcp.pop %v3469
      %v3965 = vmul.f32 1.0, %v3964
      %v3966 = vrcp.pop %v3470
      %v3967 = vmul.f32 1.0, %v3966
      %v3968 = vrcp.pop %v3471
      %v3969 = vmul.f32 1.0, %v3968
      %v3970 = vrcp.pop %v3472
      %v3971 = vmul.f32 1.0, %v3970
      %v3972 = vrcp.pop %v3473
      %v3973 = vmul.f32 1.0, %v3972
      %v3974 = vrcp.pop %v3474
      %v3975 = vmul.f32 1.0, %v3974
      %v3976 = vrcp.pop %v3475
      %v3977 = vmul.f32 1.0, %v3976
      %v3978 = vrcp.pop %v3476
      %v3979 = vmul.f32 1.0, %v3978
      %v3980 = vrcp.pop %v3477
      %v3981 = vmul.f32 1.0, %v3980
      %v3982 = vrcp.pop %v3478
      %v3983 = vmul.f32 1.0, %v3982
      %v3984 = vrcp.pop %v3479
      %v3985 = vmul.f32 1.0, %v3984
      %v3986 = vrcp.pop %v3480
      %v3987 = vmul.f32 1.0, %v3986
      %v3988 = vrcp.pop %v3481
      %v3989 = vmul.f32 1.0, %v3988
      %v3990 = vrcp.pop %v3482
      %v3991 = vmul.f32 1.0, %v3990
      %v3992 = vrcp.pop %v3483
      %v3993 = vmul.f32 1.0, %v3992
      %v3994 = vrcp.pop %v3484
      %v3995 = vmul.f32 1.0, %v3994
      %v3996 = vrcp.pop %v3485
      %v3997 = vmul.f32 1.0, %v3996
      %v3998 = vrcp.pop %v3486
      %v3999 = vmul.f32 1.0, %v3998
      %v4000 = vrcp.pop %v3487
      %v4001 = vmul.f32 1.0, %v4000
      %v4002 = vrcp.pop %v3488
      %v4003 = vmul.f32 1.0, %v4002
      %v4004 = vrcp.pop %v3489
      %v4005 = vmul.f32 1.0, %v4004
      %v4006 = vrcp.pop %v3490
      %v4007 = vmul.f32 1.0, %v4006
      %v4008 = vrcp.pop %v3491
      %v4009 = vmul.f32 1.0, %v4008
      %v4010 = vrcp.pop %v3492
      %v4011 = vmul.f32 1.0, %v4010
      %v4012 = vrcp.pop %v3493
      %v4013 = vmul.f32 1.0, %v4012
      %v4014 = vrcp.pop %v3494
      %v4015 = vmul.f32 1.0, %v4014
      %v4016 = vrcp.pop %v3495
      %v4017 = vmul.f32 1.0, %v4016
      %v4018 = vrcp.pop %v3496
      %v4019 = vmul.f32 1.0, %v4018
      %v4020 = vrcp.pop %v3497
      %v4021 = vmul.f32 1.0, %v4020
      %v4022 = vrcp.pop %v3498
      %v4023 = vmul.f32 1.0, %v4022
      %v4024 = vrcp.pop %v3499
      %v4025 = vmul.f32 1.0, %v4024
      %v4026 = vrcp.pop %v3500
      %v4027 = vmul.f32 1.0, %v4026
      %v4028 = vrcp.pop %v3501
      %v4029 = vmul.f32 1.0, %v4028
      %v4030 = vrcp.pop %v3502
      %v4031 = vmul.f32 1.0, %v4030
      %v4032 = vrcp.pop %v3503
      %v4033 = vmul.f32 1.0, %v4032
      %v4034 = vrcp.pop %v3504
      %v4035 = vmul.f32 1.0, %v4034
      %v4036 = vrcp.pop %v3505
      %v4037 = vmul.f32 1.0, %v4036
      %v4038 = vrcp.pop %v3506
      %v4039 = vmul.f32 1.0, %v4038
      %v4040 = vrcp.pop %v3507
      %v4041 = vmul.f32 1.0, %v4040
      %v4042 = vrcp.pop %v3508
      %v4043 = vmul.f32 1.0, %v4042
      %v4044 = vrcp.pop %v3509
      %v4045 = vmul.f32 1.0, %v4044
      %v4046 = vrcp.pop %v3510
      %v4047 = vmul.f32 1.0, %v4046
      %v4048 = vrcp.pop %v3511
      %v4049 = vmul.f32 1.0, %v4048
      %v4050 = vrcp.pop %v3512
      %v4051 = vmul.f32 1.0, %v4050
      %v4052 = vrcp.pop %v3513
      %v4053 = vmul.f32 1.0, %v4052
      %v4054 = vrcp.pop %v3514
      %v4055 = vmul.f32 1.0, %v4054
      %v4056 = vrcp.pop %v3515
      %v4057 = vmul.f32 1.0, %v4056
      %v4058 = vrcp.pop %v3516
      %v4059 = vmul.f32 1.0, %v4058
      %v4060 = vrcp.pop %v3517
      %v4061 = vmul.f32 1.0, %v4060
      %v4062 = vrcp.pop %v3518
      %v4063 = vmul.f32 1.0, %v4062
      %v4064 = vrcp.pop %v3519
      %v4065 = vmul.f32 1.0, %v4064
      %v4066 = vrcp.pop %v3520
      %v4067 = vmul.f32 1.0, %v4066
      %v4068 = vrcp.pop %v3521
      %v4069 = vmul.f32 1.0, %v4068
      %v4070 = vrcp.pop %v3522
      %v4071 = vmul.f32 1.0, %v4070
      %v4072 = vrcp.pop %v3523
      %v4073 = vmul.f32 1.0, %v4072
      %v4074 = vrcp.pop %v3524
      %v4075 = vmul.f32 1.0, %v4074
      %v4076 = vrcp.pop %v3525
      %v4077 = vmul.f32 1.0, %v4076
      %v4078 = vrcp.pop %v3526
      %v4079 = vmul.f32 1.0, %v4078
      %v4080 = vrcp.pop %v3527
      %v4081 = vmul.f32 1.0, %v4080
      %v4082 = vrcp.pop %v3528
      %v4083 = vmul.f32 1.0, %v4082
      %v4084 = vrcp.pop %v3529
      %v4085 = vmul.f32 1.0, %v4084
      %v4086 = vrcp.pop %v3530
      %v4087 = vmul.f32 1.0, %v4086
      %v4088 = vrcp.pop %v3531
      %v4089 = vmul.f32 1.0, %v4088
      %v4090 = vrcp.pop %v3532
      %v4091 = vmul.f32 1.0, %v4090
      %v4092 = vrcp.pop %v3533
      %v4093 = vmul.f32 1.0, %v4092
      %v4094 = vrcp.pop %v3534
      %v4095 = vmul.f32 1.0, %v4094
      %v4096 = vrcp.pop %v3535
      %v4097 = vmul.f32 1.0, %v4096
      %v4098 = vrcp.pop %v3536
      %v4099 = vmul.f32 1.0, %v4098
      %v4100 = vrcp.pop %v3537
      %v4101 = vmul.f32 1.0, %v4100
      %v4102 = vrcp.pop %v3538
      %v4103 = vmul.f32 1.0, %v4102
      %v4104 = vrcp.pop %v3539
      %v4105 = vmul.f32 1.0, %v4104
      %v4106 = vrcp.pop %v3540
      %v4107 = vmul.f32 1.0, %v4106
      %v4108 = vrcp.pop %v3541
      %v4109 = vmul.f32 1.0, %v4108
      %v4110 = vrcp.pop %v3542
      %v4111 = vmul.f32 1.0, %v4110
      %v4112 = vrcp.pop %v3543
      %v4113 = vmul.f32 1.0, %v4112
      %v4114 = vrcp.pop %v3544
      %v4115 = vmul.f32 1.0, %v4114
      %v4116 = vrcp.pop %v3545
      %v4117 = vmul.f32 1.0, %v4116
      %v4118 = vrcp.pop %v3546
      %v4119 = vmul.f32 1.0, %v4118
      %v4120 = vrcp.pop %v3547
      %v4121 = vmul.f32 1.0, %v4120
      %v4122 = vrcp.pop %v3548
      %v4123 = vmul.f32 1.0, %v4122
      %v4124 = vrcp.pop %v3549
      %v4125 = vmul.f32 1.0, %v4124
      %v4126 = vrcp.pop %v3550
      %v4127 = vmul.f32 1.0, %v4126
      %v4128 = vrcp.pop %v3551
      %v4129 = vmul.f32 1.0, %v4128
      %v4130 = vrcp.pop %v3552
      %v4131 = vmul.f32 1.0, %v4130
      %v4132 = vrcp.pop %v3553
      %v4133 = vmul.f32 1.0, %v4132
      %v4134 = vrcp.pop %v3554
      %v4135 = vmul.f32 1.0, %v4134
      %v4136 = vrcp.pop %v3555
      %v4137 = vmul.f32 1.0, %v4136
      %v4138 = vrcp.pop %v3556
      %v4139 = vmul.f32 1.0, %v4138
      %v4140 = vrcp.pop %v3557
      %v4141 = vmul.f32 1.0, %v4140
      %v4142 = vrcp.pop %v3558
      %v4143 = vmul.f32 1.0, %v4142
      %v4144 = vrcp.pop %v3559
      %v4145 = vmul.f32 1.0, %v4144
      %v4146 = vrcp.pop %v3560
      %v4147 = vmul.f32 1.0, %v4146
      %v4148 = vrcp.pop %v3561
      %v4149 = vmul.f32 1.0, %v4148
      %v4150 = vrcp.pop %v3562
      %v4151 = vmul.f32 1.0, %v4150
      %v4152 = vrcp.pop %v3563
      %v4153 = vmul.f32 1.0, %v4152
      %v4154 = vrcp.pop %v3564
      %v4155 = vmul.f32 1.0, %v4154
      %v4156 = vrcp.pop %v3565
      %v4157 = vmul.f32 1.0, %v4156
      %v4158 = vrcp.pop %v3566
      %v4159 = vmul.f32 1.0, %v4158
      %v4160 = vrcp.pop %v3567
      %v4161 = vmul.f32 1.0, %v4160
      %v4162 = vrcp.pop %v3568
      %v4163 = vmul.f32 1.0, %v4162
      %v4164 = vrcp.pop %v3569
      %v4165 = vmul.f32 1.0, %v4164
      %v4166 = vrcp.pop %v3570
      %v4167 = vmul.f32 1.0, %v4166
      %v4168 = vrcp.pop %v3571
      %v4169 = vmul.f32 1.0, %v4168
      %v4170 = vrcp.pop %v3572
      %v4171 = vmul.f32 1.0, %v4170
      %v4172 = vrcp.pop %v3573
      %v4173 = vmul.f32 1.0, %v4172
      %v4174 = vrcp.pop %v3574
      %v4175 = vmul.f32 1.0, %v4174
      %v4176 = vrcp.pop %v3575
      %v4177 = vmul.f32 1.0, %v4176
      %v4178 = vrcp.pop %v3576
      %v4179 = vmul.f32 1.0, %v4178
      %v4180 = vrcp.pop %v3577
      %v4181 = vmul.f32 1.0, %v4180
      %v4182 = vrcp.pop %v3578
      %v4183 = vmul.f32 1.0, %v4182
      %v4184 = vrcp.pop %v3579
      %v4185 = vmul.f32 1.0, %v4184
      %v4186 = vrcp.pop %v3580
      %v4187 = vmul.f32 1.0, %v4186
      %v4188 = vrcp.pop %v3581
      %v4189 = vmul.f32 1.0, %v4188
      %v4190 = vrcp.pop %v3582
      %v4191 = vmul.f32 1.0, %v4190
      %v4192 = vrcp.pop %v3583
      %v4193 = vmul.f32 1.0, %v4192
      %v4194 = vrcp.pop %v3584
      %v4195 = vmul.f32 1.0, %v4194
      %v4196 = vrcp.pop %v3585
      %v4197 = vmul.f32 1.0, %v4196
      %v4198 = vrcp.pop %v3586
      %v4199 = vmul.f32 1.0, %v4198
      %v4200 = vrcp.pop %v3587
      %v4201 = vmul.f32 1.0, %v4200
      %v4202 = vrcp.pop %v3588
      %v4203 = vmul.f32 1.0, %v4202
      %v4204 = vrcp.pop %v3589
      %v4205 = vmul.f32 1.0, %v4204
      %v4206 = vrcp.pop %v3590
      %v4207 = vmul.f32 1.0, %v4206
      %v4208 = vrcp.pop %v3591
      %v4209 = vmul.f32 1.0, %v4208
      %v4210 = vrcp.pop %v3592
      %v4211 = vmul.f32 1.0, %v4210
      %v4212 = vrcp.pop %v3593
      %v4213 = vmul.f32 1.0, %v4212
      %v4214 = vrcp.pop %v3594
      %v4215 = vmul.f32 1.0, %v4214
      %v4216 = vrcp.pop %v3595
      %v4217 = vmul.f32 1.0, %v4216
      %v4218 = vrcp.pop %v3596
      %v4219 = vmul.f32 1.0, %v4218
      %v4220 = vrcp.pop %v3597
      %v4221 = vmul.f32 1.0, %v4220
      %v4222 = vrcp.pop %v3598
      %v4223 = vmul.f32 1.0, %v4222
      %v4224 = vrcp.pop %v3599
      %v4225 = vmul.f32 1.0, %v4224
      %v4226 = vrcp.pop %v3600
      %v4227 = vmul.f32 1.0, %v4226
      %v4228 = vrcp.pop %v3601
      %v4229 = vmul.f32 1.0, %v4228
      %v4230 = vrcp.pop %v3602
      %v4231 = vmul.f32 1.0, %v4230
      %v4232 = vrcp.pop %v3603
      %v4233 = vmul.f32 1.0, %v4232
      %v4234 = vrcp.pop %v3604
      %v4235 = vmul.f32 1.0, %v4234
      %v4236 = vrcp.pop %v3605
      %v4237 = vmul.f32 1.0, %v4236
      %v4238 = vrcp.pop %v3606
      %v4239 = vmul.f32 1.0, %v4238
      %v4240 = vrcp.pop %v3607
      %v4241 = vmul.f32 1.0, %v4240
      %v4242 = vrcp.pop %v3608
      %v4243 = vmul.f32 1.0, %v4242
      %v4244 = vrcp.pop %v3609
      %v4245 = vmul.f32 1.0, %v4244
      %v4246 = vrcp.pop %v3610
      %v4247 = vmul.f32 1.0, %v4246
      %v4248 = vrcp.pop %v3611
      %v4249 = vmul.f32 1.0, %v4248
      %v4250 = vrcp.pop %v3612
      %v4251 = vmul.f32 1.0, %v4250
      %v4252 = vrcp.pop %v3613
      %v4253 = vmul.f32 1.0, %v4252
      %v4254 = vrcp.pop %v3614
      %v4255 = vmul.f32 1.0, %v4254
      %v4256 = vrcp.pop %v3615
      %v4257 = vmul.f32 1.0, %v4256
      %v4258 = vrcp.pop %v3616
      %v4259 = vmul.f32 1.0, %v4258
      %v4260 = vrcp.pop %v3617
      %v4261 = vmul.f32 1.0, %v4260
      %v4262 = vrcp.pop %v3618
      %v4263 = vmul.f32 1.0, %v4262
      %v4264 = vrcp.pop %v3619
      %v4265 = vmul.f32 1.0, %v4264
      %v4266 = vrcp.pop %v3620
      %v4267 = vmul.f32 1.0, %v4266
      %v4268 = vrcp.pop %v3621
      %v4269 = vmul.f32 1.0, %v4268
      %v4270 = vrcp.pop %v3622
      %v4271 = vmul.f32 1.0, %v4270
      %v4272 = vrcp.pop %v3623
      %v4273 = vmul.f32 1.0, %v4272
      %v4274 = vrcp.pop %v3624
      %v4275 = vmul.f32 1.0, %v4274
      %v4276 = vrcp.pop %v3625
      %v4277 = vmul.f32 1.0, %v4276
      %v4278 = vrcp.pop %v3626
      %v4279 = vmul.f32 1.0, %v4278
      %v4280 = vrcp.pop %v3627
      %v4281 = vmul.f32 1.0, %v4280
      %v4282 = vrcp.pop %v3628
      %v4283 = vmul.f32 1.0, %v4282
      %v4284 = vrcp.pop %v3629
      %v4285 = vmul.f32 1.0, %v4284
      %v4286 = vrcp.pop %v3630
      %v4287 = vmul.f32 1.0, %v4286
      %v4288 = vrcp.pop %v3631
      %v4289 = vmul.f32 1.0, %v4288
      %v4290 = vrcp.pop %v3632
      %v4291 = vmul.f32 1.0, %v4290
      %v4292 = vrcp.pop %v3633
      %v4293 = vmul.f32 1.0, %v4292
      %v4294 = vrcp.pop %v3634
      %v4295 = vmul.f32 1.0, %v4294
      %v4296 = vrcp.pop %v3635
      %v4297 = vmul.f32 1.0, %v4296
      %v4298 = vrcp.pop %v3636
      %v4299 = vmul.f32 1.0, %v4298
      %v4300 = vrcp.pop %v3637
      %v4301 = vmul.f32 1.0, %v4300
      %v4302 = vrcp.pop %v3638
      %v4303 = vmul.f32 1.0, %v4302
      %v4304 = vrcp.pop %v3639
      %v4305 = vmul.f32 1.0, %v4304
      %v4306 = vrcp.pop %v3640
      %v4307 = vmul.f32 1.0, %v4306
      %v4308 = vrcp.pop %v3641
      %v4309 = vmul.f32 1.0, %v4308
      %v4310 = vrcp.pop %v3642
      %v4311 = vmul.f32 1.0, %v4310
      %v4312 = vrcp.pop %v3643
      %v4313 = vmul.f32 1.0, %v4312
      %v4314 = vrcp.pop %v3644
      %v4315 = vmul.f32 1.0, %v4314
      %v4316 = vrcp.pop %v3645
      %v4317 = vmul.f32 1.0, %v4316
      %v4318 = vrcp.pop %v3646
      %v4319 = vmul.f32 1.0, %v4318
      %v4320 = vrcp.pop %v3647
      %v4321 = vmul.f32 1.0, %v4320
      %v4322 = vrcp.pop %v3648
      %v4323 = vmul.f32 1.0, %v4322
      %v4324 = vrcp.pop %v3649
      %v4325 = vmul.f32 1.0, %v4324
      %v4326 = vrcp.pop %v3650
      %v4327 = vmul.f32 1.0, %v4326
      %v4328 = vrcp.pop %v3651
      %v4329 = vmul.f32 1.0, %v4328
      %v4330 = vrcp.pop %v3652
      %v4331 = vmul.f32 1.0, %v4330
      %v4332 = vrcp.pop %v3653
      %v4333 = vmul.f32 1.0, %v4332
      %v4334 = vrcp.pop %v3654
      %v4335 = vmul.f32 1.0, %v4334
      %v4336 = vrcp.pop %v3655
      %v4337 = vmul.f32 1.0, %v4336
      %v4338 = vrcp.pop %v3656
      %v4339 = vmul.f32 1.0, %v4338
      %v4340 = vrcp.pop %v3657
      %v4341 = vmul.f32 1.0, %v4340
      %v4342 = vrcp.pop %v3658
      %v4343 = vmul.f32 1.0, %v4342
      %v4344 = vrcp.pop %v3659
      %v4345 = vmul.f32 1.0, %v4344
      %v4346 = vrcp.pop %v3660
      %v4347 = vmul.f32 1.0, %v4346
      %v4348 = vrcp.pop %v3661
      %v4349 = vmul.f32 1.0, %v4348
      %v4350 = vrcp.pop %v3662
      %v4351 = vmul.f32 1.0, %v4350
      %v4352 = vrcp.pop %v3663
      %v4353 = vmul.f32 1.0, %v4352
      %v4354 = vrcp.pop %v3664
      %v4355 = vmul.f32 1.0, %v4354
      %v4356 = vrcp.pop %v3665
      %v4357 = vmul.f32 1.0, %v4356
      %v4358 = vrcp.pop %v3666
      %v4359 = vmul.f32 1.0, %v4358
      %v4360 = vrcp.pop %v3667
      %v4361 = vmul.f32 1.0, %v4360
      %v4362 = vrcp.pop %v3668
      %v4363 = vmul.f32 1.0, %v4362
      %v4364 = vrcp.pop %v3669
      %v4365 = vmul.f32 1.0, %v4364
      %v4366 = vrcp.pop %v3670
      %v4367 = vmul.f32 1.0, %v4366
      %v4368 = vrcp.pop %v3671
      %v4369 = vmul.f32 1.0, %v4368
      %v4370 = vrcp.pop %v3672
      %v4371 = vmul.f32 1.0, %v4370
      %v4372 = vrcp.pop %v3673
      %v4373 = vmul.f32 1.0, %v4372
      %v4374 = vrcp.pop %v3674
      %v4375 = vmul.f32 1.0, %v4374
      %v4376 = vrcp.pop %v3675
      %v4377 = vmul.f32 1.0, %v4376
      %v4378 = vrcp.pop %v3676
      %v4379 = vmul.f32 1.0, %v4378
      %v4380 = vrcp.pop %v3677
      %v4381 = vmul.f32 1.0, %v4380
      %v4382 = vmul.f32 %v1179, %v3679
      %v4383 = vmul.f32 %v1181, %v3681
      %v4384 = vmul.f32 %v1372, %v3683
      %v4385 = vmul.f32 %v1374, %v3685
      %v4386 = vmul.f32 %v1565, %v3687
      %v4387 = vmul.f32 %v1567, %v3689
      %v4388 = vmul.f32 %v1758, %v3691
      %v4389 = vmul.f32 %v1760, %v3693
      %v4390 = vmul.f32 %v1951, %v3695
      %v4391 = vmul.f32 %v1953, %v3697
      %v4392 = vmul.f32 %v2144, %v3699
      %v4393 = vmul.f32 %v1183, %v3701
      %v4394 = vmul.f32 %v1185, %v3703
      %v4395 = vmul.f32 %v1376, %v3705
      %v4396 = vmul.f32 %v1378, %v3707
      %v4397 = vmul.f32 %v1569, %v3709
      %v4398 = vmul.f32 %v1571, %v3711
      %v4399 = vmul.f32 %v1762, %v3713
      %v4400 = vmul.f32 %v1764, %v3715
      %v4401 = vmul.f32 %v1955, %v3717
      %v4402 = vmul.f32 %v1957, %v3719
      %v4403 = vmul.f32 %v2147, %v3721
      %v4404 = vmul.f32 %v1189, %v3723
      %v4405 = vmul.f32 %v1191, %v3725
      %v4406 = vmul.f32 %v1382, %v3727
      %v4407 = vmul.f32 %v1384, %v3729
      %v4408 = vmul.f32 %v1575, %v3731
      %v4409 = vmul.f32 %v1577, %v3733
      %v4410 = vmul.f32 %v1768, %v3735
      %v4411 = vmul.f32 %v1770, %v3737
      %v4412 = vmul.f32 %v1961, %v3739
      %v4413 = vmul.f32 %v1963, %v3741
      %v4414 = vmul.f32 %v2152, %v3743
      %v4415 = vmul.f32 %v1193, %v3745
      %v4416 = vmul.f32 %v1195, %v3747
      %v4417 = vmul.f32 %v1386, %v3749
      %v4418 = vmul.f32 %v1388, %v3751
      %v4419 = vmul.f32 %v1579, %v3753
      %v4420 = vmul.f32 %v1581, %v3755
      %v4421 = vmul.f32 %v1772, %v3757
      %v4422 = vmul.f32 %v1774, %v3759
      %v4423 = vmul.f32 %v1965, %v3761
      %v4424 = vmul.f32 %v1967, %v3763
      %v4425 = vmul.f32 %v2155, %v3765
      %v4426 = vmul.f32 %v1199, %v3767
      %v4427 = vmul.f32 %v1201, %v3769
      %v4428 = vmul.f32 %v1392, %v3771
      %v4429 = vmul.f32 %v1394, %v3773
      %v4430 = vmul.f32 %v1585, %v3775
      %v4431 = vmul.f32 %v1587, %v3777
      %v4432 = vmul.f32 %v1778, %v3779
      %v4433 = vmul.f32 %v1780, %v3781
      %v4434 = vmul.f32 %v1971, %v3783
      %v4435 = vmul.f32 %v1973, %v3785
      %v4436 = vmul.f32 %v2160, %v3787
      %v4437 = vmul.f32 %v1203, %v3789
      %v4438 = vmul.f32 %v1205, %v3791
      %v4439 = vmul.f32 %v1396, %v3793
      %v4440 = vmul.f32 %v1398, %v3795
      %v4441 = vmul.f32 %v1589, %v3797
      %v4442 = vmul.f32 %v1591, %v3799
      %v4443 = vmul.f32 %v1782, %v3801
      %v4444 = vmul.f32 %v1784, %v3803
      %v4445 = vmul.f32 %v1975, %v3805
      %v4446 = vmul.f32 %v1977, %v3807
      %v4447 = vmul.f32 %v2163, %v3809
      %v4448 = vmul.f32 %v1209, %v3811
      %v4449 = vmul.f32 %v1211, %v3813
      %v4450 = vmul.f32 %v1402, %v3815
      %v4451 = vmul.f32 %v1404, %v3817
      %v4452 = vmul.f32 %v1595, %v3819
      %v4453 = vmul.f32 %v1597, %v3821
      %v4454 = vmul.f32 %v1788, %v3823
      %v4455 = vmul.f32 %v1790, %v3825
      %v4456 = vmul.f32 %v1981, %v3827
      %v4457 = vmul.f32 %v1983, %v3829
      %v4458 = vmul.f32 %v2168, %v3831
      %v4459 = vmul.f32 %v1213, %v3833
      %v4460 = vmul.f32 %v1215, %v3835
      %v4461 = vmul.f32 %v1406, %v3837
      %v4462 = vmul.f32 %v1408, %v3839
      %v4463 = vmul.f32 %v1599, %v3841
      %v4464 = vmul.f32 %v1601, %v3843
      %v4465 = vmul.f32 %v1792, %v3845
      %v4466 = vmul.f32 %v1794, %v3847
      %v4467 = vmul.f32 %v1985, %v3849
      %v4468 = vmul.f32 %v1987, %v3851
      %v4469 = vmul.f32 %v2171, %v3853
      %v4470 = vmul.f32 %v1219, %v3855
      %v4471 = vmul.f32 %v1221, %v3857
      %v4472 = vmul.f32 %v1412, %v3859
      %v4473 = vmul.f32 %v1414, %v3861
      %v4474 = vmul.f32 %v1605, %v3863
      %v4475 = vmul.f32 %v1607, %v3865
      %v4476 = vmul.f32 %v1798, %v3867
      %v4477 = vmul.f32 %v1800, %v3869
      %v4478 = vmul.f32 %v1991, %v3871
      %v4479 = vmul.f32 %v1993, %v3873
      %v4480 = vmul.f32 %v2176, %v3875
      %v4481 = vmul.f32 %v1223, %v3877
      %v4482 = vmul.f32 %v1225, %v3879
      %v4483 = vmul.f32 %v1416, %v3881
      %v4484 = vmul.f32 %v1418, %v3883
      %v4485 = vmul.f32 %v1609, %v3885
      %v4486 = vmul.f32 %v1611, %v3887
      %v4487 = vmul.f32 %v1802, %v3889
      %v4488 = vmul.f32 %v1804, %v3891
      %v4489 = vmul.f32 %v1995, %v3893
      %v4490 = vmul.f32 %v1997, %v3895
      %v4491 = vmul.f32 %v2179, %v3897
      %v4492 = vmul.f32 %v1229, %v3899
      %v4493 = vmul.f32 %v1231, %v3901
      %v4494 = vmul.f32 %v1422, %v3903
      %v4495 = vmul.f32 %v1424, %v3905
      %v4496 = vmul.f32 %v1615, %v3907
      %v4497 = vmul.f32 %v1617, %v3909
      %v4498 = vmul.f32 %v1808, %v3911
      %v4499 = vmul.f32 %v1810, %v3913
      %v4500 = vmul.f32 %v2001, %v3915
      %v4501 = vmul.f32 %v2003, %v3917
      %v4502 = vmul.f32 %v2184, %v3919
      %v4503 = vmul.f32 %v1233, %v3921
      %v4504 = vmul.f32 %v1235, %v3923
      %v4505 = vmul.f32 %v1426, %v3925
      %v4506 = vmul.f32 %v1428, %v3927
      %v4507 = vmul.f32 %v1619, %v3929
      %v4508 = vmul.f32 %v1621, %v3931
      %v4509 = vmul.f32 %v1812, %v3933
      %v4510 = vmul.f32 %v1814, %v3935
      %v4511 = vmul.f32 %v2005, %v3937
      %v4512 = vmul.f32 %v2007, %v3939
      %v4513 = vmul.f32 %v2187, %v3941
      %v4514 = vmul.f32 %v1239, %v3943
      %v4515 = vmul.f32 %v1241, %v3945
      %v4516 = vmul.f32 %v1432, %v3947
      %v4517 = vmul.f32 %v1434, %v3949
      %v4518 = vmul.f32 %v1625, %v3951
      %v4519 = vmul.f32 %v1627, %v3953
      %v4520 = vmul.f32 %v1818, %v3955
      %v4521 = vmul.f32 %v1820, %v3957
      %v4522 = vmul.f32 %v2011, %v3959
      %v4523 = vmul.f32 %v2013, %v3961
      %v4524 = vmul.f32 %v2192, %v3963
      %v4525 = vmul.f32 %v1243, %v3965
      %v4526 = vmul.f32 %v1245, %v3967
      %v4527 = vmul.f32 %v1436, %v3969
      %v4528 = vmul.f32 %v1438, %v3971
      %v4529 = vmul.f32 %v1629, %v3973
      %v4530 = vmul.f32 %v1631, %v3975
      %v4531 = vmul.f32 %v1822, %v3977
      %v4532 = vmul.f32 %v1824, %v3979
      %v4533 = vmul.f32 %v2015, %v3981
      %v4534 = vmul.f32 %v2017, %v3983
      %v4535 = vmul.f32 %v2195, %v3985
      %v4536 = vmul.f32 %v1249, %v3987
      %v4537 = vmul.f32 %v1251, %v3989
      %v4538 = vmul.f32 %v1442, %v3991
      %v4539 = vmul.f32 %v1444, %v3993
      %v4540 = vmul.f32 %v1635, %v3995
      %v4541 = vmul.f32 %v1637, %v3997
      %v4542 = vmul.f32 %v1828, %v3999
      %v4543 = vmul.f32 %v1830, %v4001
      %v4544 = vmul.f32 %v2021, %v4003
      %v4545 = vmul.f32 %v2023, %v4005
      %v4546 = vmul.f32 %v2200, %v4007
      %v4547 = vmul.f32 %v1253, %v4009
      %v4548 = vmul.f32 %v1255, %v4011
      %v4549 = vmul.f32 %v1446, %v4013
      %v4550 = vmul.f32 %v1448, %v4015
      %v4551 = vmul.f32 %v1639, %v4017
      %v4552 = vmul.f32 %v1641, %v4019
      %v4553 = vmul.f32 %v1832, %v4021
      %v4554 = vmul.f32 %v1834, %v4023
      %v4555 = vmul.f32 %v2025, %v4025
      %v4556 = vmul.f32 %v2027, %v4027
      %v4557 = vmul.f32 %v2203, %v4029
      %v4558 = vmul.f32 %v1259, %v4031
      %v4559 = vmul.f32 %v1261, %v4033
      %v4560 = vmul.f32 %v1452, %v4035
      %v4561 = vmul.f32 %v1454, %v4037
      %v4562 = vmul.f32 %v1645, %v4039
      %v4563 = vmul.f32 %v1647, %v4041
      %v4564 = vmul.f32 %v1838, %v4043
      %v4565 = vmul.f32 %v1840, %v4045
      %v4566 = vmul.f32 %v2031, %v4047
      %v4567 = vmul.f32 %v2033, %v4049
      %v4568 = vmul.f32 %v2208, %v4051
      %v4569 = vmul.f32 %v1263, %v4053
      %v4570 = vmul.f32 %v1265, %v4055
      %v4571 = vmul.f32 %v1456, %v4057
      %v4572 = vmul.f32 %v1458, %v4059
      %v4573 = vmul.f32 %v1649, %v4061
      %v4574 = vmul.f32 %v1651, %v4063
      %v4575 = vmul.f32 %v1842, %v4065
      %v4576 = vmul.f32 %v1844, %v4067
      %v4577 = vmul.f32 %v2035, %v4069
      %v4578 = vmul.f32 %v2037, %v4071
      %v4579 = vmul.f32 %v2211, %v4073
      %v4580 = vmul.f32 %v1269, %v4075
      %v4581 = vmul.f32 %v1271, %v4077
      %v4582 = vmul.f32 %v1462, %v4079
      %v4583 = vmul.f32 %v1464, %v4081
      %v4584 = vmul.f32 %v1655, %v4083
      %v4585 = vmul.f32 %v1657, %v4085
      %v4586 = vmul.f32 %v1848, %v4087
      %v4587 = vmul.f32 %v1850, %v4089
      %v4588 = vmul.f32 %v2041, %v4091
      %v4589 = vmul.f32 %v2043, %v4093
      %v4590 = vmul.f32 %v2216, %v4095
      %v4591 = vmul.f32 %v1273, %v4097
      %v4592 = vmul.f32 %v1275, %v4099
      %v4593 = vmul.f32 %v1466, %v4101
      %v4594 = vmul.f32 %v1468, %v4103
      %v4595 = vmul.f32 %v1659, %v4105
      %v4596 = vmul.f32 %v1661, %v4107
      %v4597 = vmul.f32 %v1852, %v4109
      %v4598 = vmul.f32 %v1854, %v4111
      %v4599 = vmul.f32 %v2045, %v4113
      %v4600 = vmul.f32 %v2047, %v4115
      %v4601 = vmul.f32 %v2219, %v4117
      %v4602 = vmul.f32 %v1279, %v4119
      %v4603 = vmul.f32 %v1281, %v4121
      %v4604 = vmul.f32 %v1472, %v4123
      %v4605 = vmul.f32 %v1474, %v4125
      %v4606 = vmul.f32 %v1665, %v4127
      %v4607 = vmul.f32 %v1667, %v4129
      %v4608 = vmul.f32 %v1858, %v4131
      %v4609 = vmul.f32 %v1860, %v4133
      %v4610 = vmul.f32 %v2051, %v4135
      %v4611 = vmul.f32 %v2053, %v4137
      %v4612 = vmul.f32 %v2224, %v4139
      %v4613 = vmul.f32 %v1283, %v4141
      %v4614 = vmul.f32 %v1285, %v4143
      %v4615 = vmul.f32 %v1476, %v4145
      %v4616 = vmul.f32 %v1478, %v4147
      %v4617 = vmul.f32 %v1669, %v4149
      %v4618 = vmul.f32 %v1671, %v4151
      %v4619 = vmul.f32 %v1862, %v4153
      %v4620 = vmul.f32 %v1864, %v4155
      %v4621 = vmul.f32 %v2055, %v4157
      %v4622 = vmul.f32 %v2057, %v4159
      %v4623 = vmul.f32 %v2227, %v4161
      %v4624 = vmul.f32 %v1289, %v4163
      %v4625 = vmul.f32 %v1291, %v4165
      %v4626 = vmul.f32 %v1482, %v4167
      %v4627 = vmul.f32 %v1484, %v4169
      %v4628 = vmul.f32 %v1675, %v4171
      %v4629 = vmul.f32 %v1677, %v4173
      %v4630 = vmul.f32 %v1868, %v4175
      %v4631 = vmul.f32 %v1870, %v4177
      %v4632 = vmul.f32 %v2061, %v4179
      %v4633 = vmul.f32 %v2063, %v4181
      %v4634 = vmul.f32 %v2232, %v4183
      %v4635 = vmul.f32 %v1293, %v4185
      %v4636 = vmul.f32 %v1295, %v4187
      %v4637 = vmul.f32 %v1486, %v4189
      %v4638 = vmul.f32 %v1488, %v4191
      %v4639 = vmul.f32 %v1679, %v4193
      %v4640 = vmul.f32 %v1681, %v4195
      %v4641 = vmul.f32 %v1872, %v4197
      %v4642 = vmul.f32 %v1874, %v4199
      %v4643 = vmul.f32 %v2065, %v4201
      %v4644 = vmul.f32 %v2067, %v4203
      %v4645 = vmul.f32 %v2235, %v4205
      %v4646 = vmul.f32 %v1299, %v4207
      %v4647 = vmul.f32 %v1301, %v4209
      %v4648 = vmul.f32 %v1492, %v4211
      %v4649 = vmul.f32 %v1494, %v4213
      %v4650 = vmul.f32 %v1685, %v4215
      %v4651 = vmul.f32 %v1687, %v4217
      %v4652 = vmul.f32 %v1878, %v4219
      %v4653 = vmul.f32 %v1880, %v4221
      %v4654 = vmul.f32 %v2071, %v4223
      %v4655 = vmul.f32 %v2073, %v4225
      %v4656 = vmul.f32 %v2240, %v4227
      %v4657 = vmul.f32 %v1303, %v4229
      %v4658 = vmul.f32 %v1305, %v4231
      %v4659 = vmul.f32 %v1496, %v4233
      %v4660 = vmul.f32 %v1498, %v4235
      %v4661 = vmul.f32 %v1689, %v4237
      %v4662 = vmul.f32 %v1691, %v4239
      %v4663 = vmul.f32 %v1882, %v4241
      %v4664 = vmul.f32 %v1884, %v4243
      %v4665 = vmul.f32 %v2075, %v4245
      %v4666 = vmul.f32 %v2077, %v4247
      %v4667 = vmul.f32 %v2243, %v4249
      %v4668 = vmul.f32 %v1309, %v4251
      %v4669 = vmul.f32 %v1311, %v4253
      %v4670 = vmul.f32 %v1502, %v4255
      %v4671 = vmul.f32 %v1504, %v4257
      %v4672 = vmul.f32 %v1695, %v4259
      %v4673 = vmul.f32 %v1697, %v4261
      %v4674 = vmul.f32 %v1888, %v4263
      %v4675 = vmul.f32 %v1890, %v4265
      %v4676 = vmul.f32 %v2081, %v4267
      %v4677 = vmul.f32 %v2083, %v4269
      %v4678 = vmul.f32 %v2248, %v4271
      %v4679 = vmul.f32 %v1313, %v4273
      %v4680 = vmul.f32 %v1315, %v4275
      %v4681 = vmul.f32 %v1506, %v4277
      %v4682 = vmul.f32 %v1508, %v4279
      %v4683 = vmul.f32 %v1699, %v4281
      %v4684 = vmul.f32 %v1701, %v4283
      %v4685 = vmul.f32 %v1892, %v4285
      %v4686 = vmul.f32 %v1894, %v4287
      %v4687 = vmul.f32 %v2085, %v4289
      %v4688 = vmul.f32 %v2087, %v4291
      %v4689 = vmul.f32 %v2251, %v4293
      %v4690 = vmul.f32 %v1319, %v4295
      %v4691 = vmul.f32 %v1321, %v4297
      %v4692 = vmul.f32 %v1512, %v4299
      %v4693 = vmul.f32 %v1514, %v4301
      %v4694 = vmul.f32 %v1705, %v4303
      %v4695 = vmul.f32 %v1707, %v4305
      %v4696 = vmul.f32 %v1898, %v4307
      %v4697 = vmul.f32 %v1900, %v4309
      %v4698 = vmul.f32 %v2091, %v4311
      %v4699 = vmul.f32 %v2093, %v4313
      %v4700 = vmul.f32 %v2256, %v4315
      %v4701 = vmul.f32 %v1323, %v4317
      %v4702 = vmul.f32 %v1325, %v4319
      %v4703 = vmul.f32 %v1516, %v4321
      %v4704 = vmul.f32 %v1518, %v4323
      %v4705 = vmul.f32 %v1709, %v4325
      %v4706 = vmul.f32 %v1711, %v4327
      %v4707 = vmul.f32 %v1902, %v4329
      %v4708 = vmul.f32 %v1904, %v4331
      %v4709 = vmul.f32 %v2095, %v4333
      %v4710 = vmul.f32 %v2097, %v4335
      %v4711 = vmul.f32 %v2259, %v4337
      %v4712 = vmul.f32 %v1329, %v4339
      %v4713 = vmul.f32 %v1331, %v4341
      %v4714 = vmul.f32 %v1522, %v4343
      %v4715 = vmul.f32 %v1524, %v4345
      %v4716 = vmul.f32 %v1715, %v4347
      %v4717 = vmul.f32 %v1717, %v4349
      %v4718 = vmul.f32 %v1908, %v4351
      %v4719 = vmul.f32 %v1910, %v4353
      %v4720 = vmul.f32 %v2101, %v4355
      %v4721 = vmul.f32 %v2103, %v4357
      %v4722 = vmul.f32 %v2264, %v4359
      %v4723 = vmul.f32 %v1333, %v4361
      %v4724 = vmul.f32 %v1335, %v4363
      %v4725 = vmul.f32 %v1526, %v4365
      %v4726 = vmul.f32 %v1528, %v4367
      %v4727 = vmul.f32 %v1719, %v4369
      %v4728 = vmul.f32 %v1721, %v4371
      %v4729 = vmul.f32 %v1912, %v4373
      %v4730 = vmul.f32 %v1914, %v4375
      %v4731 = vmul.f32 %v2105, %v4377
      %v4732 = vmul.f32 %v2107, %v4379
      %v4733 = vmul.f32 %v2267, %v4381
      %v4734 = vld [vmem:[#allocation2] sm:$0xff]
      %v4735 = vld [vmem:[#allocation2 + $0x8] sm:$0x7]
      %v4736 = vadd.f32 %v4382, %v4393
      %v4737 = vadd.f32 %v4736, %v4404
      %v4738 = vadd.f32 %v4737, %v4415
      %v4739 = vadd.f32 %v4738, %v4426
      %v4740 = vadd.f32 %v4739, %v4437
      %v4741 = vadd.f32 %v4740, %v4448
      %v4742 = vadd.f32 %v4741, %v4459
      %v4743 = vadd.f32 %v4742, %v4470
      %v4744 = vadd.f32 %v4743, %v4481
      %v4745 = vadd.f32 %v4744, %v4492
      %v4746 = vadd.f32 %v4745, %v4503
      %v4747 = vadd.f32 %v4746, %v4514
      %v4748 = vadd.f32 %v4747, %v4525
      %v4749 = vadd.f32 %v4748, %v4536
      %v4750 = vadd.f32 %v4749, %v4547
      %v4751 = vadd.f32 %v4750, %v4558
      %v4752 = vadd.f32 %v4751, %v4569
      %v4753 = vadd.f32 %v4752, %v4580
      %v4754 = vadd.f32 %v4753, %v4591
      %v4755 = vadd.f32 %v4754, %v4602
      %v4756 = vadd.f32 %v4755, %v4613
      %v4757 = vadd.f32 %v4756, %v4624
      %v4758 = vadd.f32 %v4757, %v4635
      %v4759 = vadd.f32 %v4758, %v4646
      %v4760 = vadd.f32 %v4759, %v4657
      %v4761 = vadd.f32 %v4760, %v4668
      %v4762 = vadd.f32 %v4761, %v4679
      %v4763 = vadd.f32 %v4762, %v4690
      %v4764 = vadd.f32 %v4763, %v4701
      %v4765 = vadd.f32 %v4764, %v4712
      %v4766 = vadd.f32 %v4765, %v4723
      %v4767 = vrot.slane %v4766, 4
      %v4768 = vadd.f32 %v4766, %v4767
      %v4769 = vrot.slane %v4768, 2
      %v4770 = vadd.f32 %v4768, %v4769
      %v4771 = vrot.slane %v4770, 1
      %v4772 = vadd.f32 %v4770, %v4771
      %v4773 = vadd.f32 %v4383, %v4394
      %v4774 = vadd.f32 %v4773, %v4405
      %v4775 = vadd.f32 %v4774, %v4416
      %v4776 = vadd.f32 %v4775, %v4427
      %v4777 = vadd.f32 %v4776, %v4438
      %v4778 = vadd.f32 %v4777, %v4449
      %v4779 = vadd.f32 %v4778, %v4460
      %v4780 = vadd.f32 %v4779, %v4471
      %v4781 = vadd.f32 %v4780, %v4482
      %v4782 = vadd.f32 %v4781, %v4493
      %v4783 = vadd.f32 %v4782, %v4504
      %v4784 = vadd.f32 %v4783, %v4515
      %v4785 = vadd.f32 %v4784, %v4526
      %v4786 = vadd.f32 %v4785, %v4537
      %v4787 = vadd.f32 %v4786, %v4548
      %v4788 = vadd.f32 %v4787, %v4559
      %v4789 = vadd.f32 %v4788, %v4570
      %v4790 = vadd.f32 %v4789, %v4581
      %v4791 = vadd.f32 %v4790, %v4592
      %v4792 = vadd.f32 %v4791, %v4603
      %v4793 = vadd.f32 %v4792, %v4614
      %v4794 = vadd.f32 %v4793, %v4625
      %v4795 = vadd.f32 %v4794, %v4636
      %v4796 = vadd.f32 %v4795, %v4647
      %v4797 = vadd.f32 %v4796, %v4658
      %v4798 = vadd.f32 %v4797, %v4669
      %v4799 = vadd.f32 %v4798, %v4680
      %v4800 = vadd.f32 %v4799, %v4691
      %v4801 = vadd.f32 %v4800, %v4702
      %v4802 = vadd.f32 %v4801, %v4713
      %v4803 = vadd.f32 %v4802, %v4724
      %v4804 = vrot.slane %v4803, 4
      %v4805 = vadd.f32 %v4803, %v4804
      %v4806 = vrot.slane %v4805, 2
      %v4807 = vadd.f32 %v4805, %v4806
      %v4808 = vrot.slane %v4807, 1
      %v4809 = vadd.f32 %v4807, %v4808
      %v4810 = vadd.f32 %v4384, %v4395
      %v4811 = vadd.f32 %v4810, %v4406
      %v4812 = vadd.f32 %v4811, %v4417
      %v4813 = vadd.f32 %v4812, %v4428
      %v4814 = vadd.f32 %v4813, %v4439
      %v4815 = vadd.f32 %v4814, %v4450
      %v4816 = vadd.f32 %v4815, %v4461
      %v4817 = vadd.f32 %v4816, %v4472
      %v4818 = vadd.f32 %v4817, %v4483
      %v4819 = vadd.f32 %v4818, %v4494
      %v4820 = vadd.f32 %v4819, %v4505
      %v4821 = vadd.f32 %v4820, %v4516
      %v4822 = vadd.f32 %v4821, %v4527
      %v4823 = vadd.f32 %v4822, %v4538
      %v4824 = vadd.f32 %v4823, %v4549
      %v4825 = vadd.f32 %v4824, %v4560
      %v4826 = vadd.f32 %v4825, %v4571
      %v4827 = vadd.f32 %v4826, %v4582
      %v4828 = vadd.f32 %v4827, %v4593
      %v4829 = vadd.f32 %v4828, %v4604
      %v4830 = vadd.f32 %v4829, %v4615
      %v4831 = vadd.f32 %v4830, %v4626
      %v4832 = vadd.f32 %v4831, %v4637
      %v4833 = vadd.f32 %v4832, %v4648
      %v4834 = vadd.f32 %v4833, %v4659
      %v4835 = vadd.f32 %v4834, %v4670
      %v4836 = vadd.f32 %v4835, %v4681
      %v4837 = vadd.f32 %v4836, %v4692
      %v4838 = vadd.f32 %v4837, %v4703
      %v4839 = vadd.f32 %v4838, %v4714
      %v4840 = vadd.f32 %v4839, %v4725
      %v4841 = vrot.slane %v4840, 4
      %v4842 = vadd.f32 %v4840, %v4841
      %v4843 = vrot.slane %v4842, 2
      %v4844 = vadd.f32 %v4842, %v4843
      %v4845 = vrot.slane %v4844, 1
      %v4846 = vadd.f32 %v4844, %v4845
      %v4847 = vadd.f32 %v4385, %v4396
      %v4848 = vadd.f32 %v4847, %v4407
      %v4849 = vadd.f32 %v4848, %v4418
      %v4850 = vadd.f32 %v4849, %v4429
      %v4851 = vadd.f32 %v4850, %v4440
      %v4852 = vadd.f32 %v4851, %v4451
      %v4853 = vadd.f32 %v4852, %v4462
      %v4854 = vadd.f32 %v4853, %v4473
      %v4855 = vadd.f32 %v4854, %v4484
      %v4856 = vadd.f32 %v4855, %v4495
      %v4857 = vadd.f32 %v4856, %v4506
      %v4858 = vadd.f32 %v4857, %v4517
      %v4859 = vadd.f32 %v4858, %v4528
      %v4860 = vadd.f32 %v4859, %v4539
      %v4861 = vadd.f32 %v4860, %v4550
      %v4862 = vadd.f32 %v4861, %v4561
      %v4863 = vadd.f32 %v4862, %v4572
      %v4864 = vadd.f32 %v4863, %v4583
      %v4865 = vadd.f32 %v4864, %v4594
      %v4866 = vadd.f32 %v4865, %v4605
      %v4867 = vadd.f32 %v4866, %v4616
      %v4868 = vadd.f32 %v4867, %v4627
      %v4869 = vadd.f32 %v4868, %v4638
      %v4870 = vadd.f32 %v4869, %v4649
      %v4871 = vadd.f32 %v4870, %v4660
      %v4872 = vadd.f32 %v4871, %v4671
      %v4873 = vadd.f32 %v4872, %v4682
      %v4874 = vadd.f32 %v4873, %v4693
      %v4875 = vadd.f32 %v4874, %v4704
      %v4876 = vadd.f32 %v4875, %v4715
      %v4877 = vadd.f32 %v4876, %v4726
      %v4878 = vrot.slane %v4877, 4
      %v4879 = vadd.f32 %v4877, %v4878
      %v4880 = vrot.slane %v4879, 2
      %v4881 = vadd.f32 %v4879, %v4880
      %v4882 = vrot.slane %v4881, 1
      %v4883 = vadd.f32 %v4881, %v4882
      %v4884 = vadd.f32 %v4386, %v4397
      %v4885 = vadd.f32 %v4884, %v4408
      %v4886 = vadd.f32 %v4885, %v4419
      %v4887 = vadd.f32 %v4886, %v4430
      %v4888 = vadd.f32 %v4887, %v4441
      %v4889 = vadd.f32 %v4888, %v4452
      %v4890 = vadd.f32 %v4889, %v4463
      %v4891 = vadd.f32 %v4890, %v4474
      %v4892 = vadd.f32 %v4891, %v4485
      %v4893 = vadd.f32 %v4892, %v4496
      %v4894 = vadd.f32 %v4893, %v4507
      %v4895 = vadd.f32 %v4894, %v4518
      %v4896 = vadd.f32 %v4895, %v4529
      %v4897 = vadd.f32 %v4896, %v4540
      %v4898 = vadd.f32 %v4897, %v4551
      %v4899 = vadd.f32 %v4898, %v4562
      %v4900 = vadd.f32 %v4899, %v4573
      %v4901 = vadd.f32 %v4900, %v4584
      %v4902 = vadd.f32 %v4901, %v4595
      %v4903 = vadd.f32 %v4902, %v4606
      %v4904 = vadd.f32 %v4903, %v4617
      %v4905 = vadd.f32 %v4904, %v4628
      %v4906 = vadd.f32 %v4905, %v4639
      %v4907 = vadd.f32 %v4906, %v4650
      %v4908 = vadd.f32 %v4907, %v4661
      %v4909 = vadd.f32 %v4908, %v4672
      %v4910 = vadd.f32 %v4909, %v4683
      %v4911 = vadd.f32 %v4910, %v4694
      %v4912 = vadd.f32 %v4911, %v4705
      %v4913 = vadd.f32 %v4912, %v4716
      %v4914 = vadd.f32 %v4913, %v4727
      %v4915 = vrot.slane %v4914, 4
      %v4916 = vadd.f32 %v4914, %v4915
      %v4917 = vrot.slane %v4916, 2
      %v4918 = vadd.f32 %v4916, %v4917
      %v4919 = vrot.slane %v4918, 1
      %v4920 = vadd.f32 %v4918, %v4919
      %v4921 = vadd.f32 %v4387, %v4398
      %v4922 = vadd.f32 %v4921, %v4409
      %v4923 = vadd.f32 %v4922, %v4420
      %v4924 = vadd.f32 %v4923, %v4431
      %v4925 = vadd.f32 %v4924, %v4442
      %v4926 = vadd.f32 %v4925, %v4453
      %v4927 = vadd.f32 %v4926, %v4464
      %v4928 = vadd.f32 %v4927, %v4475
      %v4929 = vadd.f32 %v4928, %v4486
      %v4930 = vadd.f32 %v4929, %v4497
      %v4931 = vadd.f32 %v4930, %v4508
      %v4932 = vadd.f32 %v4931, %v4519
      %v4933 = vadd.f32 %v4932, %v4530
      %v4934 = vadd.f32 %v4933, %v4541
      %v4935 = vadd.f32 %v4934, %v4552
      %v4936 = vadd.f32 %v4935, %v4563
      %v4937 = vadd.f32 %v4936, %v4574
      %v4938 = vadd.f32 %v4937, %v4585
      %v4939 = vadd.f32 %v4938, %v4596
      %v4940 = vadd.f32 %v4939, %v4607
      %v4941 = vadd.f32 %v4940, %v4618
      %v4942 = vadd.f32 %v4941, %v4629
      %v4943 = vadd.f32 %v4942, %v4640
      %v4944 = vadd.f32 %v4943, %v4651
      %v4945 = vadd.f32 %v4944, %v4662
      %v4946 = vadd.f32 %v4945, %v4673
      %v4947 = vadd.f32 %v4946, %v4684
      %v4948 = vadd.f32 %v4947, %v4695
      %v4949 = vadd.f32 %v4948, %v4706
      %v4950 = vadd.f32 %v4949, %v4717
      %v4951 = vadd.f32 %v4950, %v4728
      %v4952 = vrot.slane %v4951, 4
      %v4953 = vadd.f32 %v4951, %v4952
      %v4954 = vrot.slane %v4953, 2
      %v4955 = vadd.f32 %v4953, %v4954
      %v4956 = vrot.slane %v4955, 1
      %v4957 = vadd.f32 %v4955, %v4956
      %v4958 = vadd.f32 %v4388, %v4399
      %v4959 = vadd.f32 %v4958, %v4410
      %v4960 = vadd.f32 %v4959, %v4421
      %v4961 = vadd.f32 %v4960, %v4432
      %v4962 = vadd.f32 %v4961, %v4443
      %v4963 = vadd.f32 %v4962, %v4454
      %v4964 = vadd.f32 %v4963, %v4465
      %v4965 = vadd.f32 %v4964, %v4476
      %v4966 = vadd.f32 %v4965, %v4487
      %v4967 = vadd.f32 %v4966, %v4498
      %v4968 = vadd.f32 %v4967, %v4509
      %v4969 = vadd.f32 %v4968, %v4520
      %v4970 = vadd.f32 %v4969, %v4531
      %v4971 = vadd.f32 %v4970, %v4542
      %v4972 = vadd.f32 %v4971, %v4553
      %v4973 = vadd.f32 %v4972, %v4564
      %v4974 = vadd.f32 %v4973, %v4575
      %v4975 = vadd.f32 %v4974, %v4586
      %v4976 = vadd.f32 %v4975, %v4597
      %v4977 = vadd.f32 %v4976, %v4608
      %v4978 = vadd.f32 %v4977, %v4619
      %v4979 = vadd.f32 %v4978, %v4630
      %v4980 = vadd.f32 %v4979, %v4641
      %v4981 = vadd.f32 %v4980, %v4652
      %v4982 = vadd.f32 %v4981, %v4663
      %v4983 = vadd.f32 %v4982, %v4674
      %v4984 = vadd.f32 %v4983, %v4685
      %v4985 = vadd.f32 %v4984, %v4696
      %v4986 = vadd.f32 %v4985, %v4707
      %v4987 = vadd.f32 %v4986, %v4718
      %v4988 = vadd.f32 %v4987, %v4729
      %v4989 = vrot.slane %v4988, 4
      %v4990 = vadd.f32 %v4988, %v4989
      %v4991 = vrot.slane %v4990, 2
      %v4992 = vadd.f32 %v4990, %v4991
      %v4993 = vrot.slane %v4992, 1
      %v4994 = vadd.f32 %v4992, %v4993
      %v4995 = vadd.f32 %v4389, %v4400
      %v4996 = vadd.f32 %v4995, %v4411
      %v4997 = vadd.f32 %v4996, %v4422
      %v4998 = vadd.f32 %v4997, %v4433
      %v4999 = vadd.f32 %v4998, %v4444
      %v5000 = vadd.f32 %v4999, %v4455
      %v5001 = vadd.f32 %v5000, %v4466
      %v5002 = vadd.f32 %v5001, %v4477
      %v5003 = vadd.f32 %v5002, %v4488
      %v5004 = vadd.f32 %v5003, %v4499
      %v5005 = vadd.f32 %v5004, %v4510
      %v5006 = vadd.f32 %v5005, %v4521
      %v5007 = vadd.f32 %v5006, %v4532
      %v5008 = vadd.f32 %v5007, %v4543
      %v5009 = vadd.f32 %v5008, %v4554
      %v5010 = vadd.f32 %v5009, %v4565
      %v5011 = vadd.f32 %v5010, %v4576
      %v5012 = vadd.f32 %v5011, %v4587
      %v5013 = vadd.f32 %v5012, %v4598
      %v5014 = vadd.f32 %v5013, %v4609
      %v5015 = vadd.f32 %v5014, %v4620
      %v5016 = vadd.f32 %v5015, %v4631
      %v5017 = vadd.f32 %v5016, %v4642
      %v5018 = vadd.f32 %v5017, %v4653
      %v5019 = vadd.f32 %v5018, %v4664
      %v5020 = vadd.f32 %v5019, %v4675
      %v5021 = vadd.f32 %v5020, %v4686
      %v5022 = vadd.f32 %v5021, %v4697
      %v5023 = vadd.f32 %v5022, %v4708
      %v5024 = vadd.f32 %v5023, %v4719
      %v5025 = vadd.f32 %v5024, %v4730
      %v5026 = vrot.slane %v5025, 4
      %v5027 = vadd.f32 %v5025, %v5026
      %v5028 = vrot.slane %v5027, 2
      %v5029 = vadd.f32 %v5027, %v5028
      %v5030 = vrot.slane %v5029, 1
      %v5031 = vadd.f32 %v5029, %v5030
      %v5032 = vadd.f32 %v4390, %v4401
      %v5033 = vadd.f32 %v5032, %v4412
      %v5034 = vadd.f32 %v5033, %v4423
      %v5035 = vadd.f32 %v5034, %v4434
      %v5036 = vadd.f32 %v5035, %v4445
      %v5037 = vadd.f32 %v5036, %v4456
      %v5038 = vadd.f32 %v5037, %v4467
      %v5039 = vadd.f32 %v5038, %v4478
      %v5040 = vadd.f32 %v5039, %v4489
      %v5041 = vadd.f32 %v5040, %v4500
      %v5042 = vadd.f32 %v5041, %v4511
      %v5043 = vadd.f32 %v5042, %v4522
      %v5044 = vadd.f32 %v5043, %v4533
      %v5045 = vadd.f32 %v5044, %v4544
      %v5046 = vadd.f32 %v5045, %v4555
      %v5047 = vadd.f32 %v5046, %v4566
      %v5048 = vadd.f32 %v5047, %v4577
      %v5049 = vadd.f32 %v5048, %v4588
      %v5050 = vadd.f32 %v5049, %v4599
      %v5051 = vadd.f32 %v5050, %v4610
      %v5052 = vadd.f32 %v5051, %v4621
      %v5053 = vadd.f32 %v5052, %v4632
      %v5054 = vadd.f32 %v5053, %v4643
      %v5055 = vadd.f32 %v5054, %v4654
      %v5056 = vadd.f32 %v5055, %v4665
      %v5057 = vadd.f32 %v5056, %v4676
      %v5058 = vadd.f32 %v5057, %v4687
      %v5059 = vadd.f32 %v5058, %v4698
      %v5060 = vadd.f32 %v5059, %v4709
      %v5061 = vadd.f32 %v5060, %v4720
      %v5062 = vadd.f32 %v5061, %v4731
      %v5063 = vrot.slane %v5062, 4
      %v5064 = vadd.f32 %v5062, %v5063
      %v5065 = vrot.slane %v5064, 2
      %v5066 = vadd.f32 %v5064, %v5065
      %v5067 = vrot.slane %v5066, 1
      %v5068 = vadd.f32 %v5066, %v5067
      %v5069 = vadd.f32 %v4391, %v4402
      %v5070 = vadd.f32 %v5069, %v4413
      %v5071 = vadd.f32 %v5070, %v4424
      %v5072 = vadd.f32 %v5071, %v4435
      %v5073 = vadd.f32 %v5072, %v4446
      %v5074 = vadd.f32 %v5073, %v4457
      %v5075 = vadd.f32 %v5074, %v4468
      %v5076 = vadd.f32 %v5075, %v4479
      %v5077 = vadd.f32 %v5076, %v4490
      %v5078 = vadd.f32 %v5077, %v4501
      %v5079 = vadd.f32 %v5078, %v4512
      %v5080 = vadd.f32 %v5079, %v4523
      %v5081 = vadd.f32 %v5080, %v4534
      %v5082 = vadd.f32 %v5081, %v4545
      %v5083 = vadd.f32 %v5082, %v4556
      %v5084 = vadd.f32 %v5083, %v4567
      %v5085 = vadd.f32 %v5084, %v4578
      %v5086 = vadd.f32 %v5085, %v4589
      %v5087 = vadd.f32 %v5086, %v4600
      %v5088 = vadd.f32 %v5087, %v4611
      %v5089 = vadd.f32 %v5088, %v4622
      %v5090 = vadd.f32 %v5089, %v4633
      %v5091 = vadd.f32 %v5090, %v4644
      %v5092 = vadd.f32 %v5091, %v4655
      %v5093 = vadd.f32 %v5092, %v4666
      %v5094 = vadd.f32 %v5093, %v4677
      %v5095 = vadd.f32 %v5094, %v4688
      %v5096 = vadd.f32 %v5095, %v4699
      %v5097 = vadd.f32 %v5096, %v4710
      %v5098 = vadd.f32 %v5097, %v4721
      %v5099 = vadd.f32 %v5098, %v4732
      %v5100 = vrot.slane %v5099, 4
      %v5101 = vadd.f32 %v5099, %v5100
      %v5102 = vrot.slane %v5101, 2
      %v5103 = vadd.f32 %v5101, %v5102
      %v5104 = vrot.slane %v5103, 1
      %v5105 = vadd.f32 %v5103, %v5104
      %v5106 = vadd.f32 %v4392, %v4403
      %v5107 = vadd.f32 %v5106, %v4414
      %v5108 = vadd.f32 %v5107, %v4425
      %v5109 = vadd.f32 %v5108, %v4436
      %v5110 = vadd.f32 %v5109, %v4447
      %v5111 = vadd.f32 %v5110, %v4458
      %v5112 = vadd.f32 %v5111, %v4469
      %v5113 = vadd.f32 %v5112, %v4480
      %v5114 = vadd.f32 %v5113, %v4491
      %v5115 = vadd.f32 %v5114, %v4502
      %v5116 = vadd.f32 %v5115, %v4513
      %v5117 = vadd.f32 %v5116, %v4524
      %v5118 = vadd.f32 %v5117, %v4535
      %v5119 = vadd.f32 %v5118, %v4546
      %v5120 = vadd.f32 %v5119, %v4557
      %v5121 = vadd.f32 %v5120, %v4568
      %v5122 = vadd.f32 %v5121, %v4579
      %v5123 = vadd.f32 %v5122, %v4590
      %v5124 = vadd.f32 %v5123, %v4601
      %v5125 = vadd.f32 %v5124, %v4612
      %v5126 = vadd.f32 %v5125, %v4623
      %v5127 = vadd.f32 %v5126, %v4634
      %v5128 = vadd.f32 %v5127, %v4645
      %v5129 = vadd.f32 %v5128, %v4656
      %v5130 = vadd.f32 %v5129, %v4667
      %v5131 = vadd.f32 %v5130, %v4678
      %v5132 = vadd.f32 %v5131, %v4689
      %v5133 = vadd.f32 %v5132, %v4700
      %v5134 = vadd.f32 %v5133, %v4711
      %v5135 = vadd.f32 %v5134, %v4722
      %v5136 = vadd.f32 %v5135, %v4733
      %v5137 = vrot.slane %v5136, 4
      %v5138 = vadd.f32 %v5136, %v5137
      %v5139 = vrot.slane %v5138, 2
      %v5140 = vadd.f32 %v5138, %v5139
      %v5141 = vrot.slane %v5140, 1
      %v5142 = vadd.f32 %v5140, %v5141
      %v5154 = vcombine.low %v4772, %v4809
      %v5155 = vcombine.low %v4846, %v4883
      %v5156 = vcombine.low %v4920, %v4957
      %v5157 = vcombine.low %v4994, %v5031
      %v5159 = vunpack.c.l.s4 1966171168
      %v5160 = vunpack.c.0.s8 %v5159
      %v5161 = vlaneseq
      %v5162 = vshrl.u32 %v5161, 7
      %v5163 = vsub.s32 %v5160, %v5162
      %v5164 = vrot.slane %v5154, %v5163
      %v5166 = vunpack.c.l.s4 1966171168
      %v5167 = vunpack.c.0.s8 %v5166
      %v5168 = vlaneseq
      %v5169 = vshrl.u32 %v5168, 7
      %v5170 = vsub.s32 %v5167, %v5169
      %v5171 = vrot.slane %v5155, %v5170
      %v5173 = vunpack.c.l.s4 1966171168
      %v5174 = vunpack.c.0.s8 %v5173
      %v5175 = vlaneseq
      %v5176 = vshrl.u32 %v5175, 7
      %v5177 = vsub.s32 %v5174, %v5176
      %v5178 = vrot.slane %v5156, %v5177
      %v5180 = vunpack.c.l.s4 1966171168
      %v5181 = vunpack.c.0.s8 %v5180
      %v5182 = vlaneseq
      %v5183 = vshrl.u32 %v5182, 7
      %v5184 = vsub.s32 %v5181, %v5183
      %v5185 = vrot.slane %v5157, %v5184
      %v5186 = vcombine.low %v5164, %v5171
      %v5187 = vcombine.low %v5178, %v5185
      %v5189 = vunpack.c.l.s4 1966171168
      %v5190 = vunpack.c.0.s8 %v5189
      %v5191 = vlaneseq
      %v5192 = vshrl.u32 %v5191, 7
      %v5193 = vsub.s32 %v5190, %v5192
      %v5194 = vrot.slane %v5186, %v5193
      %v5196 = vunpack.c.l.s4 1966171168
      %v5197 = vunpack.c.0.s8 %v5196
      %v5198 = vlaneseq
      %v5199 = vshrl.u32 %v5198, 7
      %v5200 = vsub.s32 %v5197, %v5199
      %v5201 = vrot.slane %v5187, %v5200
      %v5202 = vcombine.low %v5194, %v5201
      %v5203 = vcombine.low %v5068, %v5105
      %v5205 = vunpack.c.l.s4 1966171168
      %v5206 = vunpack.c.0.s8 %v5205
      %v5207 = vlaneseq
      %v5208 = vshrl.u32 %v5207, 7
      %v5209 = vsub.s32 %v5206, %v5208
      %v5210 = vrot.slane %v5203, %v5209
      %v5212 = vunpack.c.l.s4 1966171168
      %v5213 = vunpack.c.0.s8 %v5212
      %v5214 = vlaneseq
      %v5215 = vshrl.u32 %v5214, 7
      %v5216 = vsub.s32 %v5213, %v5215
      %v5217 = vrot.slane %v5142, %v5216
      %v5218 = vcombine.low %v5210, %v5217
      %v5220 = vunpack.c.l.s4 1966171168
      %v5221 = vunpack.c.0.s8 %v5220
      %v5222 = vlaneseq
      %v5223 = vshrl.u32 %v5222, 7
      %v5224 = vsub.s32 %v5221, %v5223
      %v5225 = vrot.slane %v5218, %v5224
      %v5228 = vadd.f32 %v4734, %v5202
      %v5229 = vadd.f32 %v4735, %v5225
      %5230 = vst [vmem:[#allocation2] sm:$0xff] %v5228
      %v5231 = vlaneseq
      %vm5232 = vcmp.ge.s32.totalorder %v5231, 0
      %vm5233 = vcmp.lt.s32.totalorder %v5231, 384
      %vm5234 = vmand %vm5232, %vm5233
      %5235 = vst.msk [vmem:[#allocation2 + $0x8] sm:$0x7] %vm5234, %v5229
      // Predicated region
      $region53: #{dental_model_forward.1} parent=47 // pred_check
        %p5236 = pneg %p306
      $region54: #{dental_model_forward.1} parent=47 // pred_check_branch
        %5238 = sbr.rel (%p5236) target = $region56
      $region55: #{dental_model_forward.1} parent=47 // pred_region
        %v5239 = vld [vmem:[#allocation2] sm:$0xff]
        %v5240 = vld [vmem:[#allocation2 + $0x8] sm:$0x7]
        %v5241 = vmul.f32 %v5239, 0.00390625
        %v5242 = vmul.f32 %v5240, 0.00390625
        %v5245 = vlaneseq
        %v5246 = vshrl.u32 %v5245, 7
        %v5247 = vsub.s32 0, %v5246
        %v5248 = vrot.slane %v5241, %v5247
        %v5249 = vlaneseq
        %v5250 = vshrl.u32 %v5249, 7
        %v5251 = vsub.s32 1, %v5250
        %v5252 = vrot.slane %v5241, %v5251
        %v5253 = vlaneseq
        %v5254 = vshrl.u32 %v5253, 7
        %v5255 = vsub.s32 2, %v5254
        %v5256 = vrot.slane %v5241, %v5255
        %v5257 = vlaneseq
        %v5258 = vshrl.u32 %v5257, 7
        %v5259 = vsub.s32 3, %v5258
        %v5260 = vrot.slane %v5241, %v5259
        %v5261 = vlaneseq
        %v5262 = vshrl.u32 %v5261, 7
        %v5263 = vsub.s32 4, %v5262
        %v5264 = vrot.slane %v5241, %v5263
        %v5265 = vlaneseq
        %v5266 = vshrl.u32 %v5265, 7
        %v5267 = vsub.s32 5, %v5266
        %v5268 = vrot.slane %v5241, %v5267
        %v5269 = vlaneseq
        %v5270 = vshrl.u32 %v5269, 7
        %v5271 = vsub.s32 6, %v5270
        %v5272 = vrot.slane %v5241, %v5271
        %v5273 = vlaneseq
        %v5274 = vshrl.u32 %v5273, 7
        %v5275 = vsub.s32 7, %v5274
        %v5276 = vrot.slane %v5241, %v5275
        %v5277 = vlaneseq
        %v5278 = vshrl.u32 %v5277, 7
        %v5279 = vsub.s32 0, %v5278
        %v5280 = vrot.slane %v5242, %v5279
        %v5281 = vlaneseq
        %v5282 = vshrl.u32 %v5281, 7
        %v5283 = vsub.s32 1, %v5282
        %v5284 = vrot.slane %v5242, %v5283
        %v5285 = vlaneseq
        %v5286 = vshrl.u32 %v5285, 7
        %v5287 = vsub.s32 2, %v5286
        %v5288 = vrot.slane %v5242, %v5287
        %v5300 = vpack.c.bf16 %v5248, %v5248
        %v5301 = vpack.c.bf16 %v5252, %v5252
        %v5302 = vpack.c.bf16 %v5256, %v5256
        %v5303 = vpack.c.bf16 %v5260, %v5260
        %v5304 = vpack.c.bf16 %v5264, %v5264
        %v5305 = vpack.c.bf16 %v5268, %v5268
        %v5306 = vpack.c.bf16 %v5272, %v5272
        %v5307 = vpack.c.bf16 %v5276, %v5276
        %v5308 = vpack.c.bf16 %v5280, %v5280
        %v5309 = vpack.c.bf16 %v5284, %v5284
        %v5310 = vpack.c.bf16 %v5288, %v5288
        %v5311 = vld [vmem:[%s5] sm:$0xf]
        %v5312 = vld [vmem:[%s5 + $0x4] sm:$0xf]
        %v5313 = vld [vmem:[%s5 + $0x8] sm:$0xf]
        %v5314 = vld [vmem:[%s5 + $0xc] sm:$0xf]
        %v5315 = vld [vmem:[%s5 + $0x10] sm:$0xf]
        %v5316 = vld [vmem:[%s5 + $0x14] sm:$0xf]
        %v5317 = vld [vmem:[%s5 + $0x18] sm:$0xf]
        %v5318 = vld [vmem:[%s5 + $0x1c] sm:$0xf]
        %v5319 = vld [vmem:[%s5 + $0x20] sm:$0xf]
        %v5320 = vld [vmem:[%s5 + $0x24] sm:$0xf]
        %v5321 = vld [vmem:[%s5 + $0x28] sm:$0xf]
        %v5322 = vld [vmem:[%s5 + $0x2c] sm:$0xf]
        %v5323 = vld [vmem:[%s5 + $0x30] sm:$0xf]
        %v5324 = vld [vmem:[%s5 + $0x34] sm:$0xf]
        %v5325 = vld [vmem:[%s5 + $0x38] sm:$0xf]
        %v5326 = vld [vmem:[%s5 + $0x3c] sm:$0xf]
        %v5327 = vld [vmem:[%s5 + $0x40] sm:$0xf]
        %v5328 = vld [vmem:[%s5 + $0x44] sm:$0xf]
        %v5329 = vld [vmem:[%s5 + $0x48] sm:$0xf]
        %v5330 = vld [vmem:[%s5 + $0x4c] sm:$0xf]
        %v5331 = vld [vmem:[%s5 + $0x50] sm:$0xf]
        %v5332 = vld [vmem:[%s5 + $0x54] sm:$0xf]
        %v5333 = vld [vmem:[%s5 + $0x58] sm:$0xf]
        %v5334 = vld [vmem:[%s5 + $0x5c] sm:$0xf]
        %v5335 = vld [vmem:[%s5 + $0x60] sm:$0xf]
        %v5336 = vld [vmem:[%s5 + $0x64] sm:$0xf]
        %v5337 = vld [vmem:[%s5 + $0x68] sm:$0xf]
        %v5338 = vld [vmem:[%s5 + $0x6c] sm:$0xf]
        %v5339 = vld [vmem:[%s5 + $0x70] sm:$0xf]
        %v5340 = vld [vmem:[%s5 + $0x74] sm:$0xf]
        %v5341 = vld [vmem:[%s5 + $0x78] sm:$0xf]
        %v5342 = vld [vmem:[%s5 + $0x7c] sm:$0xf]
        %v5343 = vld [vmem:[%s5 + $0x80] sm:$0xf]
        %v5344 = vld [vmem:[%s5 + $0x84] sm:$0xf]
        %v5345 = vld [vmem:[%s5 + $0x88] sm:$0xf]
        %v5346 = vld [vmem:[%s5 + $0x8c] sm:$0xf]
        %v5347 = vld [vmem:[%s5 + $0x90] sm:$0xf]
        %v5348 = vld [vmem:[%s5 + $0x94] sm:$0xf]
        %v5349 = vld [vmem:[%s5 + $0x98] sm:$0xf]
        %v5350 = vld [vmem:[%s5 + $0x9c] sm:$0xf]
        %v5351 = vld [vmem:[%s5 + $0xa0] sm:$0xf]
        %v5352 = vld [vmem:[%s5 + $0xa4] sm:$0xf]
        %v5353 = vld [vmem:[%s5 + $0xa8] sm:$0xf]
        %v5354 = vld [vmem:[%s5 + $0xac] sm:$0xf]
        %v5355 = vld [vmem:[%s5 + $0xb0] sm:$0xf]
        %v5356 = vld [vmem:[%s5 + $0xb4] sm:$0xf]
        %v5357 = vld [vmem:[%s5 + $0xb8] sm:$0xf]
        %v5358 = vld [vmem:[%s5 + $0xbc] sm:$0xf]
        %v5359 = vld [vmem:[%s5 + $0xc0] sm:$0xf]
        %v5360 = vld [vmem:[%s5 + $0xc4] sm:$0xf]
        %v5361 = vld [vmem:[%s5 + $0xc8] sm:$0xf]
        %v5362 = vld [vmem:[%s5 + $0xcc] sm:$0xf]
        %v5363 = vld [vmem:[%s5 + $0xd0] sm:$0xf]
        %v5364 = vld [vmem:[%s5 + $0xd4] sm:$0xf]
        %v5365 = vld [vmem:[%s5 + $0xd8] sm:$0xf]
        %v5366 = vld [vmem:[%s5 + $0xdc] sm:$0xf]
        %v5367 = vld [vmem:[%s5 + $0xe0] sm:$0xf]
        %v5368 = vld [vmem:[%s5 + $0xe4] sm:$0xf]
        %v5369 = vld [vmem:[%s5 + $0xe8] sm:$0xf]
        %v5370 = vld [vmem:[%s5 + $0xec] sm:$0xf]
        %v5371 = vld [vmem:[%s5 + $0xf0] sm:$0xf]
        %v5372 = vld [vmem:[%s5 + $0xf4] sm:$0xf]
        %v5373 = vld [vmem:[%s5 + $0xf8] sm:$0xf]
        %v5374 = vld [vmem:[%s5 + $0xfc] sm:$0xf]
        %v5375 = vld [vmem:[%s5 + $0x100] sm:$0xf]
        %v5376 = vld [vmem:[%s5 + $0x104] sm:$0xf]
        %v5377 = vld [vmem:[%s5 + $0x108] sm:$0xf]
        %v5378 = vld [vmem:[%s5 + $0x10c] sm:$0xf]
        %v5379 = vld [vmem:[%s5 + $0x110] sm:$0xf]
        %v5380 = vld [vmem:[%s5 + $0x114] sm:$0xf]
        %v5381 = vld [vmem:[%s5 + $0x118] sm:$0xf]
        %v5382 = vld [vmem:[%s5 + $0x11c] sm:$0xf]
        %v5383 = vld [vmem:[%s5 + $0x120] sm:$0xf]
        %v5384 = vld [vmem:[%s5 + $0x124] sm:$0xf]
        %v5385 = vld [vmem:[%s5 + $0x128] sm:$0xf]
        %v5386 = vld [vmem:[%s5 + $0x12c] sm:$0xf]
        %v5387 = vld [vmem:[%s5 + $0x130] sm:$0xf]
        %v5388 = vld [vmem:[%s5 + $0x134] sm:$0xf]
        %v5389 = vld [vmem:[%s5 + $0x138] sm:$0xf]
        %v5390 = vld [vmem:[%s5 + $0x13c] sm:$0xf]
        %v5391 = vld [vmem:[%s5 + $0x140] sm:$0xf]
        %v5392 = vld [vmem:[%s5 + $0x144] sm:$0xf]
        %v5393 = vld [vmem:[%s5 + $0x148] sm:$0xf]
        %v5394 = vld [vmem:[%s5 + $0x14c] sm:$0xf]
        %v5395 = vld [vmem:[%s5 + $0x150] sm:$0xf]
        %v5396 = vld [vmem:[%s5 + $0x154] sm:$0xf]
        %v5397 = vld [vmem:[%s5 + $0x158] sm:$0xf]
        %v5398 = vld [vmem:[%s5 + $0x15c] sm:$0xf]
        %v5399 = vld [vmem:[%s5 + $0x160] sm:$0xf]
        %v5400 = vld [vmem:[%s5 + $0x164] sm:$0xf]
        %v5401 = vld [vmem:[%s5 + $0x168] sm:$0xf]
        %v5402 = vld [vmem:[%s5 + $0x16c] sm:$0xf]
        %v5403 = vld [vmem:[%s5 + $0x170] sm:$0xf]
        %v5404 = vld [vmem:[%s5 + $0x174] sm:$0xf]
        %v5405 = vld [vmem:[%s5 + $0x178] sm:$0xf]
        %v5406 = vld [vmem:[%s5 + $0x17c] sm:$0xf]
        %v5407 = vld [vmem:[%s5 + $0x180] sm:$0xf]
        %v5408 = vld [vmem:[%s5 + $0x184] sm:$0xf]
        %v5409 = vld [vmem:[%s5 + $0x188] sm:$0xf]
        %v5410 = vld [vmem:[%s5 + $0x18c] sm:$0xf]
        %v5411 = vld [vmem:[%s5 + $0x190] sm:$0xf]
        %v5412 = vld [vmem:[%s5 + $0x194] sm:$0xf]
        %v5413 = vld [vmem:[%s5 + $0x198] sm:$0xf]
        %v5414 = vld [vmem:[%s5 + $0x19c] sm:$0xf]
        %v5415 = vld [vmem:[%s5 + $0x1a0] sm:$0xf]
        %v5416 = vld [vmem:[%s5 + $0x1a4] sm:$0xf]
        %v5417 = vld [vmem:[%s5 + $0x1a8] sm:$0xf]
        %v5418 = vld [vmem:[%s5 + $0x1ac] sm:$0xf]
        %v5419 = vld [vmem:[%s5 + $0x1b0] sm:$0xf]
        %v5420 = vld [vmem:[%s5 + $0x1b4] sm:$0xf]
        %v5421 = vld [vmem:[%s5 + $0x1b8] sm:$0xf]
        %v5422 = vld [vmem:[%s5 + $0x1bc] sm:$0xf]
        %v5423 = vld [vmem:[%s5 + $0x1c0] sm:$0xf]
        %v5424 = vld [vmem:[%s5 + $0x1c4] sm:$0xf]
        %v5425 = vld [vmem:[%s5 + $0x1c8] sm:$0xf]
        %v5426 = vld [vmem:[%s5 + $0x1cc] sm:$0xf]
        %v5427 = vld [vmem:[%s5 + $0x1d0] sm:$0xf]
        %v5428 = vld [vmem:[%s5 + $0x1d4] sm:$0xf]
        %v5429 = vld [vmem:[%s5 + $0x1d8] sm:$0xf]
        %v5430 = vld [vmem:[%s5 + $0x1dc] sm:$0xf]
        %v5431 = vld [vmem:[%s5 + $0x1e0] sm:$0xf]
        %v5432 = vld [vmem:[%s5 + $0x1e4] sm:$0xf]
        %v5433 = vld [vmem:[%s5 + $0x1e8] sm:$0xf]
        %v5434 = vld [vmem:[%s5 + $0x1ec] sm:$0xf]
        %v5435 = vld [vmem:[%s5 + $0x1f0] sm:$0xf]
        %v5436 = vld [vmem:[%s5 + $0x1f4] sm:$0xf]
        %v5437 = vld [vmem:[%s5 + $0x1f8] sm:$0xf]
        %v5438 = vld [vmem:[%s5 + $0x1fc] sm:$0xf]
        %v5439 = vld [vmem:[%s5 + $0x200] sm:$0xf]
        %v5440 = vld [vmem:[%s5 + $0x204] sm:$0xf]
        %v5441 = vld [vmem:[%s5 + $0x208] sm:$0xf]
        %v5442 = vld [vmem:[%s5 + $0x20c] sm:$0xf]
        %v5443 = vld [vmem:[%s5 + $0x210] sm:$0xf]
        %v5444 = vld [vmem:[%s5 + $0x214] sm:$0xf]
        %v5445 = vld [vmem:[%s5 + $0x218] sm:$0xf]
        %v5446 = vld [vmem:[%s5 + $0x21c] sm:$0xf]
        %v5447 = vld [vmem:[%s5 + $0x220] sm:$0xf]
        %v5448 = vld [vmem:[%s5 + $0x224] sm:$0xf]
        %v5449 = vld [vmem:[%s5 + $0x228] sm:$0xf]
        %v5450 = vld [vmem:[%s5 + $0x22c] sm:$0xf]
        %v5451 = vld [vmem:[%s5 + $0x230] sm:$0xf]
        %v5452 = vld [vmem:[%s5 + $0x234] sm:$0xf]
        %v5453 = vld [vmem:[%s5 + $0x238] sm:$0xf]
        %v5454 = vld [vmem:[%s5 + $0x23c] sm:$0xf]
        %v5455 = vld [vmem:[%s5 + $0x240] sm:$0xf]
        %v5456 = vld [vmem:[%s5 + $0x244] sm:$0xf]
        %v5457 = vld [vmem:[%s5 + $0x248] sm:$0xf]
        %v5458 = vld [vmem:[%s5 + $0x24c] sm:$0xf]
        %v5459 = vld [vmem:[%s5 + $0x250] sm:$0xf]
        %v5460 = vld [vmem:[%s5 + $0x254] sm:$0xf]
        %v5461 = vld [vmem:[%s5 + $0x258] sm:$0xf]
        %v5462 = vld [vmem:[%s5 + $0x25c] sm:$0xf]
        %v5463 = vld [vmem:[%s5 + $0x260] sm:$0xf]
        %v5464 = vld [vmem:[%s5 + $0x264] sm:$0xf]
        %v5465 = vld [vmem:[%s5 + $0x268] sm:$0xf]
        %v5466 = vld [vmem:[%s5 + $0x26c] sm:$0xf]
        %v5467 = vld [vmem:[%s5 + $0x270] sm:$0xf]
        %v5468 = vld [vmem:[%s5 + $0x274] sm:$0xf]
        %v5469 = vld [vmem:[%s5 + $0x278] sm:$0xf]
        %v5470 = vld [vmem:[%s5 + $0x27c] sm:$0xf]
        %v5471 = vld [vmem:[%s5 + $0x280] sm:$0xf]
        %v5472 = vld [vmem:[%s5 + $0x284] sm:$0xf]
        %v5473 = vld [vmem:[%s5 + $0x288] sm:$0xf]
        %v5474 = vld [vmem:[%s5 + $0x28c] sm:$0xf]
        %v5475 = vld [vmem:[%s5 + $0x290] sm:$0xf]
        %v5476 = vld [vmem:[%s5 + $0x294] sm:$0xf]
        %v5477 = vld [vmem:[%s5 + $0x298] sm:$0xf]
        %v5478 = vld [vmem:[%s5 + $0x29c] sm:$0xf]
        %v5479 = vld [vmem:[%s5 + $0x2a0] sm:$0xf]
        %v5480 = vld [vmem:[%s5 + $0x2a4] sm:$0xf]
        %v5481 = vld [vmem:[%s5 + $0x2a8] sm:$0xf]
        %v5482 = vld [vmem:[%s5 + $0x2ac] sm:$0xf]
        %v5483 = vld [vmem:[%s5 + $0x2b0] sm:$0xf]
        %v5484 = vld [vmem:[%s5 + $0x2b4] sm:$0xf]
        %v5485 = vld [vmem:[%s5 + $0x2b8] sm:$0xf]
        %v5486 = vld [vmem:[%s5 + $0x2bc] sm:$0xf]
        %v5487 = vld [vmem:[%s6] sm:$0x1]
        %v5664 = vunpack.c.l.b16 %v5311
        %v5665 = vunpack.c.l.b16 %v5312
        %v5666 = vunpack.c.l.b16 %v5313
        %v5667 = vunpack.c.l.b16 %v5314
        %v5668 = vunpack.c.l.b16 %v5315
        %v5669 = vunpack.c.l.b16 %v5316
        %v5670 = vunpack.c.l.b16 %v5317
        %v5671 = vunpack.c.l.b16 %v5318
        %v5672 = vunpack.c.l.b16 %v5319
        %v5673 = vunpack.c.l.b16 %v5320
        %v5674 = vunpack.c.l.b16 %v5321
        %v5675 = vunpack.c.l.b16 %v5322
        %v5676 = vunpack.c.l.b16 %v5323
        %v5677 = vunpack.c.l.b16 %v5324
        %v5678 = vunpack.c.l.b16 %v5325
        %v5679 = vunpack.c.l.b16 %v5326
        %v5680 = vunpack.c.l.b16 %v5327
        %v5681 = vunpack.c.l.b16 %v5328
        %v5682 = vunpack.c.l.b16 %v5329
        %v5683 = vunpack.c.l.b16 %v5330
        %v5684 = vunpack.c.l.b16 %v5331
        %v5685 = vunpack.c.l.b16 %v5332
        %v5686 = vunpack.c.l.b16 %v5333
        %v5687 = vunpack.c.l.b16 %v5334
        %v5688 = vunpack.c.l.b16 %v5335
        %v5689 = vunpack.c.l.b16 %v5336
        %v5690 = vunpack.c.l.b16 %v5337
        %v5691 = vunpack.c.l.b16 %v5338
        %v5692 = vunpack.c.l.b16 %v5339
        %v5693 = vunpack.c.l.b16 %v5340
        %v5694 = vunpack.c.l.b16 %v5341
        %v5695 = vunpack.c.l.b16 %v5342
        %v5696 = vunpack.c.l.b16 %v5343
        %v5697 = vunpack.c.l.b16 %v5344
        %v5698 = vunpack.c.l.b16 %v5345
        %v5699 = vunpack.c.l.b16 %v5346
        %v5700 = vunpack.c.l.b16 %v5347
        %v5701 = vunpack.c.l.b16 %v5348
        %v5702 = vunpack.c.l.b16 %v5349
        %v5703 = vunpack.c.l.b16 %v5350
        %v5704 = vunpack.c.l.b16 %v5351
        %v5705 = vunpack.c.l.b16 %v5352
        %v5706 = vunpack.c.l.b16 %v5353
        %v5707 = vunpack.c.l.b16 %v5354
        %v5708 = vunpack.c.l.b16 %v5355
        %v5709 = vunpack.c.l.b16 %v5356
        %v5710 = vunpack.c.l.b16 %v5357
        %v5711 = vunpack.c.l.b16 %v5358
        %v5712 = vunpack.c.l.b16 %v5359
        %v5713 = vunpack.c.l.b16 %v5360
        %v5714 = vunpack.c.l.b16 %v5361
        %v5715 = vunpack.c.l.b16 %v5362
        %v5716 = vunpack.c.l.b16 %v5363
        %v5717 = vunpack.c.l.b16 %v5364
        %v5718 = vunpack.c.l.b16 %v5365
        %v5719 = vunpack.c.l.b16 %v5366
        %v5720 = vunpack.c.l.b16 %v5367
        %v5721 = vunpack.c.l.b16 %v5368
        %v5722 = vunpack.c.l.b16 %v5369
        %v5723 = vunpack.c.l.b16 %v5370
        %v5724 = vunpack.c.l.b16 %v5371
        %v5725 = vunpack.c.l.b16 %v5372
        %v5726 = vunpack.c.l.b16 %v5373
        %v5727 = vunpack.c.l.b16 %v5374
        %v5728 = vunpack.c.l.b16 %v5375
        %v5729 = vunpack.c.l.b16 %v5376
        %v5730 = vunpack.c.l.b16 %v5377
        %v5731 = vunpack.c.l.b16 %v5378
        %v5732 = vunpack.c.l.b16 %v5379
        %v5733 = vunpack.c.l.b16 %v5380
        %v5734 = vunpack.c.l.b16 %v5381
        %v5735 = vunpack.c.l.b16 %v5382
        %v5736 = vunpack.c.l.b16 %v5383
        %v5737 = vunpack.c.l.b16 %v5384
        %v5738 = vunpack.c.l.b16 %v5385
        %v5739 = vunpack.c.l.b16 %v5386
        %v5740 = vunpack.c.l.b16 %v5387
        %v5741 = vunpack.c.l.b16 %v5388
        %v5742 = vunpack.c.l.b16 %v5389
        %v5743 = vunpack.c.l.b16 %v5390
        %v5744 = vunpack.c.l.b16 %v5391
        %v5745 = vunpack.c.l.b16 %v5392
        %v5746 = vunpack.c.l.b16 %v5393
        %v5747 = vunpack.c.l.b16 %v5394
        %v5748 = vunpack.c.l.b16 %v5395
        %v5749 = vunpack.c.l.b16 %v5396
        %v5750 = vunpack.c.l.b16 %v5397
        %v5751 = vunpack.c.l.b16 %v5398
        %v5752 = vunpack.c.l.b16 %v5399
        %v5753 = vunpack.c.l.b16 %v5400
        %v5754 = vunpack.c.l.b16 %v5401
        %v5755 = vunpack.c.l.b16 %v5402
        %v5756 = vunpack.c.l.b16 %v5403
        %v5757 = vunpack.c.l.b16 %v5404
        %v5758 = vunpack.c.l.b16 %v5405
        %v5759 = vunpack.c.l.b16 %v5406
        %v5760 = vunpack.c.l.b16 %v5407
        %v5761 = vunpack.c.l.b16 %v5408
        %v5762 = vunpack.c.l.b16 %v5409
        %v5763 = vunpack.c.l.b16 %v5410
        %v5764 = vunpack.c.l.b16 %v5411
        %v5765 = vunpack.c.l.b16 %v5412
        %v5766 = vunpack.c.l.b16 %v5413
        %v5767 = vunpack.c.l.b16 %v5414
        %v5768 = vunpack.c.l.b16 %v5415
        %v5769 = vunpack.c.l.b16 %v5416
        %v5770 = vunpack.c.l.b16 %v5417
        %v5771 = vunpack.c.l.b16 %v5418
        %v5772 = vunpack.c.l.b16 %v5419
        %v5773 = vunpack.c.l.b16 %v5420
        %v5774 = vunpack.c.l.b16 %v5421
        %v5775 = vunpack.c.l.b16 %v5422
        %v5776 = vunpack.c.l.b16 %v5423
        %v5777 = vunpack.c.l.b16 %v5424
        %v5778 = vunpack.c.l.b16 %v5425
        %v5779 = vunpack.c.l.b16 %v5426
        %v5780 = vunpack.c.l.b16 %v5427
        %v5781 = vunpack.c.l.b16 %v5428
        %v5782 = vunpack.c.l.b16 %v5429
        %v5783 = vunpack.c.l.b16 %v5430
        %v5784 = vunpack.c.l.b16 %v5431
        %v5785 = vunpack.c.l.b16 %v5432
        %v5786 = vunpack.c.l.b16 %v5433
        %v5787 = vunpack.c.l.b16 %v5434
        %v5788 = vunpack.c.l.b16 %v5435
        %v5789 = vunpack.c.l.b16 %v5436
        %v5790 = vunpack.c.l.b16 %v5437
        %v5791 = vunpack.c.l.b16 %v5438
        %v5792 = vunpack.c.l.b16 %v5439
        %v5793 = vunpack.c.l.b16 %v5440
        %v5794 = vunpack.c.l.b16 %v5441
        %v5795 = vunpack.c.l.b16 %v5442
        %v5796 = vunpack.c.l.b16 %v5443
        %v5797 = vunpack.c.l.b16 %v5444
        %v5798 = vunpack.c.l.b16 %v5445
        %v5799 = vunpack.c.l.b16 %v5446
        %v5800 = vunpack.c.l.b16 %v5447
        %v5801 = vunpack.c.l.b16 %v5448
        %v5802 = vunpack.c.l.b16 %v5449
        %v5803 = vunpack.c.l.b16 %v5450
        %v5804 = vunpack.c.l.b16 %v5451
        %v5805 = vunpack.c.l.b16 %v5452
        %v5806 = vunpack.c.l.b16 %v5453
        %v5807 = vunpack.c.l.b16 %v5454
        %v5808 = vunpack.c.l.b16 %v5455
        %v5809 = vunpack.c.l.b16 %v5456
        %v5810 = vunpack.c.l.b16 %v5457
        %v5811 = vunpack.c.l.b16 %v5458
        %v5812 = vunpack.c.l.b16 %v5459
        %v5813 = vunpack.c.l.b16 %v5460
        %v5814 = vunpack.c.l.b16 %v5461
        %v5815 = vunpack.c.l.b16 %v5462
        %v5816 = vunpack.c.l.b16 %v5463
        %v5817 = vunpack.c.l.b16 %v5464
        %v5818 = vunpack.c.l.b16 %v5465
        %v5819 = vunpack.c.l.b16 %v5466
        %v5820 = vunpack.c.l.b16 %v5467
        %v5821 = vunpack.c.l.b16 %v5468
        %v5822 = vunpack.c.l.b16 %v5469
        %v5823 = vunpack.c.l.b16 %v5470
        %v5824 = vunpack.c.l.b16 %v5471
        %v5825 = vunpack.c.l.b16 %v5472
        %v5826 = vunpack.c.l.b16 %v5473
        %v5827 = vunpack.c.l.b16 %v5474
        %v5828 = vunpack.c.l.b16 %v5475
        %v5829 = vunpack.c.l.b16 %v5476
        %v5830 = vunpack.c.l.b16 %v5477
        %v5831 = vunpack.c.l.b16 %v5478
        %v5832 = vunpack.c.l.b16 %v5479
        %v5833 = vunpack.c.l.b16 %v5480
        %v5834 = vunpack.c.l.b16 %v5481
        %v5835 = vunpack.c.l.b16 %v5482
        %v5836 = vunpack.c.l.b16 %v5483
        %v5837 = vunpack.c.l.b16 %v5484
        %v5838 = vunpack.c.l.b16 %v5485
        %v5839 = vunpack.c.l.b16 %v5486
        %v5840 = vpack.c.b16 %v5665, %v5664
        %v5841 = vpack.c.b16 %v5667, %v5666
        %v5842 = vpack.c.b16 %v5669, %v5668
        %v5843 = vpack.c.b16 %v5671, %v5670
        %v5844 = vpack.c.b16 %v5673, %v5672
        %v5845 = vpack.c.b16 %v5675, %v5674
        %v5846 = vpack.c.b16 %v5677, %v5676
        %v5847 = vpack.c.b16 %v5679, %v5678
        %v5848 = vpack.c.b16 %v5681, %v5680
        %v5849 = vpack.c.b16 %v5683, %v5682
        %v5850 = vpack.c.b16 %v5685, %v5684
        %v5851 = vpack.c.b16 %v5687, %v5686
        %v5852 = vpack.c.b16 %v5689, %v5688
        %v5853 = vpack.c.b16 %v5691, %v5690
        %v5854 = vpack.c.b16 %v5693, %v5692
        %v5855 = vpack.c.b16 %v5695, %v5694
        %v5856 = vpack.c.b16 %v5697, %v5696
        %v5857 = vpack.c.b16 %v5699, %v5698
        %v5858 = vpack.c.b16 %v5701, %v5700
        %v5859 = vpack.c.b16 %v5703, %v5702
        %v5860 = vpack.c.b16 %v5705, %v5704
        %v5861 = vpack.c.b16 %v5707, %v5706
        %v5862 = vpack.c.b16 %v5709, %v5708
        %v5863 = vpack.c.b16 %v5711, %v5710
        %v5864 = vpack.c.b16 %v5713, %v5712
        %v5865 = vpack.c.b16 %v5715, %v5714
        %v5866 = vpack.c.b16 %v5717, %v5716
        %v5867 = vpack.c.b16 %v5719, %v5718
        %v5868 = vpack.c.b16 %v5721, %v5720
        %v5869 = vpack.c.b16 %v5723, %v5722
        %v5870 = vpack.c.b16 %v5725, %v5724
        %v5871 = vpack.c.b16 %v5727, %v5726
        %v5872 = vpack.c.b16 %v5729, %v5728
        %v5873 = vpack.c.b16 %v5731, %v5730
        %v5874 = vpack.c.b16 %v5733, %v5732
        %v5875 = vpack.c.b16 %v5735, %v5734
        %v5876 = vpack.c.b16 %v5737, %v5736
        %v5877 = vpack.c.b16 %v5739, %v5738
        %v5878 = vpack.c.b16 %v5741, %v5740
        %v5879 = vpack.c.b16 %v5743, %v5742
        %v5880 = vpack.c.b16 %v5745, %v5744
        %v5881 = vpack.c.b16 %v5747, %v5746
        %v5882 = vpack.c.b16 %v5749, %v5748
        %v5883 = vpack.c.b16 %v5751, %v5750
        %v5884 = vpack.c.b16 %v5753, %v5752
        %v5885 = vpack.c.b16 %v5755, %v5754
        %v5886 = vpack.c.b16 %v5757, %v5756
        %v5887 = vpack.c.b16 %v5759, %v5758
        %v5888 = vpack.c.b16 %v5761, %v5760
        %v5889 = vpack.c.b16 %v5763, %v5762
        %v5890 = vpack.c.b16 %v5765, %v5764
        %v5891 = vpack.c.b16 %v5767, %v5766
        %v5892 = vpack.c.b16 %v5769, %v5768
        %v5893 = vpack.c.b16 %v5771, %v5770
        %v5894 = vpack.c.b16 %v5773, %v5772
        %v5895 = vpack.c.b16 %v5775, %v5774
        %v5896 = vpack.c.b16 %v5777, %v5776
        %v5897 = vpack.c.b16 %v5779, %v5778
        %v5898 = vpack.c.b16 %v5781, %v5780
        %v5899 = vpack.c.b16 %v5783, %v5782
        %v5900 = vpack.c.b16 %v5785, %v5784
        %v5901 = vpack.c.b16 %v5787, %v5786
        %v5902 = vpack.c.b16 %v5789, %v5788
        %v5903 = vpack.c.b16 %v5791, %v5790
        %v5904 = vpack.c.b16 %v5793, %v5792
        %v5905 = vpack.c.b16 %v5795, %v5794
        %v5906 = vpack.c.b16 %v5797, %v5796
        %v5907 = vpack.c.b16 %v5799, %v5798
        %v5908 = vpack.c.b16 %v5801, %v5800
        %v5909 = vpack.c.b16 %v5803, %v5802
        %v5910 = vpack.c.b16 %v5805, %v5804
        %v5911 = vpack.c.b16 %v5807, %v5806
        %v5912 = vpack.c.b16 %v5809, %v5808
        %v5913 = vpack.c.b16 %v5811, %v5810
        %v5914 = vpack.c.b16 %v5813, %v5812
        %v5915 = vpack.c.b16 %v5815, %v5814
        %v5916 = vpack.c.b16 %v5817, %v5816
        %v5917 = vpack.c.b16 %v5819, %v5818
        %v5918 = vpack.c.b16 %v5821, %v5820
        %v5919 = vpack.c.b16 %v5823, %v5822
        %v5920 = vpack.c.b16 %v5825, %v5824
        %v5921 = vpack.c.b16 %v5827, %v5826
        %v5922 = vpack.c.b16 %v5829, %v5828
        %v5923 = vpack.c.b16 %v5831, %v5830
        %v5924 = vpack.c.b16 %v5833, %v5832
        %v5925 = vpack.c.b16 %v5835, %v5834
        %v5926 = vpack.c.b16 %v5837, %v5836
        %v5927 = vpack.c.b16 %v5839, %v5838
        %6016 = vmatprep.subr.bf16.mxu0 0
        %6017 = vmatpush1.bf16.msra.mxu0 %v5847
        %6018 = vmatprep.subr.bf16.mxu0 0
        %6019 = vmatpush1.bf16.msra.mxu0 %v5846
        %6020 = vmatprep.subr.bf16.mxu0 0
        %6021 = vmatpush1.bf16.msra.mxu0 %v5845
        %6022 = vmatprep.subr.bf16.mxu0 0
        %6023 = vmatpush1.bf16.msra.mxu0 %v5844
        %6024 = vmatprep.subr.bf16.mxu0 0
        %6025 = vmatpush1.bf16.msra.mxu0 %v5843
        %6026 = vmatprep.subr.bf16.mxu0 0
        %6027 = vmatpush1.bf16.msra.mxu0 %v5842
        %6028 = vmatprep.subr.bf16.mxu0 0
        %6029 = vmatpush1.bf16.msra.mxu0 %v5841
        %6030 = vmatprep.subr.bf16.mxu0 0
        %6031 = vmatpush1.bf16.msra.mxu0 %v5840
        %6032 = vmatprep.subr.bf16.mxu0 0
        %6033 = vmatpush2.bf16.msra.mxu0 %v5855
        %6034 = vmatprep.subr.bf16.mxu0 0
        %6035 = vmatpush2.bf16.msra.mxu0 %v5854
        %6036 = vmatprep.subr.bf16.mxu0 0
        %6037 = vmatpush2.bf16.msra.mxu0 %v5853
        %6038 = vmatprep.subr.bf16.mxu0 0
        %6039 = vmatpush2.bf16.msra.mxu0 %v5852
        %6040 = vmatprep.subr.bf16.mxu0 0
        %6041 = vmatpush2.bf16.msra.mxu0 %v5851
        %6042 = vmatprep.subr.bf16.mxu0 0
        %6043 = vmatpush2.bf16.msra.mxu0 %v5850
        %6044 = vmatprep.subr.bf16.mxu0 0
        %6045 = vmatpush2.bf16.msra.mxu0 %v5849
        %6046 = vmatprep.subr.bf16.mxu0 0
        %6047 = vmatpush2.bf16.msra.mxu0 %v5848
        %6048 = vmatprep.mubr.bf16.mxu0 %v5301
        %6049 = vmatmul.mubr.bf16.gmra.mxu0 %v5300
        %v6050 = vpop.f32.mrf.mxu0
        %v6051 = vadd.f32 %v5487, %v6050
        %v6052 = vpop.f32.mrf.mxu0
        %v6053 = vpop.f32.mrf.mxu0
        %v6054 = vpop.f32.mrf.mxu0
        %6055 = vdwg.mxu0
        %6056 = vmatprep.subr.bf16.mxu0 0
        %6057 = vmatpush1.bf16.msra.mxu0 %v5863
        %6058 = vmatprep.subr.bf16.mxu0 0
        %6059 = vmatpush1.bf16.msra.mxu0 %v5862
        %6060 = vmatprep.subr.bf16.mxu0 0
        %6061 = vmatpush1.bf16.msra.mxu0 %v5861
        %6062 = vmatprep.subr.bf16.mxu0 0
        %6063 = vmatpush1.bf16.msra.mxu0 %v5860
        %6064 = vmatprep.subr.bf16.mxu0 0
        %6065 = vmatpush1.bf16.msra.mxu0 %v5859
        %6066 = vmatprep.subr.bf16.mxu0 0
        %6067 = vmatpush1.bf16.msra.mxu0 %v5858
        %6068 = vmatprep.subr.bf16.mxu0 0
        %6069 = vmatpush1.bf16.msra.mxu0 %v5857
        %6070 = vmatprep.subr.bf16.mxu0 0
        %6071 = vmatpush1.bf16.msra.mxu0 %v5856
        %6072 = vmatprep.subr.bf16.mxu0 0
        %6073 = vmatpush2.bf16.msra.mxu0 %v5871
        %6074 = vmatprep.subr.bf16.mxu0 0
        %6075 = vmatpush2.bf16.msra.mxu0 %v5870
        %6076 = vmatprep.subr.bf16.mxu0 0
        %6077 = vmatpush2.bf16.msra.mxu0 %v5869
        %6078 = vmatprep.subr.bf16.mxu0 0
        %6079 = vmatpush2.bf16.msra.mxu0 %v5868
        %6080 = vmatprep.subr.bf16.mxu0 0
        %6081 = vmatpush2.bf16.msra.mxu0 %v5867
        %6082 = vmatprep.subr.bf16.mxu0 0
        %6083 = vmatpush2.bf16.msra.mxu0 %v5866
        %6084 = vmatprep.subr.bf16.mxu0 0
        %6085 = vmatpush2.bf16.msra.mxu0 %v5865
        %6086 = vmatprep.subr.bf16.mxu0 0
        %6087 = vmatpush2.bf16.msra.mxu0 %v5864
        %6088 = vmatprep.mubr.bf16.mxu0 %v5303
        %6089 = vmatmul.mubr.bf16.gmra.mxu0 %v5302
        %v6090 = vpop.f32.mrf.mxu0
        %v6091 = vadd.f32 %v6051, %v6090
        %v6092 = vpop.f32.mrf.mxu0
        %v6093 = vpop.f32.mrf.mxu0
        %v6094 = vpop.f32.mrf.mxu0
        %6095 = vdwg.mxu0
        %6096 = vmatprep.subr.bf16.mxu0 0
        %6097 = vmatpush1.bf16.msra.mxu0 %v5879
        %6098 = vmatprep.subr.bf16.mxu0 0
        %6099 = vmatpush1.bf16.msra.mxu0 %v5878
        %6100 = vmatprep.subr.bf16.mxu0 0
        %6101 = vmatpush1.bf16.msra.mxu0 %v5877
        %6102 = vmatprep.subr.bf16.mxu0 0
        %6103 = vmatpush1.bf16.msra.mxu0 %v5876
        %6104 = vmatprep.subr.bf16.mxu0 0
        %6105 = vmatpush1.bf16.msra.mxu0 %v5875
        %6106 = vmatprep.subr.bf16.mxu0 0
        %6107 = vmatpush1.bf16.msra.mxu0 %v5874
        %6108 = vmatprep.subr.bf16.mxu0 0
        %6109 = vmatpush1.bf16.msra.mxu0 %v5873
        %6110 = vmatprep.subr.bf16.mxu0 0
        %6111 = vmatpush1.bf16.msra.mxu0 %v5872
        %6112 = vmatprep.subr.bf16.mxu0 0
        %6113 = vmatpush2.bf16.msra.mxu0 %v5887
        %6114 = vmatprep.subr.bf16.mxu0 0
        %6115 = vmatpush2.bf16.msra.mxu0 %v5886
        %6116 = vmatprep.subr.bf16.mxu0 0
        %6117 = vmatpush2.bf16.msra.mxu0 %v5885
        %6118 = vmatprep.subr.bf16.mxu0 0
        %6119 = vmatpush2.bf16.msra.mxu0 %v5884
        %6120 = vmatprep.subr.bf16.mxu0 0
        %6121 = vmatpush2.bf16.msra.mxu0 %v5883
        %6122 = vmatprep.subr.bf16.mxu0 0
        %6123 = vmatpush2.bf16.msra.mxu0 %v5882
        %6124 = vmatprep.subr.bf16.mxu0 0
        %6125 = vmatpush2.bf16.msra.mxu0 %v5881
        %6126 = vmatprep.subr.bf16.mxu0 0
        %6127 = vmatpush2.bf16.msra.mxu0 %v5880
        %6128 = vmatprep.mubr.bf16.mxu0 %v5305
        %6129 = vmatmul.mubr.bf16.gmra.mxu0 %v5304
        %v6130 = vpop.f32.mrf.mxu0
        %v6131 = vadd.f32 %v6091, %v6130
        %v6132 = vpop.f32.mrf.mxu0
        %v6133 = vpop.f32.mrf.mxu0
        %v6134 = vpop.f32.mrf.mxu0
        %6135 = vdwg.mxu0
        %6136 = vmatprep.subr.bf16.mxu0 0
        %6137 = vmatpush1.bf16.msra.mxu0 %v5895
        %6138 = vmatprep.subr.bf16.mxu0 0
        %6139 = vmatpush1.bf16.msra.mxu0 %v5894
        %6140 = vmatprep.subr.bf16.mxu0 0
        %6141 = vmatpush1.bf16.msra.mxu0 %v5893
        %6142 = vmatprep.subr.bf16.mxu0 0
        %6143 = vmatpush1.bf16.msra.mxu0 %v5892
        %6144 = vmatprep.subr.bf16.mxu0 0
        %6145 = vmatpush1.bf16.msra.mxu0 %v5891
        %6146 = vmatprep.subr.bf16.mxu0 0
        %6147 = vmatpush1.bf16.msra.mxu0 %v5890
        %6148 = vmatprep.subr.bf16.mxu0 0
        %6149 = vmatpush1.bf16.msra.mxu0 %v5889
        %6150 = vmatprep.subr.bf16.mxu0 0
        %6151 = vmatpush1.bf16.msra.mxu0 %v5888
        %6152 = vmatprep.subr.bf16.mxu0 0
        %6153 = vmatpush2.bf16.msra.mxu0 %v5903
        %6154 = vmatprep.subr.bf16.mxu0 0
        %6155 = vmatpush2.bf16.msra.mxu0 %v5902
        %6156 = vmatprep.subr.bf16.mxu0 0
        %6157 = vmatpush2.bf16.msra.mxu0 %v5901
        %6158 = vmatprep.subr.bf16.mxu0 0
        %6159 = vmatpush2.bf16.msra.mxu0 %v5900
        %6160 = vmatprep.subr.bf16.mxu0 0
        %6161 = vmatpush2.bf16.msra.mxu0 %v5899
        %6162 = vmatprep.subr.bf16.mxu0 0
        %6163 = vmatpush2.bf16.msra.mxu0 %v5898
        %6164 = vmatprep.subr.bf16.mxu0 0
        %6165 = vmatpush2.bf16.msra.mxu0 %v5897
        %6166 = vmatprep.subr.bf16.mxu0 0
        %6167 = vmatpush2.bf16.msra.mxu0 %v5896
        %6168 = vmatprep.mubr.bf16.mxu0 %v5307
        %6169 = vmatmul.mubr.bf16.gmra.mxu0 %v5306
        %v6170 = vpop.f32.mrf.mxu0
        %v6171 = vadd.f32 %v6131, %v6170
        %v6172 = vpop.f32.mrf.mxu0
        %v6173 = vpop.f32.mrf.mxu0
        %v6174 = vpop.f32.mrf.mxu0
        %6175 = vdwg.mxu0
        %6176 = vmatprep.subr.bf16.mxu0 0
        %6177 = vmatpush1.bf16.msra.mxu0 %v5911
        %6178 = vmatprep.subr.bf16.mxu0 0
        %6179 = vmatpush1.bf16.msra.mxu0 %v5910
        %6180 = vmatprep.subr.bf16.mxu0 0
        %6181 = vmatpush1.bf16.msra.mxu0 %v5909
        %6182 = vmatprep.subr.bf16.mxu0 0
        %6183 = vmatpush1.bf16.msra.mxu0 %v5908
        %6184 = vmatprep.subr.bf16.mxu0 0
        %6185 = vmatpush1.bf16.msra.mxu0 %v5907
        %6186 = vmatprep.subr.bf16.mxu0 0
        %6187 = vmatpush1.bf16.msra.mxu0 %v5906
        %6188 = vmatprep.subr.bf16.mxu0 0
        %6189 = vmatpush1.bf16.msra.mxu0 %v5905
        %6190 = vmatprep.subr.bf16.mxu0 0
        %6191 = vmatpush1.bf16.msra.mxu0 %v5904
        %6192 = vmatprep.subr.bf16.mxu0 0
        %6193 = vmatpush2.bf16.msra.mxu0 %v5919
        %6194 = vmatprep.subr.bf16.mxu0 0
        %6195 = vmatpush2.bf16.msra.mxu0 %v5918
        %6196 = vmatprep.subr.bf16.mxu0 0
        %6197 = vmatpush2.bf16.msra.mxu0 %v5917
        %6198 = vmatprep.subr.bf16.mxu0 0
        %6199 = vmatpush2.bf16.msra.mxu0 %v5916
        %6200 = vmatprep.subr.bf16.mxu0 0
        %6201 = vmatpush2.bf16.msra.mxu0 %v5915
        %6202 = vmatprep.subr.bf16.mxu0 0
        %6203 = vmatpush2.bf16.msra.mxu0 %v5914
        %6204 = vmatprep.subr.bf16.mxu0 0
        %6205 = vmatpush2.bf16.msra.mxu0 %v5913
        %6206 = vmatprep.subr.bf16.mxu0 0
        %6207 = vmatpush2.bf16.msra.mxu0 %v5912
        %6208 = vmatprep.mubr.bf16.mxu0 %v5309
        %6209 = vmatmul.mubr.bf16.gmra.mxu0 %v5308
        %v6210 = vpop.f32.mrf.mxu0
        %v6211 = vadd.f32 %v6171, %v6210
        %v6212 = vpop.f32.mrf.mxu0
        %v6213 = vpop.f32.mrf.mxu0
        %v6214 = vpop.f32.mrf.mxu0
        %6215 = vdwg.mxu0
        %6216 = vmatprep.subr.bf16.mxu0 0
        %6217 = vmatpush1.bf16.msra.mxu0 %v5927
        %6218 = vmatprep.subr.bf16.mxu0 0
        %6219 = vmatpush1.bf16.msra.mxu0 %v5926
        %6220 = vmatprep.subr.bf16.mxu0 0
        %6221 = vmatpush1.bf16.msra.mxu0 %v5925
        %6222 = vmatprep.subr.bf16.mxu0 0
        %6223 = vmatpush1.bf16.msra.mxu0 %v5924
        %6224 = vmatprep.subr.bf16.mxu0 0
        %6225 = vmatpush1.bf16.msra.mxu0 %v5923
        %6226 = vmatprep.subr.bf16.mxu0 0
        %6227 = vmatpush1.bf16.msra.mxu0 %v5922
        %6228 = vmatprep.subr.bf16.mxu0 0
        %6229 = vmatpush1.bf16.msra.mxu0 %v5921
        %6230 = vmatprep.subr.bf16.mxu0 0
        %6231 = vmatpush1.bf16.msra.mxu0 %v5920
        %6232 = vmatprep.subr.bf16.mxu0 0
        %6233 = vmatpush2.bf16.msra.mxu0 0
        %6234 = vmatprep.subr.bf16.mxu0 0
        %6235 = vmatpush2.bf16.msra.mxu0 0
        %6236 = vmatprep.subr.bf16.mxu0 0
        %6237 = vmatpush2.bf16.msra.mxu0 0
        %6238 = vmatprep.subr.bf16.mxu0 0
        %6239 = vmatpush2.bf16.msra.mxu0 0
        %6240 = vmatprep.subr.bf16.mxu0 0
        %6241 = vmatpush2.bf16.msra.mxu0 0
        %6242 = vmatprep.subr.bf16.mxu0 0
        %6243 = vmatpush2.bf16.msra.mxu0 0
        %6244 = vmatprep.subr.bf16.mxu0 0
        %6245 = vmatpush2.bf16.msra.mxu0 0
        %6246 = vmatprep.subr.bf16.mxu0 0
        %6247 = vmatpush2.bf16.msra.mxu0 0
        %6248 = vmatprep.mubr.bf16.mxu0 0
        %6249 = vmatmul.mubr.bf16.gmra.mxu0 %v5310
        %v6250 = vpop.f32.mrf.mxu0
        %v6251 = vadd.f32 %v6211, %v6250
        %v6252 = vpop.f32.mrf.mxu0
        %v6253 = vpop.f32.mrf.mxu0
        %v6254 = vpop.f32.mrf.mxu0
        %6255 = vdwg.mxu0
        %v6256 = vlaneseq
        %v6257 = vshrl.u32 %v6256, 7
        %v6258 = vsub.s32 0, %v6257
        %v6259 = vrot.slane %v6251, %v6258
        %6260 = vst [vmem:[%s304] sm:$0xff] %v6259
      $region56: #{dental_model_forward.1} parent=47 // pred_fallthru
        _
      %p6261 = scmp.lt.s32.totalorder %s22, 1
      %s6262 = scalar_select %p6261, %s22, 1
      %s6263 = smul.addr %s6262, 8
      %s6264 = scalar_lea.vmem %s7, %s6263
      // Predicated region
      $region57: #{dental_model_forward.1} parent=47 // pred_check
        %p6265 = pneg %p202
      $region58: #{dental_model_forward.1} parent=47 // pred_check_branch
        %6267 = sbr.rel (%p6265) target = $region60
      $region59: #{dental_model_forward.1} parent=47 // pred_region
        _
      $region60: #{dental_model_forward.1} parent=47 // pred_fallthru
        _
    $region48: #{dental_model_forward.1} parent=5 // pred_fallthru
      _
    %p6268 = scmp.le.s32.totalorder 2, %s13
    // Predicated region
    $region61: #{dental_model_forward.1} parent=5 // pred_check
      %p6269 = pneg %p6268
    $region62: #{dental_model_forward.1} parent=5 // pred_check_branch
      %6271 = sbr.rel (%p6269) target = $region64
    $region63: #{dental_model_forward.1} parent=5 // pred_region
      %s6272 = ssub.s32 %s13, 2
      // Predicated region
      $region65: #{dental_model_forward.1} parent=63 // pred_check
        %p6273 = pneg %p208
      $region66: #{dental_model_forward.1} parent=63 // pred_check_branch
        %6275 = sbr.rel (%p6273) target = $region68
      $region67: #{dental_model_forward.1} parent=63 // pred_region
        %p6276 = scmp.lt.s32.totalorder %s24, 1
        %s6277 = scalar_select %p6276, %s24, 1
        %s6278 = smul.addr %s6277, 8
        %s6279 = scalar_lea.vmem %s7, %s6278
      $region68: #{dental_model_forward.1} parent=63 // pred_fallthru
        _
    $region64: #{dental_model_forward.1} parent=5 // pred_fallthru
      _
  $region6: #{dental_model_forward.1} parent=0 // loop_footer
    %s17 = sadd.s32 1, %s13
  $region7: #{dental_model_forward.1} parent=0 // loop_footer_branch
    %12 = sbr.rel target = $region3
  $region8: #{dental_model_forward.1} parent=0 // loop_exit
    _

</llo_original>
